<compile_context>
chip_gen: v6e
topology: v6e:2x2x1
jax: 0.10.0
libtpu: 0.0.40
codegen_flags: <defaults>
</compile_context>

<pallas_src>
import functools

import jax
import jax.numpy as jnp
from jax.experimental import pallas as pl
from jax.experimental.pallas import tpu as pltpu


# ---------------------------------------------------------------------------
# Fused sin/cos with a single shared range reduction (f32).
# ---------------------------------------------------------------------------
_TWO_OVER_PI = 0.6366197723675814
# 3-term Cody-Waite split of pi/2; HI/MID have few mantissa bits so q*c is
# exact for |q| well beyond anything a Fourier-feature projection produces.
_PIO2_HI = 1.5703125
_PIO2_MID = 4.837512969970703125e-4
_PIO2_LO = 7.549789948768648e-8


def _sincos(x):
    """Returns (sin(x), cos(x)) sharing one range reduction. x is f32."""
    # Quadrant index q = round(x * 2/pi); floor(t + 0.5) == round for our use.
    q = jnp.floor(x * _TWO_OVER_PI + 0.5)
    r = x - q * _PIO2_HI
    r = r - q * _PIO2_MID
    r = r - q * _PIO2_LO
    r2 = r * r
    # Minimax polynomials on [-pi/4, pi/4] (cephes sinf / cosf coefficients).
    s_p = r * (1.0 + r2 * (-1.6666654611e-1
                           + r2 * (8.3321608736e-3
                                   + r2 * (-1.9515295891e-4))))
    c_p = 1.0 + r2 * (-0.5
                      + r2 * (4.166664568298827e-2
                              + r2 * (-1.388731625493765e-3
                                      + r2 * 2.443315711809948e-5)))
    qi = q.astype(jnp.int32)
    swap = (qi & 1) != 0            # odd quadrant: sin<->cos swap
    sin_neg = (qi & 2) != 0         # quadrants 2,3: negate sin
    cos_neg = ((qi + 1) & 2) != 0   # quadrants 1,2: negate cos
    s_sel = jnp.where(swap, c_p, s_p)
    c_sel = jnp.where(swap, s_p, c_p)
    sin_x = jnp.where(sin_neg, -s_sel, s_sel)
    cos_x = jnp.where(cos_neg, -c_sel, c_sel)
    return sin_x, cos_x


# ---------------------------------------------------------------------------
# Kernel
# ---------------------------------------------------------------------------
def _fourier_embs_kernel(x_ref, k_ref, o_ref, *, half, use_mxu, split_store):
    if use_mxu:
        # Native-dtype operands, f32 accumulation.  (No pre-cast to f32: for
        # bf16 inputs that would force multi-pass f32 MXU emulation and burn
        # VALU cycles that sin/cos already saturates.)  Mosaic's f32 matmul
        # runs the MXU at full f32 precision, so no explicit precision flag.
        proj = jnp.dot(x_ref[...], k_ref[...],
                       preferred_element_type=jnp.float32)
    else:
        # Tiny K (< 8): unrolled broadcast-FMA on the VPU.
        x = x_ref[...].astype(jnp.float32)          # (tm, input_dim)
        k = k_ref[...].astype(jnp.float32)          # (input_dim, half)
        input_dim = x.shape[1]
        proj = x[:, 0:1] * k[0:1, :]
        for i in range(1, input_dim):
            proj = proj + x[:, i:i + 1] * k[i:i + 1, :]

    s, c = _sincos(proj)
    s = s.astype(o_ref.dtype)
    c = c.astype(o_ref.dtype)

    if split_store:
        # half % 128 == 0: two lane-aligned slab stores, no concat copy.
        o_ref[:, :half] = s
        o_ref[:, half:] = c
    else:
        # Fallback for non-lane-dense embed_dim (e.g. embed_dim = 32).
        o_ref[...] = jnp.concatenate([s, c], axis=-1)


# ---------------------------------------------------------------------------
# Wrapper
# ---------------------------------------------------------------------------
def _round_up(x, m):
    return ((x + m - 1) // m) * m


@functools.lru_cache(maxsize=None)
def _vmem_capacity_bytes():
    try:
        cap = int(pltpu.get_tpu_info().vmem_capacity_bytes)
        if cap > 0:
            return cap
    except Exception:
        pass
    return 128 * 1024 * 1024  # conservative fallback (v5e/v6e)


def _pick_row_tile(n_rows, input_dim, half, in_bytes, out_bytes, k_bytes,
                   budget):
    embed_dim = 2 * half
    # Resident weight block (double-buffered by the pipeline).
    fixed = 2 * input_dim * half * k_bytes
    # Per-row VMEM: double-buffered x and out tiles + in-kernel f32
    # projection / reduction temporaries + cast sin / cos slabs.
    per_row = (2 * in_bytes * input_dim          # x tile (x2 buffers)
               + 2 * out_bytes * embed_dim       # out tile (x2 buffers)
               + 3 * 4 * half                    # f32 proj + sincos temps
               + 2 * out_bytes * half)           # cast sin / cos slabs
    avail = max(budget - fixed, 8 * per_row)
    tm = avail // max(per_row, 1)
    tm = min(tm, 1024)                           # measured plateau 512-1024
    # Keep >= 4 grid steps when possible: v7x megacore needs >= 2 blocks to
    # use both TensorCores, and >= 4 gives DMA/compute overlap everywhere.
    tm = min(tm, _round_up(pl.cdiv(n_rows, 4), 8))
    tm = max(8, (tm // 8) * 8)                   # sublane multiple
    return int(tm)


@functools.partial(jax.jit, static_argnames=("row_tile",))
def fourier_embs(x, kernel, *, row_tile=None):
    """x: [N, input_dim], kernel: [input_dim, embed_dim//2] -> [N, embed_dim]."""
    N, input_dim = x.shape
    k_in, half = kernel.shape
    assert k_in == input_dim
    embed_dim = 2 * half

    in_bytes = jnp.dtype(x.dtype).itemsize
    out_bytes = in_bytes
    k_bytes = jnp.dtype(kernel.dtype).itemsize

    cap = _vmem_capacity_bytes()
    budget = cap // 4                 # bytes earmarked for the pipelined tiles
    vmem_limit = int(0.6 * cap)       # scoped-VMEM limit with headroom

    if row_tile is not None:
        tm = row_tile
    else:
        tm = _pick_row_tile(N, input_dim, half, in_bytes, out_bytes, k_bytes,
                            budget)
    tm = max(8, (min(tm, _round_up(N, 8)) // 8) * 8)

    n_blocks = pl.cdiv(N, tm)         # ragged last block handled by Pallas

    use_mxu = input_dim >= 8          # MXU is idle slack under sincos
    split_store = (half % 128 == 0)

    kernel_fn = functools.partial(
        _fourier_embs_kernel, half=half, use_mxu=use_mxu,
        split_store=split_store)

    cost = pl.CostEstimate(
        flops=2 * N * input_dim * half,
        transcendentals=2 * N * half,
        bytes_accessed=(in_bytes * N * input_dim
                        + k_bytes * input_dim * half
                        + out_bytes * N * embed_dim),
    )

    out = pl.pallas_call(
        kernel_fn,
        out_shape=jax.ShapeDtypeStruct((N, embed_dim), x.dtype),
        grid_spec=pltpu.PrefetchScalarGridSpec(
            num_scalar_prefetch=0,
            grid=(n_blocks,),
            in_specs=[
                # row tile of x; small feature dim stays whole
                pl.BlockSpec((tm, input_dim), lambda i: (i, 0)),
                # full kernel resident in VMEM (constant index_map)
                # NOTE: for very large input_dim*half, pipeline_mode=
                # pl.Buffered(1) on this spec halves its footprint on v7x.
                pl.BlockSpec((input_dim, half), lambda i: (0, 0)),
            ],
            out_specs=pl.BlockSpec((tm, embed_dim), lambda i: (i, 0)),
        ),
        compiler_params=pltpu.CompilerParams(
            dimension_semantics=("parallel",),
            vmem_limit_bytes=vmem_limit,
        ),
        cost_estimate=cost,
    )(x, kernel)

    return out


def fourier_embs_ref(x, kernel):
    proj = jnp.matmul(x, kernel, precision=jax.lax.Precision.HIGHEST)
    return jnp.concatenate([jnp.sin(proj), jnp.cos(proj)], axis=-1)


if __name__ == "__main__":
    key = jax.random.PRNGKey(0)
    k_x, k_w, k_x2, k_w2, k_x3, k_x4, k_w4 = jax.random.split(key, 7)
    embed_scale = 2.0

    # Case 1: lane-dense embed_dim (half = 128), N not a multiple of the tile
    # -> exercises the ragged-last-block (masked write) path and the direct
    #    two-slab store path with the VPU projection.
    input_dim, embed_dim, batch = 4, 256, 2000
    kernel1 = jax.random.normal(k_w, (input_dim, embed_dim // 2),
                                jnp.float32) * embed_scale
    x1 = jax.random.normal(k_x, (batch, input_dim), jnp.float32)
    out1 = jax.block_until_ready(fourier_embs(x1, kernel1))
    ref1 = fourier_embs_ref(x1, kernel1)
    assert out1.shape == (batch, embed_dim), out1.shape
    assert jnp.allclose(out1, ref1, atol=1e-4, rtol=1e-5), "case1 mismatch"

    # Case 2: tiny toy shape from the original module demo (embed_dim = 32)
    # -> exercises the concat fallback path.
    input_dim2, embed_dim2, batch2 = 4, 32, 8
    kernel2 = jax.random.normal(k_w2, (input_dim2, embed_dim2 // 2),
                                jnp.float32) * embed_scale
    x2 = jax.random.normal(k_x2, (batch2, input_dim2), jnp.float32)
    out2 = jax.block_until_ready(fourier_embs(x2, kernel2))
    ref2 = fourier_embs_ref(x2, kernel2)
    assert out2.shape == (batch2, embed_dim2), out2.shape
    assert jnp.allclose(out2, ref2, atol=1e-4, rtol=1e-5), "case2 mismatch"

    # Case 3: N not a multiple of 8 -> verifies sub-sublane ragged masking.
    batch3 = 13
    x3 = jax.random.normal(k_x3, (batch3, input_dim2), jnp.float32)
    out3 = jax.block_until_ready(fourier_embs(x3, kernel2))
    ref3 = fourier_embs_ref(x3, kernel2)
    assert out3.shape == (batch3, embed_dim2), out3.shape
    assert jnp.allclose(out3, ref3, atol=1e-4, rtol=1e-5), "case3 mismatch"

    # Case 4: larger input_dim -> exercises the MXU projection path.
    input_dim4, embed_dim4, batch4 = 64, 256, 512
    kernel4 = jax.random.normal(k_w4, (input_dim4, embed_dim4 // 2),
                                jnp.float32) * 0.5
    x4 = jax.random.normal(k_x4, (batch4, input_dim4), jnp.float32)
    out4 = jax.block_until_ready(fourier_embs(x4, kernel4))
    ref4 = fourier_embs_ref(x4, kernel4)
    assert out4.shape == (batch4, embed_dim4), out4.shape
    assert jnp.allclose(out4, ref4, atol=1e-3, rtol=1e-3), "case4 mismatch"

    print("KERNEL_OK")
</pallas_src>

<mosaic_0001>
module attributes {stable_mosaic.version = 11 : i64} {
  func.func @_fourier_embs_kernel(%arg0: i32, %arg1: memref<504x4xf32, #tpu.memory_space<vmem>>, %arg2: memref<4x128xf32, #tpu.memory_space<vmem>>, %arg3: memref<504x256xf32, #tpu.memory_space<vmem>>) attributes {dimension_semantics = [#tpu.dimension_semantics<parallel>], iteration_bounds = array<i64: 4>, scalar_prefetch = 0 : i64, scratch_operands = 0 : i64, tpu.core_type = #tpu.core_type<tc>, window_params = [{transform_indices = @transform_0, window_bounds = array<i64: 504, 4>}, {pipeline_mode = #tpu.pipeline_mode<synchronous>, transform_indices = @transform_1, window_bounds = array<i64: 4, 128>}, {transform_indices = @transform_2, window_bounds = array<i64: 504, 256>}]} {
    %c0 = arith.constant 0 : index
    %c0_0 = arith.constant 0 : index
    %0 = vector.load %arg1[%c0, %c0_0] : memref<504x4xf32, #tpu.memory_space<vmem>>, vector<504x4xf32>
    %c0_1 = arith.constant 0 : index
    %c0_2 = arith.constant 0 : index
    %1 = vector.load %arg2[%c0_1, %c0_2] : memref<4x128xf32, #tpu.memory_space<vmem>>, vector<4x128xf32>
    %2 = vector.extract_strided_slice %0 {offsets = [0, 0], sizes = [504, 1], strides = [1, 1]} : vector<504x4xf32> to vector<504x1xf32>
    %3 = vector.extract_strided_slice %1 {offsets = [0, 0], sizes = [1, 128], strides = [1, 1]} : vector<4x128xf32> to vector<1x128xf32>
    %4 = vector.broadcast %2 : vector<504x1xf32> to vector<504x128xf32>
    %5 = vector.broadcast %3 : vector<1x128xf32> to vector<504x128xf32>
    %6 = arith.mulf %4, %5 : vector<504x128xf32>
    %7 = vector.extract_strided_slice %0 {offsets = [0, 1], sizes = [504, 1], strides = [1, 1]} : vector<504x4xf32> to vector<504x1xf32>
    %8 = vector.extract_strided_slice %1 {offsets = [1, 0], sizes = [1, 128], strides = [1, 1]} : vector<4x128xf32> to vector<1x128xf32>
    %9 = vector.broadcast %7 : vector<504x1xf32> to vector<504x128xf32>
    %10 = vector.broadcast %8 : vector<1x128xf32> to vector<504x128xf32>
    %11 = arith.mulf %9, %10 : vector<504x128xf32>
    %12 = arith.addf %6, %11 : vector<504x128xf32>
    %13 = vector.extract_strided_slice %0 {offsets = [0, 2], sizes = [504, 1], strides = [1, 1]} : vector<504x4xf32> to vector<504x1xf32>
    %14 = vector.extract_strided_slice %1 {offsets = [2, 0], sizes = [1, 128], strides = [1, 1]} : vector<4x128xf32> to vector<1x128xf32>
    %15 = vector.broadcast %13 : vector<504x1xf32> to vector<504x128xf32>
    %16 = vector.broadcast %14 : vector<1x128xf32> to vector<504x128xf32>
    %17 = arith.mulf %15, %16 : vector<504x128xf32>
    %18 = arith.addf %12, %17 : vector<504x128xf32>
    %19 = vector.extract_strided_slice %0 {offsets = [0, 3], sizes = [504, 1], strides = [1, 1]} : vector<504x4xf32> to vector<504x1xf32>
    %20 = vector.extract_strided_slice %1 {offsets = [3, 0], sizes = [1, 128], strides = [1, 1]} : vector<4x128xf32> to vector<1x128xf32>
    %21 = vector.broadcast %19 : vector<504x1xf32> to vector<504x128xf32>
    %22 = vector.broadcast %20 : vector<1x128xf32> to vector<504x128xf32>
    %23 = arith.mulf %21, %22 : vector<504x128xf32>
    %24 = arith.addf %18, %23 : vector<504x128xf32>
    %cst = arith.constant 0.636619746 : f32
    %25 = vector.broadcast %cst : f32 to vector<504x128xf32>
    %26 = arith.mulf %24, %25 : vector<504x128xf32>
    %cst_3 = arith.constant 5.000000e-01 : f32
    %27 = vector.broadcast %cst_3 : f32 to vector<504x128xf32>
    %28 = arith.addf %26, %27 : vector<504x128xf32>
    %29 = math.floor %28 : vector<504x128xf32>
    %cst_4 = arith.constant 1.5703125 : f32
    %30 = vector.broadcast %cst_4 : f32 to vector<504x128xf32>
    %31 = arith.mulf %29, %30 : vector<504x128xf32>
    %32 = arith.subf %24, %31 : vector<504x128xf32>
    %cst_5 = arith.constant 4.83751297E-4 : f32
    %33 = vector.broadcast %cst_5 : f32 to vector<504x128xf32>
    %34 = arith.mulf %29, %33 : vector<504x128xf32>
    %35 = arith.subf %32, %34 : vector<504x128xf32>
    %cst_6 = arith.constant 7.549790e-08 : f32
    %36 = vector.broadcast %cst_6 : f32 to vector<504x128xf32>
    %37 = arith.mulf %29, %36 : vector<504x128xf32>
    %38 = arith.subf %35, %37 : vector<504x128xf32>
    %39 = arith.mulf %38, %38 : vector<504x128xf32>
    %cst_7 = arith.constant -1.95152956E-4 : f32
    %40 = vector.broadcast %cst_7 : f32 to vector<504x128xf32>
    %41 = arith.mulf %39, %40 : vector<504x128xf32>
    %cst_8 = arith.constant 0.00833216123 : f32
    %42 = vector.broadcast %cst_8 : f32 to vector<504x128xf32>
    %43 = arith.addf %42, %41 : vector<504x128xf32>
    %44 = arith.mulf %39, %43 : vector<504x128xf32>
    %cst_9 = arith.constant -0.166666552 : f32
    %45 = vector.broadcast %cst_9 : f32 to vector<504x128xf32>
    %46 = arith.addf %45, %44 : vector<504x128xf32>
    %47 = arith.mulf %39, %46 : vector<504x128xf32>
    %cst_10 = arith.constant 1.000000e+00 : f32
    %48 = vector.broadcast %cst_10 : f32 to vector<504x128xf32>
    %49 = arith.addf %48, %47 : vector<504x128xf32>
    %50 = arith.mulf %38, %49 : vector<504x128xf32>
    %cst_11 = arith.constant 2.44331568E-5 : f32
    %51 = vector.broadcast %cst_11 : f32 to vector<504x128xf32>
    %52 = arith.mulf %39, %51 : vector<504x128xf32>
    %cst_12 = arith.constant -0.00138873165 : f32
    %53 = vector.broadcast %cst_12 : f32 to vector<504x128xf32>
    %54 = arith.addf %53, %52 : vector<504x128xf32>
    %55 = arith.mulf %39, %54 : vector<504x128xf32>
    %cst_13 = arith.constant 0.0416666456 : f32
    %56 = vector.broadcast %cst_13 : f32 to vector<504x128xf32>
    %57 = arith.addf %56, %55 : vector<504x128xf32>
    %58 = arith.mulf %39, %57 : vector<504x128xf32>
    %cst_14 = arith.constant -5.000000e-01 : f32
    %59 = vector.broadcast %cst_14 : f32 to vector<504x128xf32>
    %60 = arith.addf %59, %58 : vector<504x128xf32>
    %61 = arith.mulf %39, %60 : vector<504x128xf32>
    %cst_15 = arith.constant 1.000000e+00 : f32
    %62 = vector.broadcast %cst_15 : f32 to vector<504x128xf32>
    %63 = arith.addf %62, %61 : vector<504x128xf32>
    %64 = arith.fptosi %29 : vector<504x128xf32> to vector<504x128xi32>
    %c1_i32 = arith.constant 1 : i32
    %65 = vector.broadcast %c1_i32 : i32 to vector<504x128xi32>
    %66 = arith.andi %64, %65 : vector<504x128xi32>
    %c0_i32 = arith.constant 0 : i32
    %67 = vector.broadcast %c0_i32 : i32 to vector<504x128xi32>
    %68 = arith.cmpi ne, %66, %67 : vector<504x128xi32>
    %c2_i32 = arith.constant 2 : i32
    %69 = vector.broadcast %c2_i32 : i32 to vector<504x128xi32>
    %70 = arith.andi %64, %69 : vector<504x128xi32>
    %c0_i32_16 = arith.constant 0 : i32
    %71 = vector.broadcast %c0_i32_16 : i32 to vector<504x128xi32>
    %72 = arith.cmpi ne, %70, %71 : vector<504x128xi32>
    %c1_i32_17 = arith.constant 1 : i32
    %73 = vector.broadcast %c1_i32_17 : i32 to vector<504x128xi32>
    %74 = arith.addi %64, %73 : vector<504x128xi32>
    %c2_i32_18 = arith.constant 2 : i32
    %75 = vector.broadcast %c2_i32_18 : i32 to vector<504x128xi32>
    %76 = arith.andi %74, %75 : vector<504x128xi32>
    %c0_i32_19 = arith.constant 0 : i32
    %77 = vector.broadcast %c0_i32_19 : i32 to vector<504x128xi32>
    %78 = arith.cmpi ne, %76, %77 : vector<504x128xi32>
    %79 = arith.select %68, %63, %50 : vector<504x128xi1>, vector<504x128xf32>
    %80 = arith.select %68, %50, %63 : vector<504x128xi1>, vector<504x128xf32>
    %cst_20 = arith.constant 0.000000e+00 : f32
    %81 = vector.broadcast %cst_20 : f32 to vector<504x128xf32>
    %82 = arith.subf %81, %79 : vector<504x128xf32>
    %83 = arith.select %72, %82, %79 : vector<504x128xi1>, vector<504x128xf32>
    %cst_21 = arith.constant 0.000000e+00 : f32
    %84 = vector.broadcast %cst_21 : f32 to vector<504x128xf32>
    %85 = arith.subf %84, %80 : vector<504x128xf32>
    %86 = arith.select %78, %85, %80 : vector<504x128xi1>, vector<504x128xf32>
    %c0_22 = arith.constant 0 : index
    %c0_23 = arith.constant 0 : index
    %87 = vector.load %arg3[%c0_22, %c0_23] : memref<504x256xf32, #tpu.memory_space<vmem>>, vector<504x128xf32>
    tpu.vector_store %arg3[%c0_22, %c0_23], %83 {strides = array<i32>} : memref<504x256xf32, #tpu.memory_space<vmem>>, vector<504x128xf32>,
    %c0_24 = arith.constant 0 : index
    %c128 = arith.constant 128 : index
    %88 = vector.load %arg3[%c0_24, %c128] : memref<504x256xf32, #tpu.memory_space<vmem>>, vector<504x128xf32>
    tpu.vector_store %arg3[%c0_24, %c128], %86 {strides = array<i32>} : memref<504x256xf32, #tpu.memory_space<vmem>>, vector<504x128xf32>,
    return
  }
  func.func @transform_0(%arg0: i32) -> (i32, i32) {
    %c0_i32 = arith.constant 0 : i32
    %c0_i32_0 = arith.constant 0 : i32
    return %arg0, %c0_i32 : i32, i32
  }
  func.func @transform_1(%arg0: i32) -> (i32, i32) {
    %c0_i32 = arith.constant 0 : i32
    %c0_i32_0 = arith.constant 0 : i32
    %c0_i32_1 = arith.constant 0 : i32
    return %c0_i32, %c0_i32_0 : i32, i32
  }
  func.func @transform_2(%arg0: i32) -> (i32, i32) {
    %c0_i32 = arith.constant 0 : i32
    %c0_i32_0 = arith.constant 0 : i32
    return %arg0, %c0_i32 : i32, i32
  }
}

</mosaic_0001>

<llo_original>
// kernel: fourier_embs.1
$region0: #{fourier_embs.1}
  #allocation0 [shape = 'u32[]', space=smem, size = 0x4, offset = 0x4, fixed_abs, tag = 'smem constant byte address 0x4 - core index']
  #allocation1 [shape = 'u32[144,128]{1,0:T(1,128)}', space=vmem, size = 0x12000, scoped, tag = 'internal scratch']
  %s0 = inlined_call_operand.vmem [shape: f32[2000,4], index: 0, kind: input, shape index: {}]
  %s1 = inlined_call_operand.hbm [shape: f32[4,128], index: 1, kind: input, shape index: {}]
  %s2 = inlined_call_operand.hbm [shape: f32[2000,256], index: 2, kind: output, shape index: {}]
  %s3 = sld [smem:[#allocation0]]
  $region45: #{fourier_embs.1} parent=0
    _
  %s5 = ssub.s32 1, %s3
  %s6 = scalar_select 0, %s5, %s3
  $region1: #{fourier_embs.1} parent=0
    #allocation2 [shape = 'u8[2048]{0}', space=vmem, size = 0x800, scoped, tag = 'input window, operand 1, single buffered']
    #allocation3 [shape = 's32[2]{0}', space=sflag, size = 0x8, scoped, tag = 'scoped memory for fourier_embs.1']
    #allocation4 [shape = 's32[2]{0}', space=sflag, size = 0x8, scoped, tag = 'scoped memory for fourier_embs.1']
    #allocation5 [shape = 'u8[1032192]{0}', space=vmem, size = 0xfc000, scoped, tag = 'output window, operand 0']
    %7 = vsyncpa [#allocation3], 0
    %8 = vsyncpa [#allocation4], 0
    %s9 = scalar_lea.sflag [#allocation4], 1
    %10 = vsyncpa %s9, 0
    loop: start=0, step=1, limit=6
    $region2: #{fourier_embs.1} parent=1 // loop_pre_header
      _
    $region3: #{fourier_embs.1} parent=1 // loop_header
      %s12 = sphi 0, %s16
      %p13 = scmp.ge.s32.totalorder %s12, 6
      %s22 = sphi 0, %s24
      %s25 = sphi 0, %s22
      %s26 = sphi 0, %s25
      %s42 = sphi 0, %s26
      %s46 = sphi 0, %s46
      %s48 = sphi 0, %s46
      %s49 = sphi 0, %s48
      %s63 = sphi 0, %s49
      %s69 = sphi 0, %s71
      %s72 = sphi 0, %s69
      %s73 = sphi 0, %s72
      %s89 = sphi 0, %s73
    $region4: #{fourier_embs.1} parent=1 // loop_header_branch
      %15 = sbr.rel (%p13) target = $region8
    $region5: #{fourier_embs.1} parent=1 // loop_body
      %s17 = ssub.s32 %s12, 1
      %s18 = ssub.s32 %s12, 2
      %s19 = sadd.s32 %s12, 1
      %s20 = ssub.s32 %s12, %s19
      %p21 = scmp.eq.s32.totalorder %s20, 0
      %s23 = sadd.s32 %s22, 1
      %s24 = scalar_select %p21, %s22, %s23
      %p27 = pneg %p21
      %p28 = scmp.eq.s32.totalorder %s12, 3
      %p29 = por %p27, %p28
      %p30 = scmp.ne.s32.totalorder %s22, %s25
      %p31 = scmp.eq.s32.totalorder %s12, 0
      %p32 = por %p30, %p31
      %p33 = scmp.ne.s32.totalorder %s22, %s25
      %p34 = scmp.eq.s32.totalorder %s17, 3
      %p35 = por %p33, %p34
      %p36 = scmp.ne.s32.totalorder %s25, %s26
      %p37 = scmp.eq.s32.totalorder %s17, 0
      %p38 = por %p36, %p37
      %p39 = scmp.ne.s32.totalorder %s25, %s26
      %p40 = scmp.eq.s32.totalorder %s18, 3
      %p41 = por %p39, %p40
      %p43 = scmp.ne.s32.totalorder %s26, %s42
      %p44 = scmp.eq.s32.totalorder %s18, 0
      %p45 = por %p43, %p44
      %s47 = sadd.s32 %s46, 1
      %p50 = scmp.eq.s32.totalorder %s12, 3
      %p51 = scmp.ne.s32.totalorder %s46, %s48
      %p52 = scmp.eq.s32.totalorder %s12, 0
      %p53 = por %p51, %p52
      %p54 = scmp.ne.s32.totalorder %s46, %s48
      %p55 = scmp.eq.s32.totalorder %s17, 3
      %p56 = por %p54, %p55
      %p57 = scmp.ne.s32.totalorder %s48, %s49
      %p58 = scmp.eq.s32.totalorder %s17, 0
      %p59 = por %p57, %p58
      %p60 = scmp.ne.s32.totalorder %s48, %s49
      %p61 = scmp.eq.s32.totalorder %s18, 3
      %p62 = por %p60, %p61
      %p64 = scmp.ne.s32.totalorder %s49, %s63
      %p65 = scmp.eq.s32.totalorder %s18, 0
      %p66 = por %p64, %p65
      %s67 = ssub.s32 %s12, %s19
      %p68 = scmp.eq.s32.totalorder %s67, 0
      %s70 = sadd.s32 %s69, 1
      %s71 = scalar_select %p68, %s69, %s70
      %p74 = pneg %p68
      %p75 = scmp.eq.s32.totalorder %s12, 3
      %p76 = por %p74, %p75
      %p77 = scmp.ne.s32.totalorder %s69, %s72
      %p78 = scmp.eq.s32.totalorder %s12, 0
      %p79 = por %p77, %p78
      %p80 = scmp.ne.s32.totalorder %s69, %s72
      %p81 = scmp.eq.s32.totalorder %s17, 3
      %p82 = por %p80, %p81
      %p83 = scmp.ne.s32.totalorder %s72, %s73
      %p84 = scmp.eq.s32.totalorder %s17, 0
      %p85 = por %p83, %p84
      %p86 = scmp.ne.s32.totalorder %s72, %s73
      %p87 = scmp.eq.s32.totalorder %s18, 3
      %p88 = por %p86, %p87
      %p90 = scmp.ne.s32.totalorder %s73, %s89
      %p91 = scmp.eq.s32.totalorder %s18, 0
      %p92 = por %p90, %p91
      %p93 = scmp.le.s32.totalorder 1, %s12
      %p94 = scmp.lt.s32.totalorder %s12, 5
      %p95 = pnand %p93, %p94
      %p96 = pneg %p95
      // Predicated region
      $region9: #{fourier_embs.1} parent=5 // pred_check
        _
      $region10: #{fourier_embs.1} parent=5 // pred_check_branch
        %98 = sbr.rel (%p95) target = $region12
      $region11: #{fourier_embs.1} parent=5 // pred_region
        %s99 = ssub.s32 %s12, 1
        // Predicated region
        $region13: #{fourier_embs.1} parent=11 // pred_check
          %p100 = pneg %p59
        $region14: #{fourier_embs.1} parent=11 // pred_check_branch
          %102 = sbr.rel (%p100) target = $region16
        $region15: #{fourier_embs.1} parent=11 // pred_region
          %s104 = ssub.s32 64, 64
          %105 = vsyncadd [#allocation3], %s104
          %s107 = sshll.u32 [#allocation2], 4
          %s108 = int_to_ptr.vmem [resolvable:$true] %s107
          %110 = dma.hbm_to_vmem [thread:$0]  %s1, 64, %s108, [#allocation3]
        $region16: #{fourier_embs.1} parent=11 // pred_fallthru
          _
      $region12: #{fourier_embs.1} parent=5 // pred_fallthru
        _
      %p111 = scmp.lt.s32.totalorder %s12, 4
      // Predicated region
      $region17: #{fourier_embs.1} parent=5 // pred_check
        %p112 = pneg %p111
      $region18: #{fourier_embs.1} parent=5 // pred_check_branch
        %114 = sbr.rel (%p112) target = $region20
      $region19: #{fourier_embs.1} parent=5 // pred_region
        // Predicated region
        $region21: #{fourier_embs.1} parent=19 // pred_check
          %p115 = pneg %p32
        $region22: #{fourier_embs.1} parent=19 // pred_check_branch
          %117 = sbr.rel (%p115) target = $region24
        $region23: #{fourier_embs.1} parent=19 // pred_region
          %s118 = smul.u32 63, %s12
          %s119 = ssub.s32 250, %s118
          %p120 = scmp.lt.s32.totalorder %s119, 63
          %s121 = scalar_select %p120, %s119, 63
          %s122 = smul.u32 128, %s121
          %p123 = scmp.lt.s32.totalorder %s118, 249
          %s124 = scalar_select %p123, %s118, 249
          %s125 = smul.addr %s124, 8
          %s126 = scalar_lea.vmem %s0, %s125
          %s127 = smul.u32 63, %s12
          %s128 = ssub.s32 250, %s127
          %p129 = scmp.lt.s32.totalorder %s128, 63
          %s130 = scalar_select %p129, %s128, 63
          %s131 = smul.u32 128, %s130
        $region24: #{fourier_embs.1} parent=19 // pred_fallthru
          _
      $region20: #{fourier_embs.1} parent=5 // pred_fallthru
        _
      %p132 = scmp.le.s32.totalorder 1, %s12
      %p133 = scmp.lt.s32.totalorder %s12, 5
      %p134 = pnand %p132, %p133
      %p135 = pneg %p134
      // Predicated region
      $region25: #{fourier_embs.1} parent=5 // pred_check
        _
      $region26: #{fourier_embs.1} parent=5 // pred_check_branch
        %137 = sbr.rel (%p134) target = $region28
      $region27: #{fourier_embs.1} parent=5 // pred_region
        %s138 = ssub.s32 %s12, 1
        // Predicated region
        $region29: #{fourier_embs.1} parent=27 // pred_check
          %p139 = pneg %p59
        $region30: #{fourier_embs.1} parent=27 // pred_check_branch
          %141 = sbr.rel (%p139) target = $region32
        $region31: #{fourier_embs.1} parent=27 // pred_region
          %142 = dma.done [#allocation3], 64
        $region32: #{fourier_embs.1} parent=27 // pred_fallthru
          _
        %s143 = smul.u32 63, %s17
        %s144 = ssub.s32 250, %s143
        %p145 = scmp.lt.s32.totalorder %s144, 63
        %s146 = scalar_select %p145, %s144, 63
        %s147 = smul.u32 128, %s146
        %p148 = scmp.lt.s32.totalorder %s143, 249
        %s149 = scalar_select %p148, %s143, 249
        %s150 = smul.addr %s149, 8
        %s151 = scalar_lea.vmem %s0, %s150
        %p152 = pneg %p38
        %p153 = pneg %p35
        %p154 = pneg %p59
        %p155 = pneg %p56
        %p156 = pneg %p85
        %p157 = pneg %p82
        %s158 = sand.u32 %s72, 1
        %s159 = scalar_lea.sflag [#allocation4], %s158
        %s160 = sand.u32 %s72, 1
        %s161 = smul.addr %s160, 1008
        %s162 = scalar_lea.vmem [#allocation5], %s161
        %s163 = smul.u32 63, %s17
        %s164 = ssub.s32 250, %s163
        %p165 = scmp.lt.s32.totalorder %s164, 63
        %s166 = scalar_select %p165, %s164, 63
        %s167 = smul.u32 128, %s166
        %p168 = scmp.lt.s32.totalorder %s163, 249
        %s169 = scalar_select %p168, %s163, 249
        %s170 = smul.addr %s169, 8
        %s171 = scalar_lea.vmem %s0, %s170
        %s172 = smul.u32 63, %s17
        %s173 = ssub.s32 250, %s172
        %p174 = scmp.lt.s32.totalorder %s173, 63
        %s175 = scalar_select %p174, %s173, 63
        %s176 = smul.u32 128, %s175
        %s177 = smul.u32 63, %s17
        %s178 = ssub.s32 250, %s177
        %p179 = scmp.lt.s32.totalorder %s178, 63
        %s180 = scalar_select %p179, %s178, 63
        %s181 = smul.u32 128, %s180
        %s182 = smul.u32 %s181, 2
        %v183 = vld [vmem:[%s171] sm:$0xff]
        %v184 = vld [vmem:[%s171 + $0x8] sm:$0xff]
        %v185 = vld [vmem:[%s171 + $0x10] sm:$0xff]
        %v186 = vld [vmem:[%s171 + $0x18] sm:$0xff]
        %v187 = vld [vmem:[%s171 + $0x20] sm:$0xff]
        %v188 = vld [vmem:[%s171 + $0x28] sm:$0xff]
        %v189 = vld [vmem:[%s171 + $0x30] sm:$0xff]
        %v190 = vld [vmem:[%s171 + $0x38] sm:$0xff]
        %v191 = vld [vmem:[%s171 + $0x40] sm:$0xff]
        %v192 = vld [vmem:[%s171 + $0x48] sm:$0xff]
        %v193 = vld [vmem:[%s171 + $0x50] sm:$0xff]
        %v194 = vld [vmem:[%s171 + $0x58] sm:$0xff]
        %v195 = vld [vmem:[%s171 + $0x60] sm:$0xff]
        %v196 = vld [vmem:[%s171 + $0x68] sm:$0xff]
        %v197 = vld [vmem:[%s171 + $0x70] sm:$0xff]
        %v198 = vld [vmem:[%s171 + $0x78] sm:$0xff]
        %v199 = vld [vmem:[%s171 + $0x80] sm:$0xff]
        %v200 = vld [vmem:[%s171 + $0x88] sm:$0xff]
        %v201 = vld [vmem:[%s171 + $0x90] sm:$0xff]
        %v202 = vld [vmem:[%s171 + $0x98] sm:$0xff]
        %v203 = vld [vmem:[%s171 + $0xa0] sm:$0xff]
        %v204 = vld [vmem:[%s171 + $0xa8] sm:$0xff]
        %v205 = vld [vmem:[%s171 + $0xb0] sm:$0xff]
        %v206 = vld [vmem:[%s171 + $0xb8] sm:$0xff]
        %v207 = vld [vmem:[%s171 + $0xc0] sm:$0xff]
        %v208 = vld [vmem:[%s171 + $0xc8] sm:$0xff]
        %v209 = vld [vmem:[%s171 + $0xd0] sm:$0xff]
        %v210 = vld [vmem:[%s171 + $0xd8] sm:$0xff]
        %v211 = vld [vmem:[%s171 + $0xe0] sm:$0xff]
        %v212 = vld [vmem:[%s171 + $0xe8] sm:$0xff]
        %v213 = vld [vmem:[%s171 + $0xf0] sm:$0xff]
        %v214 = vld [vmem:[%s171 + $0xf8] sm:$0xff]
        %v215 = vld [vmem:[%s171 + $0x100] sm:$0xff]
        %v216 = vld [vmem:[%s171 + $0x108] sm:$0xff]
        %v217 = vld [vmem:[%s171 + $0x110] sm:$0xff]
        %v218 = vld [vmem:[%s171 + $0x118] sm:$0xff]
        %v219 = vld [vmem:[%s171 + $0x120] sm:$0xff]
        %v220 = vld [vmem:[%s171 + $0x128] sm:$0xff]
        %v221 = vld [vmem:[%s171 + $0x130] sm:$0xff]
        %v222 = vld [vmem:[%s171 + $0x138] sm:$0xff]
        %v223 = vld [vmem:[%s171 + $0x140] sm:$0xff]
        %v224 = vld [vmem:[%s171 + $0x148] sm:$0xff]
        %v225 = vld [vmem:[%s171 + $0x150] sm:$0xff]
        %v226 = vld [vmem:[%s171 + $0x158] sm:$0xff]
        %v227 = vld [vmem:[%s171 + $0x160] sm:$0xff]
        %v228 = vld [vmem:[%s171 + $0x168] sm:$0xff]
        %v229 = vld [vmem:[%s171 + $0x170] sm:$0xff]
        %v230 = vld [vmem:[%s171 + $0x178] sm:$0xff]
        %v231 = vld [vmem:[%s171 + $0x180] sm:$0xff]
        %v232 = vld [vmem:[%s171 + $0x188] sm:$0xff]
        %v233 = vld [vmem:[%s171 + $0x190] sm:$0xff]
        %v234 = vld [vmem:[%s171 + $0x198] sm:$0xff]
        %v235 = vld [vmem:[%s171 + $0x1a0] sm:$0xff]
        %v236 = vld [vmem:[%s171 + $0x1a8] sm:$0xff]
        %v237 = vld [vmem:[%s171 + $0x1b0] sm:$0xff]
        %v238 = vld [vmem:[%s171 + $0x1b8] sm:$0xff]
        %v239 = vld [vmem:[%s171 + $0x1c0] sm:$0xff]
        %v240 = vld [vmem:[%s171 + $0x1c8] sm:$0xff]
        %v241 = vld [vmem:[%s171 + $0x1d0] sm:$0xff]
        %v242 = vld [vmem:[%s171 + $0x1d8] sm:$0xff]
        %v243 = vld [vmem:[%s171 + $0x1e0] sm:$0xff]
        %v244 = vld [vmem:[%s171 + $0x1e8] sm:$0xff]
        %v245 = vld [vmem:[%s171 + $0x1f0] sm:$0xff]
        %v246 = vld [vmem:[#allocation2] sm:$0xf]
        %248 = vset.pattern.permute.xlu0 0
        %249 = vperm.xlu0 %248, %v183
        %v250 = vpop.permute.xlu0 %249
        %253 = vset.pattern.permute.xlu0 0
        %254 = vperm.xlu0 %253, %v184
        %v255 = vpop.permute.xlu0 %254
        %258 = vset.pattern.permute.xlu0 0
        %259 = vperm.xlu0 %258, %v185
        %v260 = vpop.permute.xlu0 %259
        %263 = vset.pattern.permute.xlu0 0
        %264 = vperm.xlu0 %263, %v186
        %v265 = vpop.permute.xlu0 %264
        %268 = vset.pattern.permute.xlu0 0
        %269 = vperm.xlu0 %268, %v187
        %v270 = vpop.permute.xlu0 %269
        %273 = vset.pattern.permute.xlu0 0
        %274 = vperm.xlu0 %273, %v188
        %v275 = vpop.permute.xlu0 %274
        %278 = vset.pattern.permute.xlu0 0
        %279 = vperm.xlu0 %278, %v189
        %v280 = vpop.permute.xlu0 %279
        %283 = vset.pattern.permute.xlu0 0
        %284 = vperm.xlu0 %283, %v190
        %v285 = vpop.permute.xlu0 %284
        %288 = vset.pattern.permute.xlu0 0
        %289 = vperm.xlu0 %288, %v191
        %v290 = vpop.permute.xlu0 %289
        %293 = vset.pattern.permute.xlu0 0
        %294 = vperm.xlu0 %293, %v192
        %v295 = vpop.permute.xlu0 %294
        %298 = vset.pattern.permute.xlu0 0
        %299 = vperm.xlu0 %298, %v193
        %v300 = vpop.permute.xlu0 %299
        %303 = vset.pattern.permute.xlu0 0
        %304 = vperm.xlu0 %303, %v194
        %v305 = vpop.permute.xlu0 %304
        %308 = vset.pattern.permute.xlu0 0
        %309 = vperm.xlu0 %308, %v195
        %v310 = vpop.permute.xlu0 %309
        %313 = vset.pattern.permute.xlu0 0
        %314 = vperm.xlu0 %313, %v196
        %v315 = vpop.permute.xlu0 %314
        %318 = vset.pattern.permute.xlu0 0
        %319 = vperm.xlu0 %318, %v197
        %v320 = vpop.permute.xlu0 %319
        %323 = vset.pattern.permute.xlu0 0
        %324 = vperm.xlu0 %323, %v198
        %v325 = vpop.permute.xlu0 %324
        %328 = vset.pattern.permute.xlu0 0
        %329 = vperm.xlu0 %328, %v199
        %v330 = vpop.permute.xlu0 %329
        %333 = vset.pattern.permute.xlu0 0
        %334 = vperm.xlu0 %333, %v200
        %v335 = vpop.permute.xlu0 %334
        %338 = vset.pattern.permute.xlu0 0
        %339 = vperm.xlu0 %338, %v201
        %v340 = vpop.permute.xlu0 %339
        %343 = vset.pattern.permute.xlu0 0
        %344 = vperm.xlu0 %343, %v202
        %v345 = vpop.permute.xlu0 %344
        %348 = vset.pattern.permute.xlu0 0
        %349 = vperm.xlu0 %348, %v203
        %v350 = vpop.permute.xlu0 %349
        %353 = vset.pattern.permute.xlu0 0
        %354 = vperm.xlu0 %353, %v204
        %v355 = vpop.permute.xlu0 %354
        %358 = vset.pattern.permute.xlu0 0
        %359 = vperm.xlu0 %358, %v205
        %v360 = vpop.permute.xlu0 %359
        %363 = vset.pattern.permute.xlu0 0
        %364 = vperm.xlu0 %363, %v206
        %v365 = vpop.permute.xlu0 %364
        %368 = vset.pattern.permute.xlu0 0
        %369 = vperm.xlu0 %368, %v207
        %v370 = vpop.permute.xlu0 %369
        %373 = vset.pattern.permute.xlu0 0
        %374 = vperm.xlu0 %373, %v208
        %v375 = vpop.permute.xlu0 %374
        %378 = vset.pattern.permute.xlu0 0
        %379 = vperm.xlu0 %378, %v209
        %v380 = vpop.permute.xlu0 %379
        %383 = vset.pattern.permute.xlu0 0
        %384 = vperm.xlu0 %383, %v210
        %v385 = vpop.permute.xlu0 %384
        %388 = vset.pattern.permute.xlu0 0
        %389 = vperm.xlu0 %388, %v211
        %v390 = vpop.permute.xlu0 %389
        %393 = vset.pattern.permute.xlu0 0
        %394 = vperm.xlu0 %393, %v212
        %v395 = vpop.permute.xlu0 %394
        %398 = vset.pattern.permute.xlu0 0
        %399 = vperm.xlu0 %398, %v213
        %v400 = vpop.permute.xlu0 %399
        %403 = vset.pattern.permute.xlu0 0
        %404 = vperm.xlu0 %403, %v214
        %v405 = vpop.permute.xlu0 %404
        %408 = vset.pattern.permute.xlu0 0
        %409 = vperm.xlu0 %408, %v215
        %v410 = vpop.permute.xlu0 %409
        %413 = vset.pattern.permute.xlu0 0
        %414 = vperm.xlu0 %413, %v216
        %v415 = vpop.permute.xlu0 %414
        %418 = vset.pattern.permute.xlu0 0
        %419 = vperm.xlu0 %418, %v217
        %v420 = vpop.permute.xlu0 %419
        %423 = vset.pattern.permute.xlu0 0
        %424 = vperm.xlu0 %423, %v218
        %v425 = vpop.permute.xlu0 %424
        %428 = vset.pattern.permute.xlu0 0
        %429 = vperm.xlu0 %428, %v219
        %v430 = vpop.permute.xlu0 %429
        %433 = vset.pattern.permute.xlu0 0
        %434 = vperm.xlu0 %433, %v220
        %v435 = vpop.permute.xlu0 %434
        %438 = vset.pattern.permute.xlu0 0
        %439 = vperm.xlu0 %438, %v221
        %v440 = vpop.permute.xlu0 %439
        %443 = vset.pattern.permute.xlu0 0
        %444 = vperm.xlu0 %443, %v222
        %v445 = vpop.permute.xlu0 %444
        %448 = vset.pattern.permute.xlu0 0
        %449 = vperm.xlu0 %448, %v223
        %v450 = vpop.permute.xlu0 %449
        %453 = vset.pattern.permute.xlu0 0
        %454 = vperm.xlu0 %453, %v224
        %v455 = vpop.permute.xlu0 %454
        %458 = vset.pattern.permute.xlu0 0
        %459 = vperm.xlu0 %458, %v225
        %v460 = vpop.permute.xlu0 %459
        %463 = vset.pattern.permute.xlu0 0
        %464 = vperm.xlu0 %463, %v226
        %v465 = vpop.permute.xlu0 %464
        %468 = vset.pattern.permute.xlu0 0
        %469 = vperm.xlu0 %468, %v227
        %v470 = vpop.permute.xlu0 %469
        %473 = vset.pattern.permute.xlu0 0
        %474 = vperm.xlu0 %473, %v228
        %v475 = vpop.permute.xlu0 %474
        %478 = vset.pattern.permute.xlu0 0
        %479 = vperm.xlu0 %478, %v229
        %v480 = vpop.permute.xlu0 %479
        %483 = vset.pattern.permute.xlu0 0
        %484 = vperm.xlu0 %483, %v230
        %v485 = vpop.permute.xlu0 %484
        %488 = vset.pattern.permute.xlu0 0
        %489 = vperm.xlu0 %488, %v231
        %v490 = vpop.permute.xlu0 %489
        %493 = vset.pattern.permute.xlu0 0
        %494 = vperm.xlu0 %493, %v232
        %v495 = vpop.permute.xlu0 %494
        %498 = vset.pattern.permute.xlu0 0
        %499 = vperm.xlu0 %498, %v233
        %v500 = vpop.permute.xlu0 %499
        %503 = vset.pattern.permute.xlu0 0
        %504 = vperm.xlu0 %503, %v234
        %v505 = vpop.permute.xlu0 %504
        %508 = vset.pattern.permute.xlu0 0
        %509 = vperm.xlu0 %508, %v235
        %v510 = vpop.permute.xlu0 %509
        %513 = vset.pattern.permute.xlu0 0
        %514 = vperm.xlu0 %513, %v236
        %v515 = vpop.permute.xlu0 %514
        %518 = vset.pattern.permute.xlu0 0
        %519 = vperm.xlu0 %518, %v237
        %v520 = vpop.permute.xlu0 %519
        %523 = vset.pattern.permute.xlu0 0
        %524 = vperm.xlu0 %523, %v238
        %v525 = vpop.permute.xlu0 %524
        %528 = vset.pattern.permute.xlu0 0
        %529 = vperm.xlu0 %528, %v239
        %v530 = vpop.permute.xlu0 %529
        %533 = vset.pattern.permute.xlu0 0
        %534 = vperm.xlu0 %533, %v240
        %v535 = vpop.permute.xlu0 %534
        %538 = vset.pattern.permute.xlu0 0
        %539 = vperm.xlu0 %538, %v241
        %v540 = vpop.permute.xlu0 %539
        %543 = vset.pattern.permute.xlu0 0
        %544 = vperm.xlu0 %543, %v242
        %v545 = vpop.permute.xlu0 %544
        %548 = vset.pattern.permute.xlu0 0
        %549 = vperm.xlu0 %548, %v243
        %v550 = vpop.permute.xlu0 %549
        %553 = vset.pattern.permute.xlu0 0
        %554 = vperm.xlu0 %553, %v244
        %v555 = vpop.permute.xlu0 %554
        %558 = vset.pattern.permute.xlu0 0
        %559 = vperm.xlu0 %558, %v245
        %v560 = vpop.permute.xlu0 %559
        %v562 = vlaneseq
        %v563 = vshrl.u32 %v562, 7
        %v564 = vsub.s32 0, %v563
        %v565 = vrot.slane %v246, %v564
        %v566 = vmul.f32 %v250, %v565
        %v567 = vmul.f32 %v255, %v565
        %v568 = vmul.f32 %v260, %v565
        %v569 = vmul.f32 %v265, %v565
        %v570 = vmul.f32 %v270, %v565
        %v571 = vmul.f32 %v275, %v565
        %v572 = vmul.f32 %v280, %v565
        %v573 = vmul.f32 %v285, %v565
        %v574 = vmul.f32 %v290, %v565
        %v575 = vmul.f32 %v295, %v565
        %v576 = vmul.f32 %v300, %v565
        %v577 = vmul.f32 %v305, %v565
        %v578 = vmul.f32 %v310, %v565
        %v579 = vmul.f32 %v315, %v565
        %v580 = vmul.f32 %v320, %v565
        %v581 = vmul.f32 %v325, %v565
        %v582 = vmul.f32 %v330, %v565
        %v583 = vmul.f32 %v335, %v565
        %v584 = vmul.f32 %v340, %v565
        %v585 = vmul.f32 %v345, %v565
        %v586 = vmul.f32 %v350, %v565
        %v587 = vmul.f32 %v355, %v565
        %v588 = vmul.f32 %v360, %v565
        %v589 = vmul.f32 %v365, %v565
        %v590 = vmul.f32 %v370, %v565
        %v591 = vmul.f32 %v375, %v565
        %v592 = vmul.f32 %v380, %v565
        %v593 = vmul.f32 %v385, %v565
        %v594 = vmul.f32 %v390, %v565
        %v595 = vmul.f32 %v395, %v565
        %v596 = vmul.f32 %v400, %v565
        %v597 = vmul.f32 %v405, %v565
        %v598 = vmul.f32 %v410, %v565
        %v599 = vmul.f32 %v415, %v565
        %v600 = vmul.f32 %v420, %v565
        %v601 = vmul.f32 %v425, %v565
        %v602 = vmul.f32 %v430, %v565
        %v603 = vmul.f32 %v435, %v565
        %v604 = vmul.f32 %v440, %v565
        %v605 = vmul.f32 %v445, %v565
        %v606 = vmul.f32 %v450, %v565
        %v607 = vmul.f32 %v455, %v565
        %v608 = vmul.f32 %v460, %v565
        %v609 = vmul.f32 %v465, %v565
        %v610 = vmul.f32 %v470, %v565
        %v611 = vmul.f32 %v475, %v565
        %v612 = vmul.f32 %v480, %v565
        %v613 = vmul.f32 %v485, %v565
        %v614 = vmul.f32 %v490, %v565
        %v615 = vmul.f32 %v495, %v565
        %v616 = vmul.f32 %v500, %v565
        %v617 = vmul.f32 %v505, %v565
        %v618 = vmul.f32 %v510, %v565
        %v619 = vmul.f32 %v515, %v565
        %v620 = vmul.f32 %v520, %v565
        %v621 = vmul.f32 %v525, %v565
        %v622 = vmul.f32 %v530, %v565
        %v623 = vmul.f32 %v535, %v565
        %v624 = vmul.f32 %v540, %v565
        %v625 = vmul.f32 %v545, %v565
        %v626 = vmul.f32 %v550, %v565
        %v627 = vmul.f32 %v555, %v565
        %v628 = vmul.f32 %v560, %v565
        %629 = vset.pattern.permute.xlu0 1
        %630 = vperm.xlu0 %629, %v183
        %v631 = vpop.permute.xlu0 %630
        %633 = vset.pattern.permute.xlu0 1
        %634 = vperm.xlu0 %633, %v184
        %v635 = vpop.permute.xlu0 %634
        %637 = vset.pattern.permute.xlu0 1
        %638 = vperm.xlu0 %637, %v185
        %v639 = vpop.permute.xlu0 %638
        %641 = vset.pattern.permute.xlu0 1
        %642 = vperm.xlu0 %641, %v186
        %v643 = vpop.permute.xlu0 %642
        %645 = vset.pattern.permute.xlu0 1
        %646 = vperm.xlu0 %645, %v187
        %v647 = vpop.permute.xlu0 %646
        %649 = vset.pattern.permute.xlu0 1
        %650 = vperm.xlu0 %649, %v188
        %v651 = vpop.permute.xlu0 %650
        %653 = vset.pattern.permute.xlu0 1
        %654 = vperm.xlu0 %653, %v189
        %v655 = vpop.permute.xlu0 %654
        %657 = vset.pattern.permute.xlu0 1
        %658 = vperm.xlu0 %657, %v190
        %v659 = vpop.permute.xlu0 %658
        %661 = vset.pattern.permute.xlu0 1
        %662 = vperm.xlu0 %661, %v191
        %v663 = vpop.permute.xlu0 %662
        %665 = vset.pattern.permute.xlu0 1
        %666 = vperm.xlu0 %665, %v192
        %v667 = vpop.permute.xlu0 %666
        %669 = vset.pattern.permute.xlu0 1
        %670 = vperm.xlu0 %669, %v193
        %v671 = vpop.permute.xlu0 %670
        %673 = vset.pattern.permute.xlu0 1
        %674 = vperm.xlu0 %673, %v194
        %v675 = vpop.permute.xlu0 %674
        %677 = vset.pattern.permute.xlu0 1
        %678 = vperm.xlu0 %677, %v195
        %v679 = vpop.permute.xlu0 %678
        %681 = vset.pattern.permute.xlu0 1
        %682 = vperm.xlu0 %681, %v196
        %v683 = vpop.permute.xlu0 %682
        %685 = vset.pattern.permute.xlu0 1
        %686 = vperm.xlu0 %685, %v197
        %v687 = vpop.permute.xlu0 %686
        %689 = vset.pattern.permute.xlu0 1
        %690 = vperm.xlu0 %689, %v198
        %v691 = vpop.permute.xlu0 %690
        %693 = vset.pattern.permute.xlu0 1
        %694 = vperm.xlu0 %693, %v199
        %v695 = vpop.permute.xlu0 %694
        %697 = vset.pattern.permute.xlu0 1
        %698 = vperm.xlu0 %697, %v200
        %v699 = vpop.permute.xlu0 %698
        %701 = vset.pattern.permute.xlu0 1
        %702 = vperm.xlu0 %701, %v201
        %v703 = vpop.permute.xlu0 %702
        %705 = vset.pattern.permute.xlu0 1
        %706 = vperm.xlu0 %705, %v202
        %v707 = vpop.permute.xlu0 %706
        %709 = vset.pattern.permute.xlu0 1
        %710 = vperm.xlu0 %709, %v203
        %v711 = vpop.permute.xlu0 %710
        %713 = vset.pattern.permute.xlu0 1
        %714 = vperm.xlu0 %713, %v204
        %v715 = vpop.permute.xlu0 %714
        %717 = vset.pattern.permute.xlu0 1
        %718 = vperm.xlu0 %717, %v205
        %v719 = vpop.permute.xlu0 %718
        %721 = vset.pattern.permute.xlu0 1
        %722 = vperm.xlu0 %721, %v206
        %v723 = vpop.permute.xlu0 %722
        %725 = vset.pattern.permute.xlu0 1
        %726 = vperm.xlu0 %725, %v207
        %v727 = vpop.permute.xlu0 %726
        %729 = vset.pattern.permute.xlu0 1
        %730 = vperm.xlu0 %729, %v208
        %v731 = vpop.permute.xlu0 %730
        %733 = vset.pattern.permute.xlu0 1
        %734 = vperm.xlu0 %733, %v209
        %v735 = vpop.permute.xlu0 %734
        %737 = vset.pattern.permute.xlu0 1
        %738 = vperm.xlu0 %737, %v210
        %v739 = vpop.permute.xlu0 %738
        %741 = vset.pattern.permute.xlu0 1
        %742 = vperm.xlu0 %741, %v211
        %v743 = vpop.permute.xlu0 %742
        %745 = vset.pattern.permute.xlu0 1
        %746 = vperm.xlu0 %745, %v212
        %v747 = vpop.permute.xlu0 %746
        %749 = vset.pattern.permute.xlu0 1
        %750 = vperm.xlu0 %749, %v213
        %v751 = vpop.permute.xlu0 %750
        %753 = vset.pattern.permute.xlu0 1
        %754 = vperm.xlu0 %753, %v214
        %v755 = vpop.permute.xlu0 %754
        %757 = vset.pattern.permute.xlu0 1
        %758 = vperm.xlu0 %757, %v215
        %v759 = vpop.permute.xlu0 %758
        %761 = vset.pattern.permute.xlu0 1
        %762 = vperm.xlu0 %761, %v216
        %v763 = vpop.permute.xlu0 %762
        %765 = vset.pattern.permute.xlu0 1
        %766 = vperm.xlu0 %765, %v217
        %v767 = vpop.permute.xlu0 %766
        %769 = vset.pattern.permute.xlu0 1
        %770 = vperm.xlu0 %769, %v218
        %v771 = vpop.permute.xlu0 %770
        %773 = vset.pattern.permute.xlu0 1
        %774 = vperm.xlu0 %773, %v219
        %v775 = vpop.permute.xlu0 %774
        %777 = vset.pattern.permute.xlu0 1
        %778 = vperm.xlu0 %777, %v220
        %v779 = vpop.permute.xlu0 %778
        %781 = vset.pattern.permute.xlu0 1
        %782 = vperm.xlu0 %781, %v221
        %v783 = vpop.permute.xlu0 %782
        %785 = vset.pattern.permute.xlu0 1
        %786 = vperm.xlu0 %785, %v222
        %v787 = vpop.permute.xlu0 %786
        %789 = vset.pattern.permute.xlu0 1
        %790 = vperm.xlu0 %789, %v223
        %v791 = vpop.permute.xlu0 %790
        %793 = vset.pattern.permute.xlu0 1
        %794 = vperm.xlu0 %793, %v224
        %v795 = vpop.permute.xlu0 %794
        %797 = vset.pattern.permute.xlu0 1
        %798 = vperm.xlu0 %797, %v225
        %v799 = vpop.permute.xlu0 %798
        %801 = vset.pattern.permute.xlu0 1
        %802 = vperm.xlu0 %801, %v226
        %v803 = vpop.permute.xlu0 %802
        %805 = vset.pattern.permute.xlu0 1
        %806 = vperm.xlu0 %805, %v227
        %v807 = vpop.permute.xlu0 %806
        %809 = vset.pattern.permute.xlu0 1
        %810 = vperm.xlu0 %809, %v228
        %v811 = vpop.permute.xlu0 %810
        %813 = vset.pattern.permute.xlu0 1
        %814 = vperm.xlu0 %813, %v229
        %v815 = vpop.permute.xlu0 %814
        %817 = vset.pattern.permute.xlu0 1
        %818 = vperm.xlu0 %817, %v230
        %v819 = vpop.permute.xlu0 %818
        %821 = vset.pattern.permute.xlu0 1
        %822 = vperm.xlu0 %821, %v231
        %v823 = vpop.permute.xlu0 %822
        %825 = vset.pattern.permute.xlu0 1
        %826 = vperm.xlu0 %825, %v232
        %v827 = vpop.permute.xlu0 %826
        %829 = vset.pattern.permute.xlu0 1
        %830 = vperm.xlu0 %829, %v233
        %v831 = vpop.permute.xlu0 %830
        %833 = vset.pattern.permute.xlu0 1
        %834 = vperm.xlu0 %833, %v234
        %v835 = vpop.permute.xlu0 %834
        %837 = vset.pattern.permute.xlu0 1
        %838 = vperm.xlu0 %837, %v235
        %v839 = vpop.permute.xlu0 %838
        %841 = vset.pattern.permute.xlu0 1
        %842 = vperm.xlu0 %841, %v236
        %v843 = vpop.permute.xlu0 %842
        %845 = vset.pattern.permute.xlu0 1
        %846 = vperm.xlu0 %845, %v237
        %v847 = vpop.permute.xlu0 %846
        %849 = vset.pattern.permute.xlu0 1
        %850 = vperm.xlu0 %849, %v238
        %v851 = vpop.permute.xlu0 %850
        %853 = vset.pattern.permute.xlu0 1
        %854 = vperm.xlu0 %853, %v239
        %v855 = vpop.permute.xlu0 %854
        %857 = vset.pattern.permute.xlu0 1
        %858 = vperm.xlu0 %857, %v240
        %v859 = vpop.permute.xlu0 %858
        %861 = vset.pattern.permute.xlu0 1
        %862 = vperm.xlu0 %861, %v241
        %v863 = vpop.permute.xlu0 %862
        %865 = vset.pattern.permute.xlu0 1
        %866 = vperm.xlu0 %865, %v242
        %v867 = vpop.permute.xlu0 %866
        %869 = vset.pattern.permute.xlu0 1
        %870 = vperm.xlu0 %869, %v243
        %v871 = vpop.permute.xlu0 %870
        %873 = vset.pattern.permute.xlu0 1
        %874 = vperm.xlu0 %873, %v244
        %v875 = vpop.permute.xlu0 %874
        %877 = vset.pattern.permute.xlu0 1
        %878 = vperm.xlu0 %877, %v245
        %v879 = vpop.permute.xlu0 %878
        %v881 = vlaneseq
        %v882 = vshrl.u32 %v881, 7
        %v883 = vsub.s32 1, %v882
        %v884 = vrot.slane %v246, %v883
        %v885 = vmul.f32 %v631, %v884
        %v886 = vmul.f32 %v635, %v884
        %v887 = vmul.f32 %v639, %v884
        %v888 = vmul.f32 %v643, %v884
        %v889 = vmul.f32 %v647, %v884
        %v890 = vmul.f32 %v651, %v884
        %v891 = vmul.f32 %v655, %v884
        %v892 = vmul.f32 %v659, %v884
        %v893 = vmul.f32 %v663, %v884
        %v894 = vmul.f32 %v667, %v884
        %v895 = vmul.f32 %v671, %v884
        %v896 = vmul.f32 %v675, %v884
        %v897 = vmul.f32 %v679, %v884
        %v898 = vmul.f32 %v683, %v884
        %v899 = vmul.f32 %v687, %v884
        %v900 = vmul.f32 %v691, %v884
        %v901 = vmul.f32 %v695, %v884
        %v902 = vmul.f32 %v699, %v884
        %v903 = vmul.f32 %v703, %v884
        %v904 = vmul.f32 %v707, %v884
        %v905 = vmul.f32 %v711, %v884
        %v906 = vmul.f32 %v715, %v884
        %v907 = vmul.f32 %v719, %v884
        %v908 = vmul.f32 %v723, %v884
        %v909 = vmul.f32 %v727, %v884
        %v910 = vmul.f32 %v731, %v884
        %v911 = vmul.f32 %v735, %v884
        %v912 = vmul.f32 %v739, %v884
        %v913 = vmul.f32 %v743, %v884
        %v914 = vmul.f32 %v747, %v884
        %v915 = vmul.f32 %v751, %v884
        %v916 = vmul.f32 %v755, %v884
        %v917 = vmul.f32 %v759, %v884
        %v918 = vmul.f32 %v763, %v884
        %v919 = vmul.f32 %v767, %v884
        %v920 = vmul.f32 %v771, %v884
        %v921 = vmul.f32 %v775, %v884
        %v922 = vmul.f32 %v779, %v884
        %v923 = vmul.f32 %v783, %v884
        %v924 = vmul.f32 %v787, %v884
        %v925 = vmul.f32 %v791, %v884
        %v926 = vmul.f32 %v795, %v884
        %v927 = vmul.f32 %v799, %v884
        %v928 = vmul.f32 %v803, %v884
        %v929 = vmul.f32 %v807, %v884
        %v930 = vmul.f32 %v811, %v884
        %v931 = vmul.f32 %v815, %v884
        %v932 = vmul.f32 %v819, %v884
        %v933 = vmul.f32 %v823, %v884
        %v934 = vmul.f32 %v827, %v884
        %v935 = vmul.f32 %v831, %v884
        %v936 = vmul.f32 %v835, %v884
        %v937 = vmul.f32 %v839, %v884
        %v938 = vmul.f32 %v843, %v884
        %v939 = vmul.f32 %v847, %v884
        %v940 = vmul.f32 %v851, %v884
        %v941 = vmul.f32 %v855, %v884
        %v942 = vmul.f32 %v859, %v884
        %v943 = vmul.f32 %v863, %v884
        %v944 = vmul.f32 %v867, %v884
        %v945 = vmul.f32 %v871, %v884
        %v946 = vmul.f32 %v875, %v884
        %v947 = vmul.f32 %v879, %v884
        %v948 = vadd.f32 %v566, %v885
        %v949 = vadd.f32 %v567, %v886
        %v950 = vadd.f32 %v568, %v887
        %v951 = vadd.f32 %v569, %v888
        %v952 = vadd.f32 %v570, %v889
        %v953 = vadd.f32 %v571, %v890
        %v954 = vadd.f32 %v572, %v891
        %v955 = vadd.f32 %v573, %v892
        %v956 = vadd.f32 %v574, %v893
        %v957 = vadd.f32 %v575, %v894
        %v958 = vadd.f32 %v576, %v895
        %v959 = vadd.f32 %v577, %v896
        %v960 = vadd.f32 %v578, %v897
        %v961 = vadd.f32 %v579, %v898
        %v962 = vadd.f32 %v580, %v899
        %v963 = vadd.f32 %v581, %v900
        %v964 = vadd.f32 %v582, %v901
        %v965 = vadd.f32 %v583, %v902
        %v966 = vadd.f32 %v584, %v903
        %v967 = vadd.f32 %v585, %v904
        %v968 = vadd.f32 %v586, %v905
        %v969 = vadd.f32 %v587, %v906
        %v970 = vadd.f32 %v588, %v907
        %v971 = vadd.f32 %v589, %v908
        %v972 = vadd.f32 %v590, %v909
        %v973 = vadd.f32 %v591, %v910
        %v974 = vadd.f32 %v592, %v911
        %v975 = vadd.f32 %v593, %v912
        %v976 = vadd.f32 %v594, %v913
        %v977 = vadd.f32 %v595, %v914
        %v978 = vadd.f32 %v596, %v915
        %v979 = vadd.f32 %v597, %v916
        %v980 = vadd.f32 %v598, %v917
        %v981 = vadd.f32 %v599, %v918
        %v982 = vadd.f32 %v600, %v919
        %v983 = vadd.f32 %v601, %v920
        %v984 = vadd.f32 %v602, %v921
        %v985 = vadd.f32 %v603, %v922
        %v986 = vadd.f32 %v604, %v923
        %v987 = vadd.f32 %v605, %v924
        %v988 = vadd.f32 %v606, %v925
        %v989 = vadd.f32 %v607, %v926
        %v990 = vadd.f32 %v608, %v927
        %v991 = vadd.f32 %v609, %v928
        %v992 = vadd.f32 %v610, %v929
        %v993 = vadd.f32 %v611, %v930
        %v994 = vadd.f32 %v612, %v931
        %v995 = vadd.f32 %v613, %v932
        %v996 = vadd.f32 %v614, %v933
        %v997 = vadd.f32 %v615, %v934
        %v998 = vadd.f32 %v616, %v935
        %v999 = vadd.f32 %v617, %v936
        %v1000 = vadd.f32 %v618, %v937
        %v1001 = vadd.f32 %v619, %v938
        %v1002 = vadd.f32 %v620, %v939
        %v1003 = vadd.f32 %v621, %v940
        %v1004 = vadd.f32 %v622, %v941
        %v1005 = vadd.f32 %v623, %v942
        %v1006 = vadd.f32 %v624, %v943
        %v1007 = vadd.f32 %v625, %v944
        %v1008 = vadd.f32 %v626, %v945
        %v1009 = vadd.f32 %v627, %v946
        %v1010 = vadd.f32 %v628, %v947
        %1011 = vset.pattern.permute.xlu0 2
        %1012 = vperm.xlu0 %1011, %v183
        %v1013 = vpop.permute.xlu0 %1012
        %1015 = vset.pattern.permute.xlu0 2
        %1016 = vperm.xlu0 %1015, %v184
        %v1017 = vpop.permute.xlu0 %1016
        %1019 = vset.pattern.permute.xlu0 2
        %1020 = vperm.xlu0 %1019, %v185
        %v1021 = vpop.permute.xlu0 %1020
        %1023 = vset.pattern.permute.xlu0 2
        %1024 = vperm.xlu0 %1023, %v186
        %v1025 = vpop.permute.xlu0 %1024
        %1027 = vset.pattern.permute.xlu0 2
        %1028 = vperm.xlu0 %1027, %v187
        %v1029 = vpop.permute.xlu0 %1028
        %1031 = vset.pattern.permute.xlu0 2
        %1032 = vperm.xlu0 %1031, %v188
        %v1033 = vpop.permute.xlu0 %1032
        %1035 = vset.pattern.permute.xlu0 2
        %1036 = vperm.xlu0 %1035, %v189
        %v1037 = vpop.permute.xlu0 %1036
        %1039 = vset.pattern.permute.xlu0 2
        %1040 = vperm.xlu0 %1039, %v190
        %v1041 = vpop.permute.xlu0 %1040
        %1043 = vset.pattern.permute.xlu0 2
        %1044 = vperm.xlu0 %1043, %v191
        %v1045 = vpop.permute.xlu0 %1044
        %1047 = vset.pattern.permute.xlu0 2
        %1048 = vperm.xlu0 %1047, %v192
        %v1049 = vpop.permute.xlu0 %1048
        %1051 = vset.pattern.permute.xlu0 2
        %1052 = vperm.xlu0 %1051, %v193
        %v1053 = vpop.permute.xlu0 %1052
        %1055 = vset.pattern.permute.xlu0 2
        %1056 = vperm.xlu0 %1055, %v194
        %v1057 = vpop.permute.xlu0 %1056
        %1059 = vset.pattern.permute.xlu0 2
        %1060 = vperm.xlu0 %1059, %v195
        %v1061 = vpop.permute.xlu0 %1060
        %1063 = vset.pattern.permute.xlu0 2
        %1064 = vperm.xlu0 %1063, %v196
        %v1065 = vpop.permute.xlu0 %1064
        %1067 = vset.pattern.permute.xlu0 2
        %1068 = vperm.xlu0 %1067, %v197
        %v1069 = vpop.permute.xlu0 %1068
        %1071 = vset.pattern.permute.xlu0 2
        %1072 = vperm.xlu0 %1071, %v198
        %v1073 = vpop.permute.xlu0 %1072
        %1075 = vset.pattern.permute.xlu0 2
        %1076 = vperm.xlu0 %1075, %v199
        %v1077 = vpop.permute.xlu0 %1076
        %1079 = vset.pattern.permute.xlu0 2
        %1080 = vperm.xlu0 %1079, %v200
        %v1081 = vpop.permute.xlu0 %1080
        %1083 = vset.pattern.permute.xlu0 2
        %1084 = vperm.xlu0 %1083, %v201
        %v1085 = vpop.permute.xlu0 %1084
        %1087 = vset.pattern.permute.xlu0 2
        %1088 = vperm.xlu0 %1087, %v202
        %v1089 = vpop.permute.xlu0 %1088
        %1091 = vset.pattern.permute.xlu0 2
        %1092 = vperm.xlu0 %1091, %v203
        %v1093 = vpop.permute.xlu0 %1092
        %1095 = vset.pattern.permute.xlu0 2
        %1096 = vperm.xlu0 %1095, %v204
        %v1097 = vpop.permute.xlu0 %1096
        %1099 = vset.pattern.permute.xlu0 2
        %1100 = vperm.xlu0 %1099, %v205
        %v1101 = vpop.permute.xlu0 %1100
        %1103 = vset.pattern.permute.xlu0 2
        %1104 = vperm.xlu0 %1103, %v206
        %v1105 = vpop.permute.xlu0 %1104
        %1107 = vset.pattern.permute.xlu0 2
        %1108 = vperm.xlu0 %1107, %v207
        %v1109 = vpop.permute.xlu0 %1108
        %1111 = vset.pattern.permute.xlu0 2
        %1112 = vperm.xlu0 %1111, %v208
        %v1113 = vpop.permute.xlu0 %1112
        %1115 = vset.pattern.permute.xlu0 2
        %1116 = vperm.xlu0 %1115, %v209
        %v1117 = vpop.permute.xlu0 %1116
        %1119 = vset.pattern.permute.xlu0 2
        %1120 = vperm.xlu0 %1119, %v210
        %v1121 = vpop.permute.xlu0 %1120
        %1123 = vset.pattern.permute.xlu0 2
        %1124 = vperm.xlu0 %1123, %v211
        %v1125 = vpop.permute.xlu0 %1124
        %1127 = vset.pattern.permute.xlu0 2
        %1128 = vperm.xlu0 %1127, %v212
        %v1129 = vpop.permute.xlu0 %1128
        %1131 = vset.pattern.permute.xlu0 2
        %1132 = vperm.xlu0 %1131, %v213
        %v1133 = vpop.permute.xlu0 %1132
        %1135 = vset.pattern.permute.xlu0 2
        %1136 = vperm.xlu0 %1135, %v214
        %v1137 = vpop.permute.xlu0 %1136
        %1139 = vset.pattern.permute.xlu0 2
        %1140 = vperm.xlu0 %1139, %v215
        %v1141 = vpop.permute.xlu0 %1140
        %1143 = vset.pattern.permute.xlu0 2
        %1144 = vperm.xlu0 %1143, %v216
        %v1145 = vpop.permute.xlu0 %1144
        %1147 = vset.pattern.permute.xlu0 2
        %1148 = vperm.xlu0 %1147, %v217
        %v1149 = vpop.permute.xlu0 %1148
        %1151 = vset.pattern.permute.xlu0 2
        %1152 = vperm.xlu0 %1151, %v218
        %v1153 = vpop.permute.xlu0 %1152
        %1155 = vset.pattern.permute.xlu0 2
        %1156 = vperm.xlu0 %1155, %v219
        %v1157 = vpop.permute.xlu0 %1156
        %1159 = vset.pattern.permute.xlu0 2
        %1160 = vperm.xlu0 %1159, %v220
        %v1161 = vpop.permute.xlu0 %1160
        %1163 = vset.pattern.permute.xlu0 2
        %1164 = vperm.xlu0 %1163, %v221
        %v1165 = vpop.permute.xlu0 %1164
        %1167 = vset.pattern.permute.xlu0 2
        %1168 = vperm.xlu0 %1167, %v222
        %v1169 = vpop.permute.xlu0 %1168
        %1171 = vset.pattern.permute.xlu0 2
        %1172 = vperm.xlu0 %1171, %v223
        %v1173 = vpop.permute.xlu0 %1172
        %1175 = vset.pattern.permute.xlu0 2
        %1176 = vperm.xlu0 %1175, %v224
        %v1177 = vpop.permute.xlu0 %1176
        %1179 = vset.pattern.permute.xlu0 2
        %1180 = vperm.xlu0 %1179, %v225
        %v1181 = vpop.permute.xlu0 %1180
        %1183 = vset.pattern.permute.xlu0 2
        %1184 = vperm.xlu0 %1183, %v226
        %v1185 = vpop.permute.xlu0 %1184
        %1187 = vset.pattern.permute.xlu0 2
        %1188 = vperm.xlu0 %1187, %v227
        %v1189 = vpop.permute.xlu0 %1188
        %1191 = vset.pattern.permute.xlu0 2
        %1192 = vperm.xlu0 %1191, %v228
        %v1193 = vpop.permute.xlu0 %1192
        %1195 = vset.pattern.permute.xlu0 2
        %1196 = vperm.xlu0 %1195, %v229
        %v1197 = vpop.permute.xlu0 %1196
        %1199 = vset.pattern.permute.xlu0 2
        %1200 = vperm.xlu0 %1199, %v230
        %v1201 = vpop.permute.xlu0 %1200
        %1203 = vset.pattern.permute.xlu0 2
        %1204 = vperm.xlu0 %1203, %v231
        %v1205 = vpop.permute.xlu0 %1204
        %1207 = vset.pattern.permute.xlu0 2
        %1208 = vperm.xlu0 %1207, %v232
        %v1209 = vpop.permute.xlu0 %1208
        %1211 = vset.pattern.permute.xlu0 2
        %1212 = vperm.xlu0 %1211, %v233
        %v1213 = vpop.permute.xlu0 %1212
        %1215 = vset.pattern.permute.xlu0 2
        %1216 = vperm.xlu0 %1215, %v234
        %v1217 = vpop.permute.xlu0 %1216
        %1219 = vset.pattern.permute.xlu0 2
        %1220 = vperm.xlu0 %1219, %v235
        %v1221 = vpop.permute.xlu0 %1220
        %1223 = vset.pattern.permute.xlu0 2
        %1224 = vperm.xlu0 %1223, %v236
        %v1225 = vpop.permute.xlu0 %1224
        %1227 = vset.pattern.permute.xlu0 2
        %1228 = vperm.xlu0 %1227, %v237
        %v1229 = vpop.permute.xlu0 %1228
        %1231 = vset.pattern.permute.xlu0 2
        %1232 = vperm.xlu0 %1231, %v238
        %v1233 = vpop.permute.xlu0 %1232
        %1235 = vset.pattern.permute.xlu0 2
        %1236 = vperm.xlu0 %1235, %v239
        %v1237 = vpop.permute.xlu0 %1236
        %1239 = vset.pattern.permute.xlu0 2
        %1240 = vperm.xlu0 %1239, %v240
        %v1241 = vpop.permute.xlu0 %1240
        %1243 = vset.pattern.permute.xlu0 2
        %1244 = vperm.xlu0 %1243, %v241
        %v1245 = vpop.permute.xlu0 %1244
        %1247 = vset.pattern.permute.xlu0 2
        %1248 = vperm.xlu0 %1247, %v242
        %v1249 = vpop.permute.xlu0 %1248
        %1251 = vset.pattern.permute.xlu0 2
        %1252 = vperm.xlu0 %1251, %v243
        %v1253 = vpop.permute.xlu0 %1252
        %1255 = vset.pattern.permute.xlu0 2
        %1256 = vperm.xlu0 %1255, %v244
        %v1257 = vpop.permute.xlu0 %1256
        %1259 = vset.pattern.permute.xlu0 2
        %1260 = vperm.xlu0 %1259, %v245
        %v1261 = vpop.permute.xlu0 %1260
        %v1263 = vlaneseq
        %v1264 = vshrl.u32 %v1263, 7
        %v1265 = vsub.s32 2, %v1264
        %v1266 = vrot.slane %v246, %v1265
        %v1267 = vmul.f32 %v1013, %v1266
        %v1268 = vmul.f32 %v1017, %v1266
        %v1269 = vmul.f32 %v1021, %v1266
        %v1270 = vmul.f32 %v1025, %v1266
        %v1271 = vmul.f32 %v1029, %v1266
        %v1272 = vmul.f32 %v1033, %v1266
        %v1273 = vmul.f32 %v1037, %v1266
        %v1274 = vmul.f32 %v1041, %v1266
        %v1275 = vmul.f32 %v1045, %v1266
        %v1276 = vmul.f32 %v1049, %v1266
        %v1277 = vmul.f32 %v1053, %v1266
        %v1278 = vmul.f32 %v1057, %v1266
        %v1279 = vmul.f32 %v1061, %v1266
        %v1280 = vmul.f32 %v1065, %v1266
        %v1281 = vmul.f32 %v1069, %v1266
        %v1282 = vmul.f32 %v1073, %v1266
        %v1283 = vmul.f32 %v1077, %v1266
        %v1284 = vmul.f32 %v1081, %v1266
        %v1285 = vmul.f32 %v1085, %v1266
        %v1286 = vmul.f32 %v1089, %v1266
        %v1287 = vmul.f32 %v1093, %v1266
        %v1288 = vmul.f32 %v1097, %v1266
        %v1289 = vmul.f32 %v1101, %v1266
        %v1290 = vmul.f32 %v1105, %v1266
        %v1291 = vmul.f32 %v1109, %v1266
        %v1292 = vmul.f32 %v1113, %v1266
        %v1293 = vmul.f32 %v1117, %v1266
        %v1294 = vmul.f32 %v1121, %v1266
        %v1295 = vmul.f32 %v1125, %v1266
        %v1296 = vmul.f32 %v1129, %v1266
        %v1297 = vmul.f32 %v1133, %v1266
        %v1298 = vmul.f32 %v1137, %v1266
        %v1299 = vmul.f32 %v1141, %v1266
        %v1300 = vmul.f32 %v1145, %v1266
        %v1301 = vmul.f32 %v1149, %v1266
        %v1302 = vmul.f32 %v1153, %v1266
        %v1303 = vmul.f32 %v1157, %v1266
        %v1304 = vmul.f32 %v1161, %v1266
        %v1305 = vmul.f32 %v1165, %v1266
        %v1306 = vmul.f32 %v1169, %v1266
        %v1307 = vmul.f32 %v1173, %v1266
        %v1308 = vmul.f32 %v1177, %v1266
        %v1309 = vmul.f32 %v1181, %v1266
        %v1310 = vmul.f32 %v1185, %v1266
        %v1311 = vmul.f32 %v1189, %v1266
        %v1312 = vmul.f32 %v1193, %v1266
        %v1313 = vmul.f32 %v1197, %v1266
        %v1314 = vmul.f32 %v1201, %v1266
        %v1315 = vmul.f32 %v1205, %v1266
        %v1316 = vmul.f32 %v1209, %v1266
        %v1317 = vmul.f32 %v1213, %v1266
        %v1318 = vmul.f32 %v1217, %v1266
        %v1319 = vmul.f32 %v1221, %v1266
        %v1320 = vmul.f32 %v1225, %v1266
        %v1321 = vmul.f32 %v1229, %v1266
        %v1322 = vmul.f32 %v1233, %v1266
        %v1323 = vmul.f32 %v1237, %v1266
        %v1324 = vmul.f32 %v1241, %v1266
        %v1325 = vmul.f32 %v1245, %v1266
        %v1326 = vmul.f32 %v1249, %v1266
        %v1327 = vmul.f32 %v1253, %v1266
        %v1328 = vmul.f32 %v1257, %v1266
        %v1329 = vmul.f32 %v1261, %v1266
        %v1330 = vadd.f32 %v948, %v1267
        %v1331 = vadd.f32 %v949, %v1268
        %v1332 = vadd.f32 %v950, %v1269
        %v1333 = vadd.f32 %v951, %v1270
        %v1334 = vadd.f32 %v952, %v1271
        %v1335 = vadd.f32 %v953, %v1272
        %v1336 = vadd.f32 %v954, %v1273
        %v1337 = vadd.f32 %v955, %v1274
        %v1338 = vadd.f32 %v956, %v1275
        %v1339 = vadd.f32 %v957, %v1276
        %v1340 = vadd.f32 %v958, %v1277
        %v1341 = vadd.f32 %v959, %v1278
        %v1342 = vadd.f32 %v960, %v1279
        %v1343 = vadd.f32 %v961, %v1280
        %v1344 = vadd.f32 %v962, %v1281
        %v1345 = vadd.f32 %v963, %v1282
        %v1346 = vadd.f32 %v964, %v1283
        %v1347 = vadd.f32 %v965, %v1284
        %v1348 = vadd.f32 %v966, %v1285
        %v1349 = vadd.f32 %v967, %v1286
        %v1350 = vadd.f32 %v968, %v1287
        %v1351 = vadd.f32 %v969, %v1288
        %v1352 = vadd.f32 %v970, %v1289
        %v1353 = vadd.f32 %v971, %v1290
        %v1354 = vadd.f32 %v972, %v1291
        %v1355 = vadd.f32 %v973, %v1292
        %v1356 = vadd.f32 %v974, %v1293
        %v1357 = vadd.f32 %v975, %v1294
        %v1358 = vadd.f32 %v976, %v1295
        %v1359 = vadd.f32 %v977, %v1296
        %v1360 = vadd.f32 %v978, %v1297
        %v1361 = vadd.f32 %v979, %v1298
        %v1362 = vadd.f32 %v980, %v1299
        %v1363 = vadd.f32 %v981, %v1300
        %v1364 = vadd.f32 %v982, %v1301
        %v1365 = vadd.f32 %v983, %v1302
        %v1366 = vadd.f32 %v984, %v1303
        %v1367 = vadd.f32 %v985, %v1304
        %v1368 = vadd.f32 %v986, %v1305
        %v1369 = vadd.f32 %v987, %v1306
        %v1370 = vadd.f32 %v988, %v1307
        %v1371 = vadd.f32 %v989, %v1308
        %v1372 = vadd.f32 %v990, %v1309
        %v1373 = vadd.f32 %v991, %v1310
        %v1374 = vadd.f32 %v992, %v1311
        %v1375 = vadd.f32 %v993, %v1312
        %v1376 = vadd.f32 %v994, %v1313
        %v1377 = vadd.f32 %v995, %v1314
        %v1378 = vadd.f32 %v996, %v1315
        %v1379 = vadd.f32 %v997, %v1316
        %v1380 = vadd.f32 %v998, %v1317
        %v1381 = vadd.f32 %v999, %v1318
        %v1382 = vadd.f32 %v1000, %v1319
        %v1383 = vadd.f32 %v1001, %v1320
        %v1384 = vadd.f32 %v1002, %v1321
        %v1385 = vadd.f32 %v1003, %v1322
        %v1386 = vadd.f32 %v1004, %v1323
        %v1387 = vadd.f32 %v1005, %v1324
        %v1388 = vadd.f32 %v1006, %v1325
        %v1389 = vadd.f32 %v1007, %v1326
        %v1390 = vadd.f32 %v1008, %v1327
        %v1391 = vadd.f32 %v1009, %v1328
        %v1392 = vadd.f32 %v1010, %v1329
        %1393 = vset.pattern.permute.xlu0 3
        %1394 = vperm.xlu0 %1393, %v183
        %v1395 = vpop.permute.xlu0 %1394
        %1397 = vset.pattern.permute.xlu0 3
        %1398 = vperm.xlu0 %1397, %v184
        %v1399 = vpop.permute.xlu0 %1398
        %1401 = vset.pattern.permute.xlu0 3
        %1402 = vperm.xlu0 %1401, %v185
        %v1403 = vpop.permute.xlu0 %1402
        %1405 = vset.pattern.permute.xlu0 3
        %1406 = vperm.xlu0 %1405, %v186
        %v1407 = vpop.permute.xlu0 %1406
        %1409 = vset.pattern.permute.xlu0 3
        %1410 = vperm.xlu0 %1409, %v187
        %v1411 = vpop.permute.xlu0 %1410
        %1413 = vset.pattern.permute.xlu0 3
        %1414 = vperm.xlu0 %1413, %v188
        %v1415 = vpop.permute.xlu0 %1414
        %1417 = vset.pattern.permute.xlu0 3
        %1418 = vperm.xlu0 %1417, %v189
        %v1419 = vpop.permute.xlu0 %1418
        %1421 = vset.pattern.permute.xlu0 3
        %1422 = vperm.xlu0 %1421, %v190
        %v1423 = vpop.permute.xlu0 %1422
        %1425 = vset.pattern.permute.xlu0 3
        %1426 = vperm.xlu0 %1425, %v191
        %v1427 = vpop.permute.xlu0 %1426
        %1429 = vset.pattern.permute.xlu0 3
        %1430 = vperm.xlu0 %1429, %v192
        %v1431 = vpop.permute.xlu0 %1430
        %1433 = vset.pattern.permute.xlu0 3
        %1434 = vperm.xlu0 %1433, %v193
        %v1435 = vpop.permute.xlu0 %1434
        %1437 = vset.pattern.permute.xlu0 3
        %1438 = vperm.xlu0 %1437, %v194
        %v1439 = vpop.permute.xlu0 %1438
        %1441 = vset.pattern.permute.xlu0 3
        %1442 = vperm.xlu0 %1441, %v195
        %v1443 = vpop.permute.xlu0 %1442
        %1445 = vset.pattern.permute.xlu0 3
        %1446 = vperm.xlu0 %1445, %v196
        %v1447 = vpop.permute.xlu0 %1446
        %1449 = vset.pattern.permute.xlu0 3
        %1450 = vperm.xlu0 %1449, %v197
        %v1451 = vpop.permute.xlu0 %1450
        %1453 = vset.pattern.permute.xlu0 3
        %1454 = vperm.xlu0 %1453, %v198
        %v1455 = vpop.permute.xlu0 %1454
        %1457 = vset.pattern.permute.xlu0 3
        %1458 = vperm.xlu0 %1457, %v199
        %v1459 = vpop.permute.xlu0 %1458
        %1461 = vset.pattern.permute.xlu0 3
        %1462 = vperm.xlu0 %1461, %v200
        %v1463 = vpop.permute.xlu0 %1462
        %1465 = vset.pattern.permute.xlu0 3
        %1466 = vperm.xlu0 %1465, %v201
        %v1467 = vpop.permute.xlu0 %1466
        %1469 = vset.pattern.permute.xlu0 3
        %1470 = vperm.xlu0 %1469, %v202
        %v1471 = vpop.permute.xlu0 %1470
        %1473 = vset.pattern.permute.xlu0 3
        %1474 = vperm.xlu0 %1473, %v203
        %v1475 = vpop.permute.xlu0 %1474
        %1477 = vset.pattern.permute.xlu0 3
        %1478 = vperm.xlu0 %1477, %v204
        %v1479 = vpop.permute.xlu0 %1478
        %1481 = vset.pattern.permute.xlu0 3
        %1482 = vperm.xlu0 %1481, %v205
        %v1483 = vpop.permute.xlu0 %1482
        %1485 = vset.pattern.permute.xlu0 3
        %1486 = vperm.xlu0 %1485, %v206
        %v1487 = vpop.permute.xlu0 %1486
        %1489 = vset.pattern.permute.xlu0 3
        %1490 = vperm.xlu0 %1489, %v207
        %v1491 = vpop.permute.xlu0 %1490
        %1493 = vset.pattern.permute.xlu0 3
        %1494 = vperm.xlu0 %1493, %v208
        %v1495 = vpop.permute.xlu0 %1494
        %1497 = vset.pattern.permute.xlu0 3
        %1498 = vperm.xlu0 %1497, %v209
        %v1499 = vpop.permute.xlu0 %1498
        %1501 = vset.pattern.permute.xlu0 3
        %1502 = vperm.xlu0 %1501, %v210
        %v1503 = vpop.permute.xlu0 %1502
        %1505 = vset.pattern.permute.xlu0 3
        %1506 = vperm.xlu0 %1505, %v211
        %v1507 = vpop.permute.xlu0 %1506
        %1509 = vset.pattern.permute.xlu0 3
        %1510 = vperm.xlu0 %1509, %v212
        %v1511 = vpop.permute.xlu0 %1510
        %1513 = vset.pattern.permute.xlu0 3
        %1514 = vperm.xlu0 %1513, %v213
        %v1515 = vpop.permute.xlu0 %1514
        %1517 = vset.pattern.permute.xlu0 3
        %1518 = vperm.xlu0 %1517, %v214
        %v1519 = vpop.permute.xlu0 %1518
        %1521 = vset.pattern.permute.xlu0 3
        %1522 = vperm.xlu0 %1521, %v215
        %v1523 = vpop.permute.xlu0 %1522
        %1525 = vset.pattern.permute.xlu0 3
        %1526 = vperm.xlu0 %1525, %v216
        %v1527 = vpop.permute.xlu0 %1526
        %1529 = vset.pattern.permute.xlu0 3
        %1530 = vperm.xlu0 %1529, %v217
        %v1531 = vpop.permute.xlu0 %1530
        %1533 = vset.pattern.permute.xlu0 3
        %1534 = vperm.xlu0 %1533, %v218
        %v1535 = vpop.permute.xlu0 %1534
        %1537 = vset.pattern.permute.xlu0 3
        %1538 = vperm.xlu0 %1537, %v219
        %v1539 = vpop.permute.xlu0 %1538
        %1541 = vset.pattern.permute.xlu0 3
        %1542 = vperm.xlu0 %1541, %v220
        %v1543 = vpop.permute.xlu0 %1542
        %1545 = vset.pattern.permute.xlu0 3
        %1546 = vperm.xlu0 %1545, %v221
        %v1547 = vpop.permute.xlu0 %1546
        %1549 = vset.pattern.permute.xlu0 3
        %1550 = vperm.xlu0 %1549, %v222
        %v1551 = vpop.permute.xlu0 %1550
        %1553 = vset.pattern.permute.xlu0 3
        %1554 = vperm.xlu0 %1553, %v223
        %v1555 = vpop.permute.xlu0 %1554
        %1557 = vset.pattern.permute.xlu0 3
        %1558 = vperm.xlu0 %1557, %v224
        %v1559 = vpop.permute.xlu0 %1558
        %1561 = vset.pattern.permute.xlu0 3
        %1562 = vperm.xlu0 %1561, %v225
        %v1563 = vpop.permute.xlu0 %1562
        %1565 = vset.pattern.permute.xlu0 3
        %1566 = vperm.xlu0 %1565, %v226
        %v1567 = vpop.permute.xlu0 %1566
        %1569 = vset.pattern.permute.xlu0 3
        %1570 = vperm.xlu0 %1569, %v227
        %v1571 = vpop.permute.xlu0 %1570
        %1573 = vset.pattern.permute.xlu0 3
        %1574 = vperm.xlu0 %1573, %v228
        %v1575 = vpop.permute.xlu0 %1574
        %1577 = vset.pattern.permute.xlu0 3
        %1578 = vperm.xlu0 %1577, %v229
        %v1579 = vpop.permute.xlu0 %1578
        %1581 = vset.pattern.permute.xlu0 3
        %1582 = vperm.xlu0 %1581, %v230
        %v1583 = vpop.permute.xlu0 %1582
        %1585 = vset.pattern.permute.xlu0 3
        %1586 = vperm.xlu0 %1585, %v231
        %v1587 = vpop.permute.xlu0 %1586
        %1589 = vset.pattern.permute.xlu0 3
        %1590 = vperm.xlu0 %1589, %v232
        %v1591 = vpop.permute.xlu0 %1590
        %1593 = vset.pattern.permute.xlu0 3
        %1594 = vperm.xlu0 %1593, %v233
        %v1595 = vpop.permute.xlu0 %1594
        %1597 = vset.pattern.permute.xlu0 3
        %1598 = vperm.xlu0 %1597, %v234
        %v1599 = vpop.permute.xlu0 %1598
        %1601 = vset.pattern.permute.xlu0 3
        %1602 = vperm.xlu0 %1601, %v235
        %v1603 = vpop.permute.xlu0 %1602
        %1605 = vset.pattern.permute.xlu0 3
        %1606 = vperm.xlu0 %1605, %v236
        %v1607 = vpop.permute.xlu0 %1606
        %1609 = vset.pattern.permute.xlu0 3
        %1610 = vperm.xlu0 %1609, %v237
        %v1611 = vpop.permute.xlu0 %1610
        %1613 = vset.pattern.permute.xlu0 3
        %1614 = vperm.xlu0 %1613, %v238
        %v1615 = vpop.permute.xlu0 %1614
        %1617 = vset.pattern.permute.xlu0 3
        %1618 = vperm.xlu0 %1617, %v239
        %v1619 = vpop.permute.xlu0 %1618
        %1621 = vset.pattern.permute.xlu0 3
        %1622 = vperm.xlu0 %1621, %v240
        %v1623 = vpop.permute.xlu0 %1622
        %1625 = vset.pattern.permute.xlu0 3
        %1626 = vperm.xlu0 %1625, %v241
        %v1627 = vpop.permute.xlu0 %1626
        %1629 = vset.pattern.permute.xlu0 3
        %1630 = vperm.xlu0 %1629, %v242
        %v1631 = vpop.permute.xlu0 %1630
        %1633 = vset.pattern.permute.xlu0 3
        %1634 = vperm.xlu0 %1633, %v243
        %v1635 = vpop.permute.xlu0 %1634
        %1637 = vset.pattern.permute.xlu0 3
        %1638 = vperm.xlu0 %1637, %v244
        %v1639 = vpop.permute.xlu0 %1638
        %1641 = vset.pattern.permute.xlu0 3
        %1642 = vperm.xlu0 %1641, %v245
        %v1643 = vpop.permute.xlu0 %1642
        %v1645 = vlaneseq
        %v1646 = vshrl.u32 %v1645, 7
        %v1647 = vsub.s32 3, %v1646
        %v1648 = vrot.slane %v246, %v1647
        %v1649 = vmul.f32 %v1395, %v1648
        %v1650 = vmul.f32 %v1399, %v1648
        %v1651 = vmul.f32 %v1403, %v1648
        %v1652 = vmul.f32 %v1407, %v1648
        %v1653 = vmul.f32 %v1411, %v1648
        %v1654 = vmul.f32 %v1415, %v1648
        %v1655 = vmul.f32 %v1419, %v1648
        %v1656 = vmul.f32 %v1423, %v1648
        %v1657 = vmul.f32 %v1427, %v1648
        %v1658 = vmul.f32 %v1431, %v1648
        %v1659 = vmul.f32 %v1435, %v1648
        %v1660 = vmul.f32 %v1439, %v1648
        %v1661 = vmul.f32 %v1443, %v1648
        %v1662 = vmul.f32 %v1447, %v1648
        %v1663 = vmul.f32 %v1451, %v1648
        %v1664 = vmul.f32 %v1455, %v1648
        %v1665 = vmul.f32 %v1459, %v1648
        %v1666 = vmul.f32 %v1463, %v1648
        %v1667 = vmul.f32 %v1467, %v1648
        %v1668 = vmul.f32 %v1471, %v1648
        %v1669 = vmul.f32 %v1475, %v1648
        %v1670 = vmul.f32 %v1479, %v1648
        %v1671 = vmul.f32 %v1483, %v1648
        %v1672 = vmul.f32 %v1487, %v1648
        %v1673 = vmul.f32 %v1491, %v1648
        %v1674 = vmul.f32 %v1495, %v1648
        %v1675 = vmul.f32 %v1499, %v1648
        %v1676 = vmul.f32 %v1503, %v1648
        %v1677 = vmul.f32 %v1507, %v1648
        %v1678 = vmul.f32 %v1511, %v1648
        %v1679 = vmul.f32 %v1515, %v1648
        %v1680 = vmul.f32 %v1519, %v1648
        %v1681 = vmul.f32 %v1523, %v1648
        %v1682 = vmul.f32 %v1527, %v1648
        %v1683 = vmul.f32 %v1531, %v1648
        %v1684 = vmul.f32 %v1535, %v1648
        %v1685 = vmul.f32 %v1539, %v1648
        %v1686 = vmul.f32 %v1543, %v1648
        %v1687 = vmul.f32 %v1547, %v1648
        %v1688 = vmul.f32 %v1551, %v1648
        %v1689 = vmul.f32 %v1555, %v1648
        %v1690 = vmul.f32 %v1559, %v1648
        %v1691 = vmul.f32 %v1563, %v1648
        %v1692 = vmul.f32 %v1567, %v1648
        %v1693 = vmul.f32 %v1571, %v1648
        %v1694 = vmul.f32 %v1575, %v1648
        %v1695 = vmul.f32 %v1579, %v1648
        %v1696 = vmul.f32 %v1583, %v1648
        %v1697 = vmul.f32 %v1587, %v1648
        %v1698 = vmul.f32 %v1591, %v1648
        %v1699 = vmul.f32 %v1595, %v1648
        %v1700 = vmul.f32 %v1599, %v1648
        %v1701 = vmul.f32 %v1603, %v1648
        %v1702 = vmul.f32 %v1607, %v1648
        %v1703 = vmul.f32 %v1611, %v1648
        %v1704 = vmul.f32 %v1615, %v1648
        %v1705 = vmul.f32 %v1619, %v1648
        %v1706 = vmul.f32 %v1623, %v1648
        %v1707 = vmul.f32 %v1627, %v1648
        %v1708 = vmul.f32 %v1631, %v1648
        %v1709 = vmul.f32 %v1635, %v1648
        %v1710 = vmul.f32 %v1639, %v1648
        %v1711 = vmul.f32 %v1643, %v1648
        %v1712 = vadd.f32 %v1330, %v1649
        %v1713 = vadd.f32 %v1331, %v1650
        %v1714 = vadd.f32 %v1332, %v1651
        %v1715 = vadd.f32 %v1333, %v1652
        %v1716 = vadd.f32 %v1334, %v1653
        %v1717 = vadd.f32 %v1335, %v1654
        %v1718 = vadd.f32 %v1336, %v1655
        %v1719 = vadd.f32 %v1337, %v1656
        %v1720 = vadd.f32 %v1338, %v1657
        %v1721 = vadd.f32 %v1339, %v1658
        %v1722 = vadd.f32 %v1340, %v1659
        %v1723 = vadd.f32 %v1341, %v1660
        %v1724 = vadd.f32 %v1342, %v1661
        %v1725 = vadd.f32 %v1343, %v1662
        %v1726 = vadd.f32 %v1344, %v1663
        %v1727 = vadd.f32 %v1345, %v1664
        %v1728 = vadd.f32 %v1346, %v1665
        %v1729 = vadd.f32 %v1347, %v1666
        %v1730 = vadd.f32 %v1348, %v1667
        %v1731 = vadd.f32 %v1349, %v1668
        %v1732 = vadd.f32 %v1350, %v1669
        %v1733 = vadd.f32 %v1351, %v1670
        %v1734 = vadd.f32 %v1352, %v1671
        %v1735 = vadd.f32 %v1353, %v1672
        %v1736 = vadd.f32 %v1354, %v1673
        %v1737 = vadd.f32 %v1355, %v1674
        %v1738 = vadd.f32 %v1356, %v1675
        %v1739 = vadd.f32 %v1357, %v1676
        %v1740 = vadd.f32 %v1358, %v1677
        %v1741 = vadd.f32 %v1359, %v1678
        %v1742 = vadd.f32 %v1360, %v1679
        %v1743 = vadd.f32 %v1361, %v1680
        %v1744 = vadd.f32 %v1362, %v1681
        %v1745 = vadd.f32 %v1363, %v1682
        %v1746 = vadd.f32 %v1364, %v1683
        %v1747 = vadd.f32 %v1365, %v1684
        %v1748 = vadd.f32 %v1366, %v1685
        %v1749 = vadd.f32 %v1367, %v1686
        %v1750 = vadd.f32 %v1368, %v1687
        %v1751 = vadd.f32 %v1369, %v1688
        %v1752 = vadd.f32 %v1370, %v1689
        %v1753 = vadd.f32 %v1371, %v1690
        %v1754 = vadd.f32 %v1372, %v1691
        %v1755 = vadd.f32 %v1373, %v1692
        %v1756 = vadd.f32 %v1374, %v1693
        %v1757 = vadd.f32 %v1375, %v1694
        %v1758 = vadd.f32 %v1376, %v1695
        %v1759 = vadd.f32 %v1377, %v1696
        %v1760 = vadd.f32 %v1378, %v1697
        %v1761 = vadd.f32 %v1379, %v1698
        %v1762 = vadd.f32 %v1380, %v1699
        %v1763 = vadd.f32 %v1381, %v1700
        %v1764 = vadd.f32 %v1382, %v1701
        %v1765 = vadd.f32 %v1383, %v1702
        %v1766 = vadd.f32 %v1384, %v1703
        %v1767 = vadd.f32 %v1385, %v1704
        %v1768 = vadd.f32 %v1386, %v1705
        %v1769 = vadd.f32 %v1387, %v1706
        %v1770 = vadd.f32 %v1388, %v1707
        %v1771 = vadd.f32 %v1389, %v1708
        %v1772 = vadd.f32 %v1390, %v1709
        %v1773 = vadd.f32 %v1391, %v1710
        %v1774 = vadd.f32 %v1392, %v1711
        %v1775 = vmul.f32 %v1712, 0.63661975
        %v1776 = vmul.f32 %v1713, 0.63661975
        %v1777 = vmul.f32 %v1714, 0.63661975
        %v1778 = vmul.f32 %v1715, 0.63661975
        %v1779 = vmul.f32 %v1716, 0.63661975
        %v1780 = vmul.f32 %v1717, 0.63661975
        %v1781 = vmul.f32 %v1718, 0.63661975
        %v1782 = vmul.f32 %v1719, 0.63661975
        %v1783 = vmul.f32 %v1720, 0.63661975
        %v1784 = vmul.f32 %v1721, 0.63661975
        %v1785 = vmul.f32 %v1722, 0.63661975
        %v1786 = vmul.f32 %v1723, 0.63661975
        %v1787 = vmul.f32 %v1724, 0.63661975
        %v1788 = vmul.f32 %v1725, 0.63661975
        %v1789 = vmul.f32 %v1726, 0.63661975
        %v1790 = vmul.f32 %v1727, 0.63661975
        %v1791 = vmul.f32 %v1728, 0.63661975
        %v1792 = vmul.f32 %v1729, 0.63661975
        %v1793 = vmul.f32 %v1730, 0.63661975
        %v1794 = vmul.f32 %v1731, 0.63661975
        %v1795 = vmul.f32 %v1732, 0.63661975
        %v1796 = vmul.f32 %v1733, 0.63661975
        %v1797 = vmul.f32 %v1734, 0.63661975
        %v1798 = vmul.f32 %v1735, 0.63661975
        %v1799 = vmul.f32 %v1736, 0.63661975
        %v1800 = vmul.f32 %v1737, 0.63661975
        %v1801 = vmul.f32 %v1738, 0.63661975
        %v1802 = vmul.f32 %v1739, 0.63661975
        %v1803 = vmul.f32 %v1740, 0.63661975
        %v1804 = vmul.f32 %v1741, 0.63661975
        %v1805 = vmul.f32 %v1742, 0.63661975
        %v1806 = vmul.f32 %v1743, 0.63661975
        %v1807 = vmul.f32 %v1744, 0.63661975
        %v1808 = vmul.f32 %v1745, 0.63661975
        %v1809 = vmul.f32 %v1746, 0.63661975
        %v1810 = vmul.f32 %v1747, 0.63661975
        %v1811 = vmul.f32 %v1748, 0.63661975
        %v1812 = vmul.f32 %v1749, 0.63661975
        %v1813 = vmul.f32 %v1750, 0.63661975
        %v1814 = vmul.f32 %v1751, 0.63661975
        %v1815 = vmul.f32 %v1752, 0.63661975
        %v1816 = vmul.f32 %v1753, 0.63661975
        %v1817 = vmul.f32 %v1754, 0.63661975
        %v1818 = vmul.f32 %v1755, 0.63661975
        %v1819 = vmul.f32 %v1756, 0.63661975
        %v1820 = vmul.f32 %v1757, 0.63661975
        %v1821 = vmul.f32 %v1758, 0.63661975
        %v1822 = vmul.f32 %v1759, 0.63661975
        %v1823 = vmul.f32 %v1760, 0.63661975
        %v1824 = vmul.f32 %v1761, 0.63661975
        %v1825 = vmul.f32 %v1762, 0.63661975
        %v1826 = vmul.f32 %v1763, 0.63661975
        %v1827 = vmul.f32 %v1764, 0.63661975
        %v1828 = vmul.f32 %v1765, 0.63661975
        %v1829 = vmul.f32 %v1766, 0.63661975
        %v1830 = vmul.f32 %v1767, 0.63661975
        %v1831 = vmul.f32 %v1768, 0.63661975
        %v1832 = vmul.f32 %v1769, 0.63661975
        %v1833 = vmul.f32 %v1770, 0.63661975
        %v1834 = vmul.f32 %v1771, 0.63661975
        %v1835 = vmul.f32 %v1772, 0.63661975
        %v1836 = vmul.f32 %v1773, 0.63661975
        %v1837 = vmul.f32 %v1774, 0.63661975
        %v1838 = vadd.f32 %v1775, 0.5
        %v1839 = vadd.f32 %v1776, 0.5
        %v1840 = vadd.f32 %v1777, 0.5
        %v1841 = vadd.f32 %v1778, 0.5
        %v1842 = vadd.f32 %v1779, 0.5
        %v1843 = vadd.f32 %v1780, 0.5
        %v1844 = vadd.f32 %v1781, 0.5
        %v1845 = vadd.f32 %v1782, 0.5
        %v1846 = vadd.f32 %v1783, 0.5
        %v1847 = vadd.f32 %v1784, 0.5
        %v1848 = vadd.f32 %v1785, 0.5
        %v1849 = vadd.f32 %v1786, 0.5
        %v1850 = vadd.f32 %v1787, 0.5
        %v1851 = vadd.f32 %v1788, 0.5
        %v1852 = vadd.f32 %v1789, 0.5
        %v1853 = vadd.f32 %v1790, 0.5
        %v1854 = vadd.f32 %v1791, 0.5
        %v1855 = vadd.f32 %v1792, 0.5
        %v1856 = vadd.f32 %v1793, 0.5
        %v1857 = vadd.f32 %v1794, 0.5
        %v1858 = vadd.f32 %v1795, 0.5
        %v1859 = vadd.f32 %v1796, 0.5
        %v1860 = vadd.f32 %v1797, 0.5
        %v1861 = vadd.f32 %v1798, 0.5
        %v1862 = vadd.f32 %v1799, 0.5
        %v1863 = vadd.f32 %v1800, 0.5
        %v1864 = vadd.f32 %v1801, 0.5
        %v1865 = vadd.f32 %v1802, 0.5
        %v1866 = vadd.f32 %v1803, 0.5
        %v1867 = vadd.f32 %v1804, 0.5
        %v1868 = vadd.f32 %v1805, 0.5
        %v1869 = vadd.f32 %v1806, 0.5
        %v1870 = vadd.f32 %v1807, 0.5
        %v1871 = vadd.f32 %v1808, 0.5
        %v1872 = vadd.f32 %v1809, 0.5
        %v1873 = vadd.f32 %v1810, 0.5
        %v1874 = vadd.f32 %v1811, 0.5
        %v1875 = vadd.f32 %v1812, 0.5
        %v1876 = vadd.f32 %v1813, 0.5
        %v1877 = vadd.f32 %v1814, 0.5
        %v1878 = vadd.f32 %v1815, 0.5
        %v1879 = vadd.f32 %v1816, 0.5
        %v1880 = vadd.f32 %v1817, 0.5
        %v1881 = vadd.f32 %v1818, 0.5
        %v1882 = vadd.f32 %v1819, 0.5
        %v1883 = vadd.f32 %v1820, 0.5
        %v1884 = vadd.f32 %v1821, 0.5
        %v1885 = vadd.f32 %v1822, 0.5
        %v1886 = vadd.f32 %v1823, 0.5
        %v1887 = vadd.f32 %v1824, 0.5
        %v1888 = vadd.f32 %v1825, 0.5
        %v1889 = vadd.f32 %v1826, 0.5
        %v1890 = vadd.f32 %v1827, 0.5
        %v1891 = vadd.f32 %v1828, 0.5
        %v1892 = vadd.f32 %v1829, 0.5
        %v1893 = vadd.f32 %v1830, 0.5
        %v1894 = vadd.f32 %v1831, 0.5
        %v1895 = vadd.f32 %v1832, 0.5
        %v1896 = vadd.f32 %v1833, 0.5
        %v1897 = vadd.f32 %v1834, 0.5
        %v1898 = vadd.f32 %v1835, 0.5
        %v1899 = vadd.f32 %v1836, 0.5
        %v1900 = vadd.f32 %v1837, 0.5
        %v1901 = vfloor.f32 %v1838
        %v1902 = vfloor.f32 %v1839
        %v1903 = vfloor.f32 %v1840
        %v1904 = vfloor.f32 %v1841
        %v1905 = vfloor.f32 %v1842
        %v1906 = vfloor.f32 %v1843
        %v1907 = vfloor.f32 %v1844
        %v1908 = vfloor.f32 %v1845
        %v1909 = vfloor.f32 %v1846
        %v1910 = vfloor.f32 %v1847
        %v1911 = vfloor.f32 %v1848
        %v1912 = vfloor.f32 %v1849
        %v1913 = vfloor.f32 %v1850
        %v1914 = vfloor.f32 %v1851
        %v1915 = vfloor.f32 %v1852
        %v1916 = vfloor.f32 %v1853
        %v1917 = vfloor.f32 %v1854
        %v1918 = vfloor.f32 %v1855
        %v1919 = vfloor.f32 %v1856
        %v1920 = vfloor.f32 %v1857
        %v1921 = vfloor.f32 %v1858
        %v1922 = vfloor.f32 %v1859
        %v1923 = vfloor.f32 %v1860
        %v1924 = vfloor.f32 %v1861
        %v1925 = vfloor.f32 %v1862
        %v1926 = vfloor.f32 %v1863
        %v1927 = vfloor.f32 %v1864
        %v1928 = vfloor.f32 %v1865
        %v1929 = vfloor.f32 %v1866
        %v1930 = vfloor.f32 %v1867
        %v1931 = vfloor.f32 %v1868
        %v1932 = vfloor.f32 %v1869
        %v1933 = vfloor.f32 %v1870
        %v1934 = vfloor.f32 %v1871
        %v1935 = vfloor.f32 %v1872
        %v1936 = vfloor.f32 %v1873
        %v1937 = vfloor.f32 %v1874
        %v1938 = vfloor.f32 %v1875
        %v1939 = vfloor.f32 %v1876
        %v1940 = vfloor.f32 %v1877
        %v1941 = vfloor.f32 %v1878
        %v1942 = vfloor.f32 %v1879
        %v1943 = vfloor.f32 %v1880
        %v1944 = vfloor.f32 %v1881
        %v1945 = vfloor.f32 %v1882
        %v1946 = vfloor.f32 %v1883
        %v1947 = vfloor.f32 %v1884
        %v1948 = vfloor.f32 %v1885
        %v1949 = vfloor.f32 %v1886
        %v1950 = vfloor.f32 %v1887
        %v1951 = vfloor.f32 %v1888
        %v1952 = vfloor.f32 %v1889
        %v1953 = vfloor.f32 %v1890
        %v1954 = vfloor.f32 %v1891
        %v1955 = vfloor.f32 %v1892
        %v1956 = vfloor.f32 %v1893
        %v1957 = vfloor.f32 %v1894
        %v1958 = vfloor.f32 %v1895
        %v1959 = vfloor.f32 %v1896
        %v1960 = vfloor.f32 %v1897
        %v1961 = vfloor.f32 %v1898
        %v1962 = vfloor.f32 %v1899
        %v1963 = vfloor.f32 %v1900
        %v1964 = vmul.f32 %v1901, 1.5703125
        %v1965 = vmul.f32 %v1902, 1.5703125
        %v1966 = vmul.f32 %v1903, 1.5703125
        %v1967 = vmul.f32 %v1904, 1.5703125
        %v1968 = vmul.f32 %v1905, 1.5703125
        %v1969 = vmul.f32 %v1906, 1.5703125
        %v1970 = vmul.f32 %v1907, 1.5703125
        %v1971 = vmul.f32 %v1908, 1.5703125
        %v1972 = vmul.f32 %v1909, 1.5703125
        %v1973 = vmul.f32 %v1910, 1.5703125
        %v1974 = vmul.f32 %v1911, 1.5703125
        %v1975 = vmul.f32 %v1912, 1.5703125
        %v1976 = vmul.f32 %v1913, 1.5703125
        %v1977 = vmul.f32 %v1914, 1.5703125
        %v1978 = vmul.f32 %v1915, 1.5703125
        %v1979 = vmul.f32 %v1916, 1.5703125
        %v1980 = vmul.f32 %v1917, 1.5703125
        %v1981 = vmul.f32 %v1918, 1.5703125
        %v1982 = vmul.f32 %v1919, 1.5703125
        %v1983 = vmul.f32 %v1920, 1.5703125
        %v1984 = vmul.f32 %v1921, 1.5703125
        %v1985 = vmul.f32 %v1922, 1.5703125
        %v1986 = vmul.f32 %v1923, 1.5703125
        %v1987 = vmul.f32 %v1924, 1.5703125
        %v1988 = vmul.f32 %v1925, 1.5703125
        %v1989 = vmul.f32 %v1926, 1.5703125
        %v1990 = vmul.f32 %v1927, 1.5703125
        %v1991 = vmul.f32 %v1928, 1.5703125
        %v1992 = vmul.f32 %v1929, 1.5703125
        %v1993 = vmul.f32 %v1930, 1.5703125
        %v1994 = vmul.f32 %v1931, 1.5703125
        %v1995 = vmul.f32 %v1932, 1.5703125
        %v1996 = vmul.f32 %v1933, 1.5703125
        %v1997 = vmul.f32 %v1934, 1.5703125
        %v1998 = vmul.f32 %v1935, 1.5703125
        %v1999 = vmul.f32 %v1936, 1.5703125
        %v2000 = vmul.f32 %v1937, 1.5703125
        %v2001 = vmul.f32 %v1938, 1.5703125
        %v2002 = vmul.f32 %v1939, 1.5703125
        %v2003 = vmul.f32 %v1940, 1.5703125
        %v2004 = vmul.f32 %v1941, 1.5703125
        %v2005 = vmul.f32 %v1942, 1.5703125
        %v2006 = vmul.f32 %v1943, 1.5703125
        %v2007 = vmul.f32 %v1944, 1.5703125
        %v2008 = vmul.f32 %v1945, 1.5703125
        %v2009 = vmul.f32 %v1946, 1.5703125
        %v2010 = vmul.f32 %v1947, 1.5703125
        %v2011 = vmul.f32 %v1948, 1.5703125
        %v2012 = vmul.f32 %v1949, 1.5703125
        %v2013 = vmul.f32 %v1950, 1.5703125
        %v2014 = vmul.f32 %v1951, 1.5703125
        %v2015 = vmul.f32 %v1952, 1.5703125
        %v2016 = vmul.f32 %v1953, 1.5703125
        %v2017 = vmul.f32 %v1954, 1.5703125
        %v2018 = vmul.f32 %v1955, 1.5703125
        %v2019 = vmul.f32 %v1956, 1.5703125
        %v2020 = vmul.f32 %v1957, 1.5703125
        %v2021 = vmul.f32 %v1958, 1.5703125
        %v2022 = vmul.f32 %v1959, 1.5703125
        %v2023 = vmul.f32 %v1960, 1.5703125
        %v2024 = vmul.f32 %v1961, 1.5703125
        %v2025 = vmul.f32 %v1962, 1.5703125
        %v2026 = vmul.f32 %v1963, 1.5703125
        %v2027 = vsub.f32 %v1712, %v1964
        %v2028 = vsub.f32 %v1713, %v1965
        %v2029 = vsub.f32 %v1714, %v1966
        %v2030 = vsub.f32 %v1715, %v1967
        %v2031 = vsub.f32 %v1716, %v1968
        %v2032 = vsub.f32 %v1717, %v1969
        %v2033 = vsub.f32 %v1718, %v1970
        %v2034 = vsub.f32 %v1719, %v1971
        %v2035 = vsub.f32 %v1720, %v1972
        %v2036 = vsub.f32 %v1721, %v1973
        %v2037 = vsub.f32 %v1722, %v1974
        %v2038 = vsub.f32 %v1723, %v1975
        %v2039 = vsub.f32 %v1724, %v1976
        %v2040 = vsub.f32 %v1725, %v1977
        %v2041 = vsub.f32 %v1726, %v1978
        %v2042 = vsub.f32 %v1727, %v1979
        %v2043 = vsub.f32 %v1728, %v1980
        %v2044 = vsub.f32 %v1729, %v1981
        %v2045 = vsub.f32 %v1730, %v1982
        %v2046 = vsub.f32 %v1731, %v1983
        %v2047 = vsub.f32 %v1732, %v1984
        %v2048 = vsub.f32 %v1733, %v1985
        %v2049 = vsub.f32 %v1734, %v1986
        %v2050 = vsub.f32 %v1735, %v1987
        %v2051 = vsub.f32 %v1736, %v1988
        %v2052 = vsub.f32 %v1737, %v1989
        %v2053 = vsub.f32 %v1738, %v1990
        %v2054 = vsub.f32 %v1739, %v1991
        %v2055 = vsub.f32 %v1740, %v1992
        %v2056 = vsub.f32 %v1741, %v1993
        %v2057 = vsub.f32 %v1742, %v1994
        %v2058 = vsub.f32 %v1743, %v1995
        %v2059 = vsub.f32 %v1744, %v1996
        %v2060 = vsub.f32 %v1745, %v1997
        %v2061 = vsub.f32 %v1746, %v1998
        %v2062 = vsub.f32 %v1747, %v1999
        %v2063 = vsub.f32 %v1748, %v2000
        %v2064 = vsub.f32 %v1749, %v2001
        %v2065 = vsub.f32 %v1750, %v2002
        %v2066 = vsub.f32 %v1751, %v2003
        %v2067 = vsub.f32 %v1752, %v2004
        %v2068 = vsub.f32 %v1753, %v2005
        %v2069 = vsub.f32 %v1754, %v2006
        %v2070 = vsub.f32 %v1755, %v2007
        %v2071 = vsub.f32 %v1756, %v2008
        %v2072 = vsub.f32 %v1757, %v2009
        %v2073 = vsub.f32 %v1758, %v2010
        %v2074 = vsub.f32 %v1759, %v2011
        %v2075 = vsub.f32 %v1760, %v2012
        %v2076 = vsub.f32 %v1761, %v2013
        %v2077 = vsub.f32 %v1762, %v2014
        %v2078 = vsub.f32 %v1763, %v2015
        %v2079 = vsub.f32 %v1764, %v2016
        %v2080 = vsub.f32 %v1765, %v2017
        %v2081 = vsub.f32 %v1766, %v2018
        %v2082 = vsub.f32 %v1767, %v2019
        %v2083 = vsub.f32 %v1768, %v2020
        %v2084 = vsub.f32 %v1769, %v2021
        %v2085 = vsub.f32 %v1770, %v2022
        %v2086 = vsub.f32 %v1771, %v2023
        %v2087 = vsub.f32 %v1772, %v2024
        %v2088 = vsub.f32 %v1773, %v2025
        %v2089 = vsub.f32 %v1774, %v2026
        %v2090 = vmul.f32 %v1901, 0.0004837513
        %v2091 = vmul.f32 %v1902, 0.0004837513
        %v2092 = vmul.f32 %v1903, 0.0004837513
        %v2093 = vmul.f32 %v1904, 0.0004837513
        %v2094 = vmul.f32 %v1905, 0.0004837513
        %v2095 = vmul.f32 %v1906, 0.0004837513
        %v2096 = vmul.f32 %v1907, 0.0004837513
        %v2097 = vmul.f32 %v1908, 0.0004837513
        %v2098 = vmul.f32 %v1909, 0.0004837513
        %v2099 = vmul.f32 %v1910, 0.0004837513
        %v2100 = vmul.f32 %v1911, 0.0004837513
        %v2101 = vmul.f32 %v1912, 0.0004837513
        %v2102 = vmul.f32 %v1913, 0.0004837513
        %v2103 = vmul.f32 %v1914, 0.0004837513
        %v2104 = vmul.f32 %v1915, 0.0004837513
        %v2105 = vmul.f32 %v1916, 0.0004837513
        %v2106 = vmul.f32 %v1917, 0.0004837513
        %v2107 = vmul.f32 %v1918, 0.0004837513
        %v2108 = vmul.f32 %v1919, 0.0004837513
        %v2109 = vmul.f32 %v1920, 0.0004837513
        %v2110 = vmul.f32 %v1921, 0.0004837513
        %v2111 = vmul.f32 %v1922, 0.0004837513
        %v2112 = vmul.f32 %v1923, 0.0004837513
        %v2113 = vmul.f32 %v1924, 0.0004837513
        %v2114 = vmul.f32 %v1925, 0.0004837513
        %v2115 = vmul.f32 %v1926, 0.0004837513
        %v2116 = vmul.f32 %v1927, 0.0004837513
        %v2117 = vmul.f32 %v1928, 0.0004837513
        %v2118 = vmul.f32 %v1929, 0.0004837513
        %v2119 = vmul.f32 %v1930, 0.0004837513
        %v2120 = vmul.f32 %v1931, 0.0004837513
        %v2121 = vmul.f32 %v1932, 0.0004837513
        %v2122 = vmul.f32 %v1933, 0.0004837513
        %v2123 = vmul.f32 %v1934, 0.0004837513
        %v2124 = vmul.f32 %v1935, 0.0004837513
        %v2125 = vmul.f32 %v1936, 0.0004837513
        %v2126 = vmul.f32 %v1937, 0.0004837513
        %v2127 = vmul.f32 %v1938, 0.0004837513
        %v2128 = vmul.f32 %v1939, 0.0004837513
        %v2129 = vmul.f32 %v1940, 0.0004837513
        %v2130 = vmul.f32 %v1941, 0.0004837513
        %v2131 = vmul.f32 %v1942, 0.0004837513
        %v2132 = vmul.f32 %v1943, 0.0004837513
        %v2133 = vmul.f32 %v1944, 0.0004837513
        %v2134 = vmul.f32 %v1945, 0.0004837513
        %v2135 = vmul.f32 %v1946, 0.0004837513
        %v2136 = vmul.f32 %v1947, 0.0004837513
        %v2137 = vmul.f32 %v1948, 0.0004837513
        %v2138 = vmul.f32 %v1949, 0.0004837513
        %v2139 = vmul.f32 %v1950, 0.0004837513
        %v2140 = vmul.f32 %v1951, 0.0004837513
        %v2141 = vmul.f32 %v1952, 0.0004837513
        %v2142 = vmul.f32 %v1953, 0.0004837513
        %v2143 = vmul.f32 %v1954, 0.0004837513
        %v2144 = vmul.f32 %v1955, 0.0004837513
        %v2145 = vmul.f32 %v1956, 0.0004837513
        %v2146 = vmul.f32 %v1957, 0.0004837513
        %v2147 = vmul.f32 %v1958, 0.0004837513
        %v2148 = vmul.f32 %v1959, 0.0004837513
        %v2149 = vmul.f32 %v1960, 0.0004837513
        %v2150 = vmul.f32 %v1961, 0.0004837513
        %v2151 = vmul.f32 %v1962, 0.0004837513
        %v2152 = vmul.f32 %v1963, 0.0004837513
        %v2153 = vsub.f32 %v2027, %v2090
        %v2154 = vsub.f32 %v2028, %v2091
        %v2155 = vsub.f32 %v2029, %v2092
        %v2156 = vsub.f32 %v2030, %v2093
        %v2157 = vsub.f32 %v2031, %v2094
        %v2158 = vsub.f32 %v2032, %v2095
        %v2159 = vsub.f32 %v2033, %v2096
        %v2160 = vsub.f32 %v2034, %v2097
        %v2161 = vsub.f32 %v2035, %v2098
        %v2162 = vsub.f32 %v2036, %v2099
        %v2163 = vsub.f32 %v2037, %v2100
        %v2164 = vsub.f32 %v2038, %v2101
        %v2165 = vsub.f32 %v2039, %v2102
        %v2166 = vsub.f32 %v2040, %v2103
        %v2167 = vsub.f32 %v2041, %v2104
        %v2168 = vsub.f32 %v2042, %v2105
        %v2169 = vsub.f32 %v2043, %v2106
        %v2170 = vsub.f32 %v2044, %v2107
        %v2171 = vsub.f32 %v2045, %v2108
        %v2172 = vsub.f32 %v2046, %v2109
        %v2173 = vsub.f32 %v2047, %v2110
        %v2174 = vsub.f32 %v2048, %v2111
        %v2175 = vsub.f32 %v2049, %v2112
        %v2176 = vsub.f32 %v2050, %v2113
        %v2177 = vsub.f32 %v2051, %v2114
        %v2178 = vsub.f32 %v2052, %v2115
        %v2179 = vsub.f32 %v2053, %v2116
        %v2180 = vsub.f32 %v2054, %v2117
        %v2181 = vsub.f32 %v2055, %v2118
        %v2182 = vsub.f32 %v2056, %v2119
        %v2183 = vsub.f32 %v2057, %v2120
        %v2184 = vsub.f32 %v2058, %v2121
        %v2185 = vsub.f32 %v2059, %v2122
        %v2186 = vsub.f32 %v2060, %v2123
        %v2187 = vsub.f32 %v2061, %v2124
        %v2188 = vsub.f32 %v2062, %v2125
        %v2189 = vsub.f32 %v2063, %v2126
        %v2190 = vsub.f32 %v2064, %v2127
        %v2191 = vsub.f32 %v2065, %v2128
        %v2192 = vsub.f32 %v2066, %v2129
        %v2193 = vsub.f32 %v2067, %v2130
        %v2194 = vsub.f32 %v2068, %v2131
        %v2195 = vsub.f32 %v2069, %v2132
        %v2196 = vsub.f32 %v2070, %v2133
        %v2197 = vsub.f32 %v2071, %v2134
        %v2198 = vsub.f32 %v2072, %v2135
        %v2199 = vsub.f32 %v2073, %v2136
        %v2200 = vsub.f32 %v2074, %v2137
        %v2201 = vsub.f32 %v2075, %v2138
        %v2202 = vsub.f32 %v2076, %v2139
        %v2203 = vsub.f32 %v2077, %v2140
        %v2204 = vsub.f32 %v2078, %v2141
        %v2205 = vsub.f32 %v2079, %v2142
        %v2206 = vsub.f32 %v2080, %v2143
        %v2207 = vsub.f32 %v2081, %v2144
        %v2208 = vsub.f32 %v2082, %v2145
        %v2209 = vsub.f32 %v2083, %v2146
        %v2210 = vsub.f32 %v2084, %v2147
        %v2211 = vsub.f32 %v2085, %v2148
        %v2212 = vsub.f32 %v2086, %v2149
        %v2213 = vsub.f32 %v2087, %v2150
        %v2214 = vsub.f32 %v2088, %v2151
        %v2215 = vsub.f32 %v2089, %v2152
        %v2216 = vmul.f32 %v1901, 7.54979e-08
        %v2217 = vmul.f32 %v1902, 7.54979e-08
        %v2218 = vmul.f32 %v1903, 7.54979e-08
        %v2219 = vmul.f32 %v1904, 7.54979e-08
        %v2220 = vmul.f32 %v1905, 7.54979e-08
        %v2221 = vmul.f32 %v1906, 7.54979e-08
        %v2222 = vmul.f32 %v1907, 7.54979e-08
        %v2223 = vmul.f32 %v1908, 7.54979e-08
        %v2224 = vmul.f32 %v1909, 7.54979e-08
        %v2225 = vmul.f32 %v1910, 7.54979e-08
        %v2226 = vmul.f32 %v1911, 7.54979e-08
        %v2227 = vmul.f32 %v1912, 7.54979e-08
        %v2228 = vmul.f32 %v1913, 7.54979e-08
        %v2229 = vmul.f32 %v1914, 7.54979e-08
        %v2230 = vmul.f32 %v1915, 7.54979e-08
        %v2231 = vmul.f32 %v1916, 7.54979e-08
        %v2232 = vmul.f32 %v1917, 7.54979e-08
        %v2233 = vmul.f32 %v1918, 7.54979e-08
        %v2234 = vmul.f32 %v1919, 7.54979e-08
        %v2235 = vmul.f32 %v1920, 7.54979e-08
        %v2236 = vmul.f32 %v1921, 7.54979e-08
        %v2237 = vmul.f32 %v1922, 7.54979e-08
        %v2238 = vmul.f32 %v1923, 7.54979e-08
        %v2239 = vmul.f32 %v1924, 7.54979e-08
        %v2240 = vmul.f32 %v1925, 7.54979e-08
        %v2241 = vmul.f32 %v1926, 7.54979e-08
        %v2242 = vmul.f32 %v1927, 7.54979e-08
        %v2243 = vmul.f32 %v1928, 7.54979e-08
        %v2244 = vmul.f32 %v1929, 7.54979e-08
        %v2245 = vmul.f32 %v1930, 7.54979e-08
        %v2246 = vmul.f32 %v1931, 7.54979e-08
        %v2247 = vmul.f32 %v1932, 7.54979e-08
        %v2248 = vmul.f32 %v1933, 7.54979e-08
        %v2249 = vmul.f32 %v1934, 7.54979e-08
        %v2250 = vmul.f32 %v1935, 7.54979e-08
        %v2251 = vmul.f32 %v1936, 7.54979e-08
        %v2252 = vmul.f32 %v1937, 7.54979e-08
        %v2253 = vmul.f32 %v1938, 7.54979e-08
        %v2254 = vmul.f32 %v1939, 7.54979e-08
        %v2255 = vmul.f32 %v1940, 7.54979e-08
        %v2256 = vmul.f32 %v1941, 7.54979e-08
        %v2257 = vmul.f32 %v1942, 7.54979e-08
        %v2258 = vmul.f32 %v1943, 7.54979e-08
        %v2259 = vmul.f32 %v1944, 7.54979e-08
        %v2260 = vmul.f32 %v1945, 7.54979e-08
        %v2261 = vmul.f32 %v1946, 7.54979e-08
        %v2262 = vmul.f32 %v1947, 7.54979e-08
        %v2263 = vmul.f32 %v1948, 7.54979e-08
        %v2264 = vmul.f32 %v1949, 7.54979e-08
        %v2265 = vmul.f32 %v1950, 7.54979e-08
        %v2266 = vmul.f32 %v1951, 7.54979e-08
        %v2267 = vmul.f32 %v1952, 7.54979e-08
        %v2268 = vmul.f32 %v1953, 7.54979e-08
        %v2269 = vmul.f32 %v1954, 7.54979e-08
        %v2270 = vmul.f32 %v1955, 7.54979e-08
        %v2271 = vmul.f32 %v1956, 7.54979e-08
        %v2272 = vmul.f32 %v1957, 7.54979e-08
        %v2273 = vmul.f32 %v1958, 7.54979e-08
        %v2274 = vmul.f32 %v1959, 7.54979e-08
        %v2275 = vmul.f32 %v1960, 7.54979e-08
        %v2276 = vmul.f32 %v1961, 7.54979e-08
        %v2277 = vmul.f32 %v1962, 7.54979e-08
        %v2278 = vmul.f32 %v1963, 7.54979e-08
        %v2279 = vsub.f32 %v2153, %v2216
        %v2280 = vsub.f32 %v2154, %v2217
        %v2281 = vsub.f32 %v2155, %v2218
        %v2282 = vsub.f32 %v2156, %v2219
        %v2283 = vsub.f32 %v2157, %v2220
        %v2284 = vsub.f32 %v2158, %v2221
        %v2285 = vsub.f32 %v2159, %v2222
        %v2286 = vsub.f32 %v2160, %v2223
        %v2287 = vsub.f32 %v2161, %v2224
        %v2288 = vsub.f32 %v2162, %v2225
        %v2289 = vsub.f32 %v2163, %v2226
        %v2290 = vsub.f32 %v2164, %v2227
        %v2291 = vsub.f32 %v2165, %v2228
        %v2292 = vsub.f32 %v2166, %v2229
        %v2293 = vsub.f32 %v2167, %v2230
        %v2294 = vsub.f32 %v2168, %v2231
        %v2295 = vsub.f32 %v2169, %v2232
        %v2296 = vsub.f32 %v2170, %v2233
        %v2297 = vsub.f32 %v2171, %v2234
        %v2298 = vsub.f32 %v2172, %v2235
        %v2299 = vsub.f32 %v2173, %v2236
        %v2300 = vsub.f32 %v2174, %v2237
        %v2301 = vsub.f32 %v2175, %v2238
        %v2302 = vsub.f32 %v2176, %v2239
        %v2303 = vsub.f32 %v2177, %v2240
        %v2304 = vsub.f32 %v2178, %v2241
        %v2305 = vsub.f32 %v2179, %v2242
        %v2306 = vsub.f32 %v2180, %v2243
        %v2307 = vsub.f32 %v2181, %v2244
        %v2308 = vsub.f32 %v2182, %v2245
        %v2309 = vsub.f32 %v2183, %v2246
        %v2310 = vsub.f32 %v2184, %v2247
        %v2311 = vsub.f32 %v2185, %v2248
        %v2312 = vsub.f32 %v2186, %v2249
        %v2313 = vsub.f32 %v2187, %v2250
        %v2314 = vsub.f32 %v2188, %v2251
        %v2315 = vsub.f32 %v2189, %v2252
        %v2316 = vsub.f32 %v2190, %v2253
        %v2317 = vsub.f32 %v2191, %v2254
        %v2318 = vsub.f32 %v2192, %v2255
        %v2319 = vsub.f32 %v2193, %v2256
        %v2320 = vsub.f32 %v2194, %v2257
        %v2321 = vsub.f32 %v2195, %v2258
        %v2322 = vsub.f32 %v2196, %v2259
        %v2323 = vsub.f32 %v2197, %v2260
        %v2324 = vsub.f32 %v2198, %v2261
        %v2325 = vsub.f32 %v2199, %v2262
        %v2326 = vsub.f32 %v2200, %v2263
        %v2327 = vsub.f32 %v2201, %v2264
        %v2328 = vsub.f32 %v2202, %v2265
        %v2329 = vsub.f32 %v2203, %v2266
        %v2330 = vsub.f32 %v2204, %v2267
        %v2331 = vsub.f32 %v2205, %v2268
        %v2332 = vsub.f32 %v2206, %v2269
        %v2333 = vsub.f32 %v2207, %v2270
        %v2334 = vsub.f32 %v2208, %v2271
        %v2335 = vsub.f32 %v2209, %v2272
        %v2336 = vsub.f32 %v2210, %v2273
        %v2337 = vsub.f32 %v2211, %v2274
        %v2338 = vsub.f32 %v2212, %v2275
        %v2339 = vsub.f32 %v2213, %v2276
        %v2340 = vsub.f32 %v2214, %v2277
        %v2341 = vsub.f32 %v2215, %v2278
        %v2342 = vmul.f32 %v2279, %v2279
        %v2343 = vmul.f32 %v2280, %v2280
        %v2344 = vmul.f32 %v2281, %v2281
        %v2345 = vmul.f32 %v2282, %v2282
        %v2346 = vmul.f32 %v2283, %v2283
        %v2347 = vmul.f32 %v2284, %v2284
        %v2348 = vmul.f32 %v2285, %v2285
        %v2349 = vmul.f32 %v2286, %v2286
        %v2350 = vmul.f32 %v2287, %v2287
        %v2351 = vmul.f32 %v2288, %v2288
        %v2352 = vmul.f32 %v2289, %v2289
        %v2353 = vmul.f32 %v2290, %v2290
        %v2354 = vmul.f32 %v2291, %v2291
        %v2355 = vmul.f32 %v2292, %v2292
        %v2356 = vmul.f32 %v2293, %v2293
        %v2357 = vmul.f32 %v2294, %v2294
        %v2358 = vmul.f32 %v2295, %v2295
        %v2359 = vmul.f32 %v2296, %v2296
        %v2360 = vmul.f32 %v2297, %v2297
        %v2361 = vmul.f32 %v2298, %v2298
        %v2362 = vmul.f32 %v2299, %v2299
        %v2363 = vmul.f32 %v2300, %v2300
        %v2364 = vmul.f32 %v2301, %v2301
        %v2365 = vmul.f32 %v2302, %v2302
        %v2366 = vmul.f32 %v2303, %v2303
        %v2367 = vmul.f32 %v2304, %v2304
        %v2368 = vmul.f32 %v2305, %v2305
        %v2369 = vmul.f32 %v2306, %v2306
        %v2370 = vmul.f32 %v2307, %v2307
        %v2371 = vmul.f32 %v2308, %v2308
        %v2372 = vmul.f32 %v2309, %v2309
        %v2373 = vmul.f32 %v2310, %v2310
        %v2374 = vmul.f32 %v2311, %v2311
        %v2375 = vmul.f32 %v2312, %v2312
        %v2376 = vmul.f32 %v2313, %v2313
        %v2377 = vmul.f32 %v2314, %v2314
        %v2378 = vmul.f32 %v2315, %v2315
        %v2379 = vmul.f32 %v2316, %v2316
        %v2380 = vmul.f32 %v2317, %v2317
        %v2381 = vmul.f32 %v2318, %v2318
        %v2382 = vmul.f32 %v2319, %v2319
        %v2383 = vmul.f32 %v2320, %v2320
        %v2384 = vmul.f32 %v2321, %v2321
        %v2385 = vmul.f32 %v2322, %v2322
        %v2386 = vmul.f32 %v2323, %v2323
        %v2387 = vmul.f32 %v2324, %v2324
        %v2388 = vmul.f32 %v2325, %v2325
        %v2389 = vmul.f32 %v2326, %v2326
        %v2390 = vmul.f32 %v2327, %v2327
        %v2391 = vmul.f32 %v2328, %v2328
        %v2392 = vmul.f32 %v2329, %v2329
        %v2393 = vmul.f32 %v2330, %v2330
        %v2394 = vmul.f32 %v2331, %v2331
        %v2395 = vmul.f32 %v2332, %v2332
        %v2396 = vmul.f32 %v2333, %v2333
        %v2397 = vmul.f32 %v2334, %v2334
        %v2398 = vmul.f32 %v2335, %v2335
        %v2399 = vmul.f32 %v2336, %v2336
        %v2400 = vmul.f32 %v2337, %v2337
        %v2401 = vmul.f32 %v2338, %v2338
        %v2402 = vmul.f32 %v2339, %v2339
        %v2403 = vmul.f32 %v2340, %v2340
        %v2404 = vmul.f32 %v2341, %v2341
        %v2405 = vmul.f32 %v2342, -0.00019515296
        %v2406 = vmul.f32 %v2343, -0.00019515296
        %v2407 = vmul.f32 %v2344, -0.00019515296
        %v2408 = vmul.f32 %v2345, -0.00019515296
        %v2409 = vmul.f32 %v2346, -0.00019515296
        %v2410 = vmul.f32 %v2347, -0.00019515296
        %v2411 = vmul.f32 %v2348, -0.00019515296
        %v2412 = vmul.f32 %v2349, -0.00019515296
        %v2413 = vmul.f32 %v2350, -0.00019515296
        %v2414 = vmul.f32 %v2351, -0.00019515296
        %v2415 = vmul.f32 %v2352, -0.00019515296
        %v2416 = vmul.f32 %v2353, -0.00019515296
        %v2417 = vmul.f32 %v2354, -0.00019515296
        %v2418 = vmul.f32 %v2355, -0.00019515296
        %v2419 = vmul.f32 %v2356, -0.00019515296
        %v2420 = vmul.f32 %v2357, -0.00019515296
        %v2421 = vmul.f32 %v2358, -0.00019515296
        %v2422 = vmul.f32 %v2359, -0.00019515296
        %v2423 = vmul.f32 %v2360, -0.00019515296
        %v2424 = vmul.f32 %v2361, -0.00019515296
        %v2425 = vmul.f32 %v2362, -0.00019515296
        %v2426 = vmul.f32 %v2363, -0.00019515296
        %v2427 = vmul.f32 %v2364, -0.00019515296
        %v2428 = vmul.f32 %v2365, -0.00019515296
        %v2429 = vmul.f32 %v2366, -0.00019515296
        %v2430 = vmul.f32 %v2367, -0.00019515296
        %v2431 = vmul.f32 %v2368, -0.00019515296
        %v2432 = vmul.f32 %v2369, -0.00019515296
        %v2433 = vmul.f32 %v2370, -0.00019515296
        %v2434 = vmul.f32 %v2371, -0.00019515296
        %v2435 = vmul.f32 %v2372, -0.00019515296
        %v2436 = vmul.f32 %v2373, -0.00019515296
        %v2437 = vmul.f32 %v2374, -0.00019515296
        %v2438 = vmul.f32 %v2375, -0.00019515296
        %v2439 = vmul.f32 %v2376, -0.00019515296
        %v2440 = vmul.f32 %v2377, -0.00019515296
        %v2441 = vmul.f32 %v2378, -0.00019515296
        %v2442 = vmul.f32 %v2379, -0.00019515296
        %v2443 = vmul.f32 %v2380, -0.00019515296
        %v2444 = vmul.f32 %v2381, -0.00019515296
        %v2445 = vmul.f32 %v2382, -0.00019515296
        %v2446 = vmul.f32 %v2383, -0.00019515296
        %v2447 = vmul.f32 %v2384, -0.00019515296
        %v2448 = vmul.f32 %v2385, -0.00019515296
        %v2449 = vmul.f32 %v2386, -0.00019515296
        %v2450 = vmul.f32 %v2387, -0.00019515296
        %v2451 = vmul.f32 %v2388, -0.00019515296
        %v2452 = vmul.f32 %v2389, -0.00019515296
        %v2453 = vmul.f32 %v2390, -0.00019515296
        %v2454 = vmul.f32 %v2391, -0.00019515296
        %v2455 = vmul.f32 %v2392, -0.00019515296
        %v2456 = vmul.f32 %v2393, -0.00019515296
        %v2457 = vmul.f32 %v2394, -0.00019515296
        %v2458 = vmul.f32 %v2395, -0.00019515296
        %v2459 = vmul.f32 %v2396, -0.00019515296
        %v2460 = vmul.f32 %v2397, -0.00019515296
        %v2461 = vmul.f32 %v2398, -0.00019515296
        %v2462 = vmul.f32 %v2399, -0.00019515296
        %v2463 = vmul.f32 %v2400, -0.00019515296
        %v2464 = vmul.f32 %v2401, -0.00019515296
        %v2465 = vmul.f32 %v2402, -0.00019515296
        %v2466 = vmul.f32 %v2403, -0.00019515296
        %v2467 = vmul.f32 %v2404, -0.00019515296
        %v2468 = vadd.f32 %v2405, 0.008332161
        %v2469 = vadd.f32 %v2406, 0.008332161
        %v2470 = vadd.f32 %v2407, 0.008332161
        %v2471 = vadd.f32 %v2408, 0.008332161
        %v2472 = vadd.f32 %v2409, 0.008332161
        %v2473 = vadd.f32 %v2410, 0.008332161
        %v2474 = vadd.f32 %v2411, 0.008332161
        %v2475 = vadd.f32 %v2412, 0.008332161
        %v2476 = vadd.f32 %v2413, 0.008332161
        %v2477 = vadd.f32 %v2414, 0.008332161
        %v2478 = vadd.f32 %v2415, 0.008332161
        %v2479 = vadd.f32 %v2416, 0.008332161
        %v2480 = vadd.f32 %v2417, 0.008332161
        %v2481 = vadd.f32 %v2418, 0.008332161
        %v2482 = vadd.f32 %v2419, 0.008332161
        %v2483 = vadd.f32 %v2420, 0.008332161
        %v2484 = vadd.f32 %v2421, 0.008332161
        %v2485 = vadd.f32 %v2422, 0.008332161
        %v2486 = vadd.f32 %v2423, 0.008332161
        %v2487 = vadd.f32 %v2424, 0.008332161
        %v2488 = vadd.f32 %v2425, 0.008332161
        %v2489 = vadd.f32 %v2426, 0.008332161
        %v2490 = vadd.f32 %v2427, 0.008332161
        %v2491 = vadd.f32 %v2428, 0.008332161
        %v2492 = vadd.f32 %v2429, 0.008332161
        %v2493 = vadd.f32 %v2430, 0.008332161
        %v2494 = vadd.f32 %v2431, 0.008332161
        %v2495 = vadd.f32 %v2432, 0.008332161
        %v2496 = vadd.f32 %v2433, 0.008332161
        %v2497 = vadd.f32 %v2434, 0.008332161
        %v2498 = vadd.f32 %v2435, 0.008332161
        %v2499 = vadd.f32 %v2436, 0.008332161
        %v2500 = vadd.f32 %v2437, 0.008332161
        %v2501 = vadd.f32 %v2438, 0.008332161
        %v2502 = vadd.f32 %v2439, 0.008332161
        %v2503 = vadd.f32 %v2440, 0.008332161
        %v2504 = vadd.f32 %v2441, 0.008332161
        %v2505 = vadd.f32 %v2442, 0.008332161
        %v2506 = vadd.f32 %v2443, 0.008332161
        %v2507 = vadd.f32 %v2444, 0.008332161
        %v2508 = vadd.f32 %v2445, 0.008332161
        %v2509 = vadd.f32 %v2446, 0.008332161
        %v2510 = vadd.f32 %v2447, 0.008332161
        %v2511 = vadd.f32 %v2448, 0.008332161
        %v2512 = vadd.f32 %v2449, 0.008332161
        %v2513 = vadd.f32 %v2450, 0.008332161
        %v2514 = vadd.f32 %v2451, 0.008332161
        %v2515 = vadd.f32 %v2452, 0.008332161
        %v2516 = vadd.f32 %v2453, 0.008332161
        %v2517 = vadd.f32 %v2454, 0.008332161
        %v2518 = vadd.f32 %v2455, 0.008332161
        %v2519 = vadd.f32 %v2456, 0.008332161
        %v2520 = vadd.f32 %v2457, 0.008332161
        %v2521 = vadd.f32 %v2458, 0.008332161
        %v2522 = vadd.f32 %v2459, 0.008332161
        %v2523 = vadd.f32 %v2460, 0.008332161
        %v2524 = vadd.f32 %v2461, 0.008332161
        %v2525 = vadd.f32 %v2462, 0.008332161
        %v2526 = vadd.f32 %v2463, 0.008332161
        %v2527 = vadd.f32 %v2464, 0.008332161
        %v2528 = vadd.f32 %v2465, 0.008332161
        %v2529 = vadd.f32 %v2466, 0.008332161
        %v2530 = vadd.f32 %v2467, 0.008332161
        %v2531 = vmul.f32 %v2342, %v2468
        %v2532 = vmul.f32 %v2343, %v2469
        %v2533 = vmul.f32 %v2344, %v2470
        %v2534 = vmul.f32 %v2345, %v2471
        %v2535 = vmul.f32 %v2346, %v2472
        %v2536 = vmul.f32 %v2347, %v2473
        %v2537 = vmul.f32 %v2348, %v2474
        %v2538 = vmul.f32 %v2349, %v2475
        %v2539 = vmul.f32 %v2350, %v2476
        %v2540 = vmul.f32 %v2351, %v2477
        %v2541 = vmul.f32 %v2352, %v2478
        %v2542 = vmul.f32 %v2353, %v2479
        %v2543 = vmul.f32 %v2354, %v2480
        %v2544 = vmul.f32 %v2355, %v2481
        %v2545 = vmul.f32 %v2356, %v2482
        %v2546 = vmul.f32 %v2357, %v2483
        %v2547 = vmul.f32 %v2358, %v2484
        %v2548 = vmul.f32 %v2359, %v2485
        %v2549 = vmul.f32 %v2360, %v2486
        %v2550 = vmul.f32 %v2361, %v2487
        %v2551 = vmul.f32 %v2362, %v2488
        %v2552 = vmul.f32 %v2363, %v2489
        %v2553 = vmul.f32 %v2364, %v2490
        %v2554 = vmul.f32 %v2365, %v2491
        %v2555 = vmul.f32 %v2366, %v2492
        %v2556 = vmul.f32 %v2367, %v2493
        %v2557 = vmul.f32 %v2368, %v2494
        %v2558 = vmul.f32 %v2369, %v2495
        %v2559 = vmul.f32 %v2370, %v2496
        %v2560 = vmul.f32 %v2371, %v2497
        %v2561 = vmul.f32 %v2372, %v2498
        %v2562 = vmul.f32 %v2373, %v2499
        %v2563 = vmul.f32 %v2374, %v2500
        %v2564 = vmul.f32 %v2375, %v2501
        %v2565 = vmul.f32 %v2376, %v2502
        %v2566 = vmul.f32 %v2377, %v2503
        %v2567 = vmul.f32 %v2378, %v2504
        %v2568 = vmul.f32 %v2379, %v2505
        %v2569 = vmul.f32 %v2380, %v2506
        %v2570 = vmul.f32 %v2381, %v2507
        %v2571 = vmul.f32 %v2382, %v2508
        %v2572 = vmul.f32 %v2383, %v2509
        %v2573 = vmul.f32 %v2384, %v2510
        %v2574 = vmul.f32 %v2385, %v2511
        %v2575 = vmul.f32 %v2386, %v2512
        %v2576 = vmul.f32 %v2387, %v2513
        %v2577 = vmul.f32 %v2388, %v2514
        %v2578 = vmul.f32 %v2389, %v2515
        %v2579 = vmul.f32 %v2390, %v2516
        %v2580 = vmul.f32 %v2391, %v2517
        %v2581 = vmul.f32 %v2392, %v2518
        %v2582 = vmul.f32 %v2393, %v2519
        %v2583 = vmul.f32 %v2394, %v2520
        %v2584 = vmul.f32 %v2395, %v2521
        %v2585 = vmul.f32 %v2396, %v2522
        %v2586 = vmul.f32 %v2397, %v2523
        %v2587 = vmul.f32 %v2398, %v2524
        %v2588 = vmul.f32 %v2399, %v2525
        %v2589 = vmul.f32 %v2400, %v2526
        %v2590 = vmul.f32 %v2401, %v2527
        %v2591 = vmul.f32 %v2402, %v2528
        %v2592 = vmul.f32 %v2403, %v2529
        %v2593 = vmul.f32 %v2404, %v2530
        %v2594 = vadd.f32 %v2531, -0.16666655
        %v2595 = vadd.f32 %v2532, -0.16666655
        %v2596 = vadd.f32 %v2533, -0.16666655
        %v2597 = vadd.f32 %v2534, -0.16666655
        %v2598 = vadd.f32 %v2535, -0.16666655
        %v2599 = vadd.f32 %v2536, -0.16666655
        %v2600 = vadd.f32 %v2537, -0.16666655
        %v2601 = vadd.f32 %v2538, -0.16666655
        %v2602 = vadd.f32 %v2539, -0.16666655
        %v2603 = vadd.f32 %v2540, -0.16666655
        %v2604 = vadd.f32 %v2541, -0.16666655
        %v2605 = vadd.f32 %v2542, -0.16666655
        %v2606 = vadd.f32 %v2543, -0.16666655
        %v2607 = vadd.f32 %v2544, -0.16666655
        %v2608 = vadd.f32 %v2545, -0.16666655
        %v2609 = vadd.f32 %v2546, -0.16666655
        %v2610 = vadd.f32 %v2547, -0.16666655
        %v2611 = vadd.f32 %v2548, -0.16666655
        %v2612 = vadd.f32 %v2549, -0.16666655
        %v2613 = vadd.f32 %v2550, -0.16666655
        %v2614 = vadd.f32 %v2551, -0.16666655
        %v2615 = vadd.f32 %v2552, -0.16666655
        %v2616 = vadd.f32 %v2553, -0.16666655
        %v2617 = vadd.f32 %v2554, -0.16666655
        %v2618 = vadd.f32 %v2555, -0.16666655
        %v2619 = vadd.f32 %v2556, -0.16666655
        %v2620 = vadd.f32 %v2557, -0.16666655
        %v2621 = vadd.f32 %v2558, -0.16666655
        %v2622 = vadd.f32 %v2559, -0.16666655
        %v2623 = vadd.f32 %v2560, -0.16666655
        %v2624 = vadd.f32 %v2561, -0.16666655
        %v2625 = vadd.f32 %v2562, -0.16666655
        %v2626 = vadd.f32 %v2563, -0.16666655
        %v2627 = vadd.f32 %v2564, -0.16666655
        %v2628 = vadd.f32 %v2565, -0.16666655
        %v2629 = vadd.f32 %v2566, -0.16666655
        %v2630 = vadd.f32 %v2567, -0.16666655
        %v2631 = vadd.f32 %v2568, -0.16666655
        %v2632 = vadd.f32 %v2569, -0.16666655
        %v2633 = vadd.f32 %v2570, -0.16666655
        %v2634 = vadd.f32 %v2571, -0.16666655
        %v2635 = vadd.f32 %v2572, -0.16666655
        %v2636 = vadd.f32 %v2573, -0.16666655
        %v2637 = vadd.f32 %v2574, -0.16666655
        %v2638 = vadd.f32 %v2575, -0.16666655
        %v2639 = vadd.f32 %v2576, -0.16666655
        %v2640 = vadd.f32 %v2577, -0.16666655
        %v2641 = vadd.f32 %v2578, -0.16666655
        %v2642 = vadd.f32 %v2579, -0.16666655
        %v2643 = vadd.f32 %v2580, -0.16666655
        %v2644 = vadd.f32 %v2581, -0.16666655
        %v2645 = vadd.f32 %v2582, -0.16666655
        %v2646 = vadd.f32 %v2583, -0.16666655
        %v2647 = vadd.f32 %v2584, -0.16666655
        %v2648 = vadd.f32 %v2585, -0.16666655
        %v2649 = vadd.f32 %v2586, -0.16666655
        %v2650 = vadd.f32 %v2587, -0.16666655
        %v2651 = vadd.f32 %v2588, -0.16666655
        %v2652 = vadd.f32 %v2589, -0.16666655
        %v2653 = vadd.f32 %v2590, -0.16666655
        %v2654 = vadd.f32 %v2591, -0.16666655
        %v2655 = vadd.f32 %v2592, -0.16666655
        %v2656 = vadd.f32 %v2593, -0.16666655
        %v2657 = vmul.f32 %v2342, %v2594
        %v2658 = vmul.f32 %v2343, %v2595
        %v2659 = vmul.f32 %v2344, %v2596
        %v2660 = vmul.f32 %v2345, %v2597
        %v2661 = vmul.f32 %v2346, %v2598
        %v2662 = vmul.f32 %v2347, %v2599
        %v2663 = vmul.f32 %v2348, %v2600
        %v2664 = vmul.f32 %v2349, %v2601
        %v2665 = vmul.f32 %v2350, %v2602
        %v2666 = vmul.f32 %v2351, %v2603
        %v2667 = vmul.f32 %v2352, %v2604
        %v2668 = vmul.f32 %v2353, %v2605
        %v2669 = vmul.f32 %v2354, %v2606
        %v2670 = vmul.f32 %v2355, %v2607
        %v2671 = vmul.f32 %v2356, %v2608
        %v2672 = vmul.f32 %v2357, %v2609
        %v2673 = vmul.f32 %v2358, %v2610
        %v2674 = vmul.f32 %v2359, %v2611
        %v2675 = vmul.f32 %v2360, %v2612
        %v2676 = vmul.f32 %v2361, %v2613
        %v2677 = vmul.f32 %v2362, %v2614
        %v2678 = vmul.f32 %v2363, %v2615
        %v2679 = vmul.f32 %v2364, %v2616
        %v2680 = vmul.f32 %v2365, %v2617
        %v2681 = vmul.f32 %v2366, %v2618
        %v2682 = vmul.f32 %v2367, %v2619
        %v2683 = vmul.f32 %v2368, %v2620
        %v2684 = vmul.f32 %v2369, %v2621
        %v2685 = vmul.f32 %v2370, %v2622
        %v2686 = vmul.f32 %v2371, %v2623
        %v2687 = vmul.f32 %v2372, %v2624
        %v2688 = vmul.f32 %v2373, %v2625
        %v2689 = vmul.f32 %v2374, %v2626
        %v2690 = vmul.f32 %v2375, %v2627
        %v2691 = vmul.f32 %v2376, %v2628
        %v2692 = vmul.f32 %v2377, %v2629
        %v2693 = vmul.f32 %v2378, %v2630
        %v2694 = vmul.f32 %v2379, %v2631
        %v2695 = vmul.f32 %v2380, %v2632
        %v2696 = vmul.f32 %v2381, %v2633
        %v2697 = vmul.f32 %v2382, %v2634
        %v2698 = vmul.f32 %v2383, %v2635
        %v2699 = vmul.f32 %v2384, %v2636
        %v2700 = vmul.f32 %v2385, %v2637
        %v2701 = vmul.f32 %v2386, %v2638
        %v2702 = vmul.f32 %v2387, %v2639
        %v2703 = vmul.f32 %v2388, %v2640
        %v2704 = vmul.f32 %v2389, %v2641
        %v2705 = vmul.f32 %v2390, %v2642
        %v2706 = vmul.f32 %v2391, %v2643
        %v2707 = vmul.f32 %v2392, %v2644
        %v2708 = vmul.f32 %v2393, %v2645
        %v2709 = vmul.f32 %v2394, %v2646
        %v2710 = vmul.f32 %v2395, %v2647
        %v2711 = vmul.f32 %v2396, %v2648
        %v2712 = vmul.f32 %v2397, %v2649
        %v2713 = vmul.f32 %v2398, %v2650
        %v2714 = vmul.f32 %v2399, %v2651
        %v2715 = vmul.f32 %v2400, %v2652
        %v2716 = vmul.f32 %v2401, %v2653
        %v2717 = vmul.f32 %v2402, %v2654
        %v2718 = vmul.f32 %v2403, %v2655
        %v2719 = vmul.f32 %v2404, %v2656
        %v2720 = vadd.f32 %v2657, 1.0
        %v2721 = vadd.f32 %v2658, 1.0
        %v2722 = vadd.f32 %v2659, 1.0
        %v2723 = vadd.f32 %v2660, 1.0
        %v2724 = vadd.f32 %v2661, 1.0
        %v2725 = vadd.f32 %v2662, 1.0
        %v2726 = vadd.f32 %v2663, 1.0
        %v2727 = vadd.f32 %v2664, 1.0
        %v2728 = vadd.f32 %v2665, 1.0
        %v2729 = vadd.f32 %v2666, 1.0
        %v2730 = vadd.f32 %v2667, 1.0
        %v2731 = vadd.f32 %v2668, 1.0
        %v2732 = vadd.f32 %v2669, 1.0
        %v2733 = vadd.f32 %v2670, 1.0
        %v2734 = vadd.f32 %v2671, 1.0
        %v2735 = vadd.f32 %v2672, 1.0
        %v2736 = vadd.f32 %v2673, 1.0
        %v2737 = vadd.f32 %v2674, 1.0
        %v2738 = vadd.f32 %v2675, 1.0
        %v2739 = vadd.f32 %v2676, 1.0
        %v2740 = vadd.f32 %v2677, 1.0
        %v2741 = vadd.f32 %v2678, 1.0
        %v2742 = vadd.f32 %v2679, 1.0
        %v2743 = vadd.f32 %v2680, 1.0
        %v2744 = vadd.f32 %v2681, 1.0
        %v2745 = vadd.f32 %v2682, 1.0
        %v2746 = vadd.f32 %v2683, 1.0
        %v2747 = vadd.f32 %v2684, 1.0
        %v2748 = vadd.f32 %v2685, 1.0
        %v2749 = vadd.f32 %v2686, 1.0
        %v2750 = vadd.f32 %v2687, 1.0
        %v2751 = vadd.f32 %v2688, 1.0
        %v2752 = vadd.f32 %v2689, 1.0
        %v2753 = vadd.f32 %v2690, 1.0
        %v2754 = vadd.f32 %v2691, 1.0
        %v2755 = vadd.f32 %v2692, 1.0
        %v2756 = vadd.f32 %v2693, 1.0
        %v2757 = vadd.f32 %v2694, 1.0
        %v2758 = vadd.f32 %v2695, 1.0
        %v2759 = vadd.f32 %v2696, 1.0
        %v2760 = vadd.f32 %v2697, 1.0
        %v2761 = vadd.f32 %v2698, 1.0
        %v2762 = vadd.f32 %v2699, 1.0
        %v2763 = vadd.f32 %v2700, 1.0
        %v2764 = vadd.f32 %v2701, 1.0
        %v2765 = vadd.f32 %v2702, 1.0
        %v2766 = vadd.f32 %v2703, 1.0
        %v2767 = vadd.f32 %v2704, 1.0
        %v2768 = vadd.f32 %v2705, 1.0
        %v2769 = vadd.f32 %v2706, 1.0
        %v2770 = vadd.f32 %v2707, 1.0
        %v2771 = vadd.f32 %v2708, 1.0
        %v2772 = vadd.f32 %v2709, 1.0
        %v2773 = vadd.f32 %v2710, 1.0
        %v2774 = vadd.f32 %v2711, 1.0
        %v2775 = vadd.f32 %v2712, 1.0
        %v2776 = vadd.f32 %v2713, 1.0
        %v2777 = vadd.f32 %v2714, 1.0
        %v2778 = vadd.f32 %v2715, 1.0
        %v2779 = vadd.f32 %v2716, 1.0
        %v2780 = vadd.f32 %v2717, 1.0
        %v2781 = vadd.f32 %v2718, 1.0
        %v2782 = vadd.f32 %v2719, 1.0
        %v2783 = vmul.f32 %v2279, %v2720
        %v2784 = vmul.f32 %v2280, %v2721
        %v2785 = vmul.f32 %v2281, %v2722
        %v2786 = vmul.f32 %v2282, %v2723
        %v2787 = vmul.f32 %v2283, %v2724
        %v2788 = vmul.f32 %v2284, %v2725
        %v2789 = vmul.f32 %v2285, %v2726
        %v2790 = vmul.f32 %v2286, %v2727
        %v2791 = vmul.f32 %v2287, %v2728
        %v2792 = vmul.f32 %v2288, %v2729
        %v2793 = vmul.f32 %v2289, %v2730
        %v2794 = vmul.f32 %v2290, %v2731
        %v2795 = vmul.f32 %v2291, %v2732
        %v2796 = vmul.f32 %v2292, %v2733
        %v2797 = vmul.f32 %v2293, %v2734
        %v2798 = vmul.f32 %v2294, %v2735
        %v2799 = vmul.f32 %v2295, %v2736
        %v2800 = vmul.f32 %v2296, %v2737
        %v2801 = vmul.f32 %v2297, %v2738
        %v2802 = vmul.f32 %v2298, %v2739
        %v2803 = vmul.f32 %v2299, %v2740
        %v2804 = vmul.f32 %v2300, %v2741
        %v2805 = vmul.f32 %v2301, %v2742
        %v2806 = vmul.f32 %v2302, %v2743
        %v2807 = vmul.f32 %v2303, %v2744
        %v2808 = vmul.f32 %v2304, %v2745
        %v2809 = vmul.f32 %v2305, %v2746
        %v2810 = vmul.f32 %v2306, %v2747
        %v2811 = vmul.f32 %v2307, %v2748
        %v2812 = vmul.f32 %v2308, %v2749
        %v2813 = vmul.f32 %v2309, %v2750
        %v2814 = vmul.f32 %v2310, %v2751
        %v2815 = vmul.f32 %v2311, %v2752
        %v2816 = vmul.f32 %v2312, %v2753
        %v2817 = vmul.f32 %v2313, %v2754
        %v2818 = vmul.f32 %v2314, %v2755
        %v2819 = vmul.f32 %v2315, %v2756
        %v2820 = vmul.f32 %v2316, %v2757
        %v2821 = vmul.f32 %v2317, %v2758
        %v2822 = vmul.f32 %v2318, %v2759
        %v2823 = vmul.f32 %v2319, %v2760
        %v2824 = vmul.f32 %v2320, %v2761
        %v2825 = vmul.f32 %v2321, %v2762
        %v2826 = vmul.f32 %v2322, %v2763
        %v2827 = vmul.f32 %v2323, %v2764
        %v2828 = vmul.f32 %v2324, %v2765
        %v2829 = vmul.f32 %v2325, %v2766
        %v2830 = vmul.f32 %v2326, %v2767
        %v2831 = vmul.f32 %v2327, %v2768
        %v2832 = vmul.f32 %v2328, %v2769
        %v2833 = vmul.f32 %v2329, %v2770
        %v2834 = vmul.f32 %v2330, %v2771
        %v2835 = vmul.f32 %v2331, %v2772
        %v2836 = vmul.f32 %v2332, %v2773
        %v2837 = vmul.f32 %v2333, %v2774
        %v2838 = vmul.f32 %v2334, %v2775
        %v2839 = vmul.f32 %v2335, %v2776
        %v2840 = vmul.f32 %v2336, %v2777
        %v2841 = vmul.f32 %v2337, %v2778
        %v2842 = vmul.f32 %v2338, %v2779
        %v2843 = vmul.f32 %v2339, %v2780
        %v2844 = vmul.f32 %v2340, %v2781
        %v2845 = vmul.f32 %v2341, %v2782
        %v2846 = vmul.f32 %v2342, 2.4433157e-05
        %v2847 = vmul.f32 %v2343, 2.4433157e-05
        %v2848 = vmul.f32 %v2344, 2.4433157e-05
        %v2849 = vmul.f32 %v2345, 2.4433157e-05
        %v2850 = vmul.f32 %v2346, 2.4433157e-05
        %v2851 = vmul.f32 %v2347, 2.4433157e-05
        %v2852 = vmul.f32 %v2348, 2.4433157e-05
        %v2853 = vmul.f32 %v2349, 2.4433157e-05
        %v2854 = vmul.f32 %v2350, 2.4433157e-05
        %v2855 = vmul.f32 %v2351, 2.4433157e-05
        %v2856 = vmul.f32 %v2352, 2.4433157e-05
        %v2857 = vmul.f32 %v2353, 2.4433157e-05
        %v2858 = vmul.f32 %v2354, 2.4433157e-05
        %v2859 = vmul.f32 %v2355, 2.4433157e-05
        %v2860 = vmul.f32 %v2356, 2.4433157e-05
        %v2861 = vmul.f32 %v2357, 2.4433157e-05
        %v2862 = vmul.f32 %v2358, 2.4433157e-05
        %v2863 = vmul.f32 %v2359, 2.4433157e-05
        %v2864 = vmul.f32 %v2360, 2.4433157e-05
        %v2865 = vmul.f32 %v2361, 2.4433157e-05
        %v2866 = vmul.f32 %v2362, 2.4433157e-05
        %v2867 = vmul.f32 %v2363, 2.4433157e-05
        %v2868 = vmul.f32 %v2364, 2.4433157e-05
        %v2869 = vmul.f32 %v2365, 2.4433157e-05
        %v2870 = vmul.f32 %v2366, 2.4433157e-05
        %v2871 = vmul.f32 %v2367, 2.4433157e-05
        %v2872 = vmul.f32 %v2368, 2.4433157e-05
        %v2873 = vmul.f32 %v2369, 2.4433157e-05
        %v2874 = vmul.f32 %v2370, 2.4433157e-05
        %v2875 = vmul.f32 %v2371, 2.4433157e-05
        %v2876 = vmul.f32 %v2372, 2.4433157e-05
        %v2877 = vmul.f32 %v2373, 2.4433157e-05
        %v2878 = vmul.f32 %v2374, 2.4433157e-05
        %v2879 = vmul.f32 %v2375, 2.4433157e-05
        %v2880 = vmul.f32 %v2376, 2.4433157e-05
        %v2881 = vmul.f32 %v2377, 2.4433157e-05
        %v2882 = vmul.f32 %v2378, 2.4433157e-05
        %v2883 = vmul.f32 %v2379, 2.4433157e-05
        %v2884 = vmul.f32 %v2380, 2.4433157e-05
        %v2885 = vmul.f32 %v2381, 2.4433157e-05
        %v2886 = vmul.f32 %v2382, 2.4433157e-05
        %v2887 = vmul.f32 %v2383, 2.4433157e-05
        %v2888 = vmul.f32 %v2384, 2.4433157e-05
        %v2889 = vmul.f32 %v2385, 2.4433157e-05
        %v2890 = vmul.f32 %v2386, 2.4433157e-05
        %v2891 = vmul.f32 %v2387, 2.4433157e-05
        %v2892 = vmul.f32 %v2388, 2.4433157e-05
        %v2893 = vmul.f32 %v2389, 2.4433157e-05
        %v2894 = vmul.f32 %v2390, 2.4433157e-05
        %v2895 = vmul.f32 %v2391, 2.4433157e-05
        %v2896 = vmul.f32 %v2392, 2.4433157e-05
        %v2897 = vmul.f32 %v2393, 2.4433157e-05
        %v2898 = vmul.f32 %v2394, 2.4433157e-05
        %v2899 = vmul.f32 %v2395, 2.4433157e-05
        %v2900 = vmul.f32 %v2396, 2.4433157e-05
        %v2901 = vmul.f32 %v2397, 2.4433157e-05
        %v2902 = vmul.f32 %v2398, 2.4433157e-05
        %v2903 = vmul.f32 %v2399, 2.4433157e-05
        %v2904 = vmul.f32 %v2400, 2.4433157e-05
        %v2905 = vmul.f32 %v2401, 2.4433157e-05
        %v2906 = vmul.f32 %v2402, 2.4433157e-05
        %v2907 = vmul.f32 %v2403, 2.4433157e-05
        %v2908 = vmul.f32 %v2404, 2.4433157e-05
        %v2909 = vadd.f32 %v2846, -0.0013887316
        %v2910 = vadd.f32 %v2847, -0.0013887316
        %v2911 = vadd.f32 %v2848, -0.0013887316
        %v2912 = vadd.f32 %v2849, -0.0013887316
        %v2913 = vadd.f32 %v2850, -0.0013887316
        %v2914 = vadd.f32 %v2851, -0.0013887316
        %v2915 = vadd.f32 %v2852, -0.0013887316
        %v2916 = vadd.f32 %v2853, -0.0013887316
        %v2917 = vadd.f32 %v2854, -0.0013887316
        %v2918 = vadd.f32 %v2855, -0.0013887316
        %v2919 = vadd.f32 %v2856, -0.0013887316
        %v2920 = vadd.f32 %v2857, -0.0013887316
        %v2921 = vadd.f32 %v2858, -0.0013887316
        %v2922 = vadd.f32 %v2859, -0.0013887316
        %v2923 = vadd.f32 %v2860, -0.0013887316
        %v2924 = vadd.f32 %v2861, -0.0013887316
        %v2925 = vadd.f32 %v2862, -0.0013887316
        %v2926 = vadd.f32 %v2863, -0.0013887316
        %v2927 = vadd.f32 %v2864, -0.0013887316
        %v2928 = vadd.f32 %v2865, -0.0013887316
        %v2929 = vadd.f32 %v2866, -0.0013887316
        %v2930 = vadd.f32 %v2867, -0.0013887316
        %v2931 = vadd.f32 %v2868, -0.0013887316
        %v2932 = vadd.f32 %v2869, -0.0013887316
        %v2933 = vadd.f32 %v2870, -0.0013887316
        %v2934 = vadd.f32 %v2871, -0.0013887316
        %v2935 = vadd.f32 %v2872, -0.0013887316
        %v2936 = vadd.f32 %v2873, -0.0013887316
        %v2937 = vadd.f32 %v2874, -0.0013887316
        %v2938 = vadd.f32 %v2875, -0.0013887316
        %v2939 = vadd.f32 %v2876, -0.0013887316
        %v2940 = vadd.f32 %v2877, -0.0013887316
        %v2941 = vadd.f32 %v2878, -0.0013887316
        %v2942 = vadd.f32 %v2879, -0.0013887316
        %v2943 = vadd.f32 %v2880, -0.0013887316
        %v2944 = vadd.f32 %v2881, -0.0013887316
        %v2945 = vadd.f32 %v2882, -0.0013887316
        %v2946 = vadd.f32 %v2883, -0.0013887316
        %v2947 = vadd.f32 %v2884, -0.0013887316
        %v2948 = vadd.f32 %v2885, -0.0013887316
        %v2949 = vadd.f32 %v2886, -0.0013887316
        %v2950 = vadd.f32 %v2887, -0.0013887316
        %v2951 = vadd.f32 %v2888, -0.0013887316
        %v2952 = vadd.f32 %v2889, -0.0013887316
        %v2953 = vadd.f32 %v2890, -0.0013887316
        %v2954 = vadd.f32 %v2891, -0.0013887316
        %v2955 = vadd.f32 %v2892, -0.0013887316
        %v2956 = vadd.f32 %v2893, -0.0013887316
        %v2957 = vadd.f32 %v2894, -0.0013887316
        %v2958 = vadd.f32 %v2895, -0.0013887316
        %v2959 = vadd.f32 %v2896, -0.0013887316
        %v2960 = vadd.f32 %v2897, -0.0013887316
        %v2961 = vadd.f32 %v2898, -0.0013887316
        %v2962 = vadd.f32 %v2899, -0.0013887316
        %v2963 = vadd.f32 %v2900, -0.0013887316
        %v2964 = vadd.f32 %v2901, -0.0013887316
        %v2965 = vadd.f32 %v2902, -0.0013887316
        %v2966 = vadd.f32 %v2903, -0.0013887316
        %v2967 = vadd.f32 %v2904, -0.0013887316
        %v2968 = vadd.f32 %v2905, -0.0013887316
        %v2969 = vadd.f32 %v2906, -0.0013887316
        %v2970 = vadd.f32 %v2907, -0.0013887316
        %v2971 = vadd.f32 %v2908, -0.0013887316
        %v2972 = vmul.f32 %v2342, %v2909
        %v2973 = vmul.f32 %v2343, %v2910
        %v2974 = vmul.f32 %v2344, %v2911
        %v2975 = vmul.f32 %v2345, %v2912
        %v2976 = vmul.f32 %v2346, %v2913
        %v2977 = vmul.f32 %v2347, %v2914
        %v2978 = vmul.f32 %v2348, %v2915
        %v2979 = vmul.f32 %v2349, %v2916
        %v2980 = vmul.f32 %v2350, %v2917
        %v2981 = vmul.f32 %v2351, %v2918
        %v2982 = vmul.f32 %v2352, %v2919
        %v2983 = vmul.f32 %v2353, %v2920
        %v2984 = vmul.f32 %v2354, %v2921
        %v2985 = vmul.f32 %v2355, %v2922
        %v2986 = vmul.f32 %v2356, %v2923
        %v2987 = vmul.f32 %v2357, %v2924
        %v2988 = vmul.f32 %v2358, %v2925
        %v2989 = vmul.f32 %v2359, %v2926
        %v2990 = vmul.f32 %v2360, %v2927
        %v2991 = vmul.f32 %v2361, %v2928
        %v2992 = vmul.f32 %v2362, %v2929
        %v2993 = vmul.f32 %v2363, %v2930
        %v2994 = vmul.f32 %v2364, %v2931
        %v2995 = vmul.f32 %v2365, %v2932
        %v2996 = vmul.f32 %v2366, %v2933
        %v2997 = vmul.f32 %v2367, %v2934
        %v2998 = vmul.f32 %v2368, %v2935
        %v2999 = vmul.f32 %v2369, %v2936
        %v3000 = vmul.f32 %v2370, %v2937
        %v3001 = vmul.f32 %v2371, %v2938
        %v3002 = vmul.f32 %v2372, %v2939
        %v3003 = vmul.f32 %v2373, %v2940
        %v3004 = vmul.f32 %v2374, %v2941
        %v3005 = vmul.f32 %v2375, %v2942
        %v3006 = vmul.f32 %v2376, %v2943
        %v3007 = vmul.f32 %v2377, %v2944
        %v3008 = vmul.f32 %v2378, %v2945
        %v3009 = vmul.f32 %v2379, %v2946
        %v3010 = vmul.f32 %v2380, %v2947
        %v3011 = vmul.f32 %v2381, %v2948
        %v3012 = vmul.f32 %v2382, %v2949
        %v3013 = vmul.f32 %v2383, %v2950
        %v3014 = vmul.f32 %v2384, %v2951
        %v3015 = vmul.f32 %v2385, %v2952
        %v3016 = vmul.f32 %v2386, %v2953
        %v3017 = vmul.f32 %v2387, %v2954
        %v3018 = vmul.f32 %v2388, %v2955
        %v3019 = vmul.f32 %v2389, %v2956
        %v3020 = vmul.f32 %v2390, %v2957
        %v3021 = vmul.f32 %v2391, %v2958
        %v3022 = vmul.f32 %v2392, %v2959
        %v3023 = vmul.f32 %v2393, %v2960
        %v3024 = vmul.f32 %v2394, %v2961
        %v3025 = vmul.f32 %v2395, %v2962
        %v3026 = vmul.f32 %v2396, %v2963
        %v3027 = vmul.f32 %v2397, %v2964
        %v3028 = vmul.f32 %v2398, %v2965
        %v3029 = vmul.f32 %v2399, %v2966
        %v3030 = vmul.f32 %v2400, %v2967
        %v3031 = vmul.f32 %v2401, %v2968
        %v3032 = vmul.f32 %v2402, %v2969
        %v3033 = vmul.f32 %v2403, %v2970
        %v3034 = vmul.f32 %v2404, %v2971
        %v3035 = vadd.f32 %v2972, 0.041666646
        %v3036 = vadd.f32 %v2973, 0.041666646
        %v3037 = vadd.f32 %v2974, 0.041666646
        %v3038 = vadd.f32 %v2975, 0.041666646
        %v3039 = vadd.f32 %v2976, 0.041666646
        %v3040 = vadd.f32 %v2977, 0.041666646
        %v3041 = vadd.f32 %v2978, 0.041666646
        %v3042 = vadd.f32 %v2979, 0.041666646
        %v3043 = vadd.f32 %v2980, 0.041666646
        %v3044 = vadd.f32 %v2981, 0.041666646
        %v3045 = vadd.f32 %v2982, 0.041666646
        %v3046 = vadd.f32 %v2983, 0.041666646
        %v3047 = vadd.f32 %v2984, 0.041666646
        %v3048 = vadd.f32 %v2985, 0.041666646
        %v3049 = vadd.f32 %v2986, 0.041666646
        %v3050 = vadd.f32 %v2987, 0.041666646
        %v3051 = vadd.f32 %v2988, 0.041666646
        %v3052 = vadd.f32 %v2989, 0.041666646
        %v3053 = vadd.f32 %v2990, 0.041666646
        %v3054 = vadd.f32 %v2991, 0.041666646
        %v3055 = vadd.f32 %v2992, 0.041666646
        %v3056 = vadd.f32 %v2993, 0.041666646
        %v3057 = vadd.f32 %v2994, 0.041666646
        %v3058 = vadd.f32 %v2995, 0.041666646
        %v3059 = vadd.f32 %v2996, 0.041666646
        %v3060 = vadd.f32 %v2997, 0.041666646
        %v3061 = vadd.f32 %v2998, 0.041666646
        %v3062 = vadd.f32 %v2999, 0.041666646
        %v3063 = vadd.f32 %v3000, 0.041666646
        %v3064 = vadd.f32 %v3001, 0.041666646
        %v3065 = vadd.f32 %v3002, 0.041666646
        %v3066 = vadd.f32 %v3003, 0.041666646
        %v3067 = vadd.f32 %v3004, 0.041666646
        %v3068 = vadd.f32 %v3005, 0.041666646
        %v3069 = vadd.f32 %v3006, 0.041666646
        %v3070 = vadd.f32 %v3007, 0.041666646
        %v3071 = vadd.f32 %v3008, 0.041666646
        %v3072 = vadd.f32 %v3009, 0.041666646
        %v3073 = vadd.f32 %v3010, 0.041666646
        %v3074 = vadd.f32 %v3011, 0.041666646
        %v3075 = vadd.f32 %v3012, 0.041666646
        %v3076 = vadd.f32 %v3013, 0.041666646
        %v3077 = vadd.f32 %v3014, 0.041666646
        %v3078 = vadd.f32 %v3015, 0.041666646
        %v3079 = vadd.f32 %v3016, 0.041666646
        %v3080 = vadd.f32 %v3017, 0.041666646
        %v3081 = vadd.f32 %v3018, 0.041666646
        %v3082 = vadd.f32 %v3019, 0.041666646
        %v3083 = vadd.f32 %v3020, 0.041666646
        %v3084 = vadd.f32 %v3021, 0.041666646
        %v3085 = vadd.f32 %v3022, 0.041666646
        %v3086 = vadd.f32 %v3023, 0.041666646
        %v3087 = vadd.f32 %v3024, 0.041666646
        %v3088 = vadd.f32 %v3025, 0.041666646
        %v3089 = vadd.f32 %v3026, 0.041666646
        %v3090 = vadd.f32 %v3027, 0.041666646
        %v3091 = vadd.f32 %v3028, 0.041666646
        %v3092 = vadd.f32 %v3029, 0.041666646
        %v3093 = vadd.f32 %v3030, 0.041666646
        %v3094 = vadd.f32 %v3031, 0.041666646
        %v3095 = vadd.f32 %v3032, 0.041666646
        %v3096 = vadd.f32 %v3033, 0.041666646
        %v3097 = vadd.f32 %v3034, 0.041666646
        %v3098 = vmul.f32 %v2342, %v3035
        %v3099 = vmul.f32 %v2343, %v3036
        %v3100 = vmul.f32 %v2344, %v3037
        %v3101 = vmul.f32 %v2345, %v3038
        %v3102 = vmul.f32 %v2346, %v3039
        %v3103 = vmul.f32 %v2347, %v3040
        %v3104 = vmul.f32 %v2348, %v3041
        %v3105 = vmul.f32 %v2349, %v3042
        %v3106 = vmul.f32 %v2350, %v3043
        %v3107 = vmul.f32 %v2351, %v3044
        %v3108 = vmul.f32 %v2352, %v3045
        %v3109 = vmul.f32 %v2353, %v3046
        %v3110 = vmul.f32 %v2354, %v3047
        %v3111 = vmul.f32 %v2355, %v3048
        %v3112 = vmul.f32 %v2356, %v3049
        %v3113 = vmul.f32 %v2357, %v3050
        %v3114 = vmul.f32 %v2358, %v3051
        %v3115 = vmul.f32 %v2359, %v3052
        %v3116 = vmul.f32 %v2360, %v3053
        %v3117 = vmul.f32 %v2361, %v3054
        %v3118 = vmul.f32 %v2362, %v3055
        %v3119 = vmul.f32 %v2363, %v3056
        %v3120 = vmul.f32 %v2364, %v3057
        %v3121 = vmul.f32 %v2365, %v3058
        %v3122 = vmul.f32 %v2366, %v3059
        %v3123 = vmul.f32 %v2367, %v3060
        %v3124 = vmul.f32 %v2368, %v3061
        %v3125 = vmul.f32 %v2369, %v3062
        %v3126 = vmul.f32 %v2370, %v3063
        %v3127 = vmul.f32 %v2371, %v3064
        %v3128 = vmul.f32 %v2372, %v3065
        %v3129 = vmul.f32 %v2373, %v3066
        %v3130 = vmul.f32 %v2374, %v3067
        %v3131 = vmul.f32 %v2375, %v3068
        %v3132 = vmul.f32 %v2376, %v3069
        %v3133 = vmul.f32 %v2377, %v3070
        %v3134 = vmul.f32 %v2378, %v3071
        %v3135 = vmul.f32 %v2379, %v3072
        %v3136 = vmul.f32 %v2380, %v3073
        %v3137 = vmul.f32 %v2381, %v3074
        %v3138 = vmul.f32 %v2382, %v3075
        %v3139 = vmul.f32 %v2383, %v3076
        %v3140 = vmul.f32 %v2384, %v3077
        %v3141 = vmul.f32 %v2385, %v3078
        %v3142 = vmul.f32 %v2386, %v3079
        %v3143 = vmul.f32 %v2387, %v3080
        %v3144 = vmul.f32 %v2388, %v3081
        %v3145 = vmul.f32 %v2389, %v3082
        %v3146 = vmul.f32 %v2390, %v3083
        %v3147 = vmul.f32 %v2391, %v3084
        %v3148 = vmul.f32 %v2392, %v3085
        %v3149 = vmul.f32 %v2393, %v3086
        %v3150 = vmul.f32 %v2394, %v3087
        %v3151 = vmul.f32 %v2395, %v3088
        %v3152 = vmul.f32 %v2396, %v3089
        %v3153 = vmul.f32 %v2397, %v3090
        %v3154 = vmul.f32 %v2398, %v3091
        %v3155 = vmul.f32 %v2399, %v3092
        %v3156 = vmul.f32 %v2400, %v3093
        %v3157 = vmul.f32 %v2401, %v3094
        %v3158 = vmul.f32 %v2402, %v3095
        %v3159 = vmul.f32 %v2403, %v3096
        %v3160 = vmul.f32 %v2404, %v3097
        %v3161 = vadd.f32 %v3098, -0.5
        %v3162 = vadd.f32 %v3099, -0.5
        %v3163 = vadd.f32 %v3100, -0.5
        %v3164 = vadd.f32 %v3101, -0.5
        %v3165 = vadd.f32 %v3102, -0.5
        %v3166 = vadd.f32 %v3103, -0.5
        %v3167 = vadd.f32 %v3104, -0.5
        %v3168 = vadd.f32 %v3105, -0.5
        %v3169 = vadd.f32 %v3106, -0.5
        %v3170 = vadd.f32 %v3107, -0.5
        %v3171 = vadd.f32 %v3108, -0.5
        %v3172 = vadd.f32 %v3109, -0.5
        %v3173 = vadd.f32 %v3110, -0.5
        %v3174 = vadd.f32 %v3111, -0.5
        %v3175 = vadd.f32 %v3112, -0.5
        %v3176 = vadd.f32 %v3113, -0.5
        %v3177 = vadd.f32 %v3114, -0.5
        %v3178 = vadd.f32 %v3115, -0.5
        %v3179 = vadd.f32 %v3116, -0.5
        %v3180 = vadd.f32 %v3117, -0.5
        %v3181 = vadd.f32 %v3118, -0.5
        %v3182 = vadd.f32 %v3119, -0.5
        %v3183 = vadd.f32 %v3120, -0.5
        %v3184 = vadd.f32 %v3121, -0.5
        %v3185 = vadd.f32 %v3122, -0.5
        %v3186 = vadd.f32 %v3123, -0.5
        %v3187 = vadd.f32 %v3124, -0.5
        %v3188 = vadd.f32 %v3125, -0.5
        %v3189 = vadd.f32 %v3126, -0.5
        %v3190 = vadd.f32 %v3127, -0.5
        %v3191 = vadd.f32 %v3128, -0.5
        %v3192 = vadd.f32 %v3129, -0.5
        %v3193 = vadd.f32 %v3130, -0.5
        %v3194 = vadd.f32 %v3131, -0.5
        %v3195 = vadd.f32 %v3132, -0.5
        %v3196 = vadd.f32 %v3133, -0.5
        %v3197 = vadd.f32 %v3134, -0.5
        %v3198 = vadd.f32 %v3135, -0.5
        %v3199 = vadd.f32 %v3136, -0.5
        %v3200 = vadd.f32 %v3137, -0.5
        %v3201 = vadd.f32 %v3138, -0.5
        %v3202 = vadd.f32 %v3139, -0.5
        %v3203 = vadd.f32 %v3140, -0.5
        %v3204 = vadd.f32 %v3141, -0.5
        %v3205 = vadd.f32 %v3142, -0.5
        %v3206 = vadd.f32 %v3143, -0.5
        %v3207 = vadd.f32 %v3144, -0.5
        %v3208 = vadd.f32 %v3145, -0.5
        %v3209 = vadd.f32 %v3146, -0.5
        %v3210 = vadd.f32 %v3147, -0.5
        %v3211 = vadd.f32 %v3148, -0.5
        %v3212 = vadd.f32 %v3149, -0.5
        %v3213 = vadd.f32 %v3150, -0.5
        %v3214 = vadd.f32 %v3151, -0.5
        %v3215 = vadd.f32 %v3152, -0.5
        %v3216 = vadd.f32 %v3153, -0.5
        %v3217 = vadd.f32 %v3154, -0.5
        %v3218 = vadd.f32 %v3155, -0.5
        %v3219 = vadd.f32 %v3156, -0.5
        %v3220 = vadd.f32 %v3157, -0.5
        %v3221 = vadd.f32 %v3158, -0.5
        %v3222 = vadd.f32 %v3159, -0.5
        %v3223 = vadd.f32 %v3160, -0.5
        %v3224 = vmul.f32 %v2342, %v3161
        %v3225 = vmul.f32 %v2343, %v3162
        %v3226 = vmul.f32 %v2344, %v3163
        %v3227 = vmul.f32 %v2345, %v3164
        %v3228 = vmul.f32 %v2346, %v3165
        %v3229 = vmul.f32 %v2347, %v3166
        %v3230 = vmul.f32 %v2348, %v3167
        %v3231 = vmul.f32 %v2349, %v3168
        %v3232 = vmul.f32 %v2350, %v3169
        %v3233 = vmul.f32 %v2351, %v3170
        %v3234 = vmul.f32 %v2352, %v3171
        %v3235 = vmul.f32 %v2353, %v3172
        %v3236 = vmul.f32 %v2354, %v3173
        %v3237 = vmul.f32 %v2355, %v3174
        %v3238 = vmul.f32 %v2356, %v3175
        %v3239 = vmul.f32 %v2357, %v3176
        %v3240 = vmul.f32 %v2358, %v3177
        %v3241 = vmul.f32 %v2359, %v3178
        %v3242 = vmul.f32 %v2360, %v3179
        %v3243 = vmul.f32 %v2361, %v3180
        %v3244 = vmul.f32 %v2362, %v3181
        %v3245 = vmul.f32 %v2363, %v3182
        %v3246 = vmul.f32 %v2364, %v3183
        %v3247 = vmul.f32 %v2365, %v3184
        %v3248 = vmul.f32 %v2366, %v3185
        %v3249 = vmul.f32 %v2367, %v3186
        %v3250 = vmul.f32 %v2368, %v3187
        %v3251 = vmul.f32 %v2369, %v3188
        %v3252 = vmul.f32 %v2370, %v3189
        %v3253 = vmul.f32 %v2371, %v3190
        %v3254 = vmul.f32 %v2372, %v3191
        %v3255 = vmul.f32 %v2373, %v3192
        %v3256 = vmul.f32 %v2374, %v3193
        %v3257 = vmul.f32 %v2375, %v3194
        %v3258 = vmul.f32 %v2376, %v3195
        %v3259 = vmul.f32 %v2377, %v3196
        %v3260 = vmul.f32 %v2378, %v3197
        %v3261 = vmul.f32 %v2379, %v3198
        %v3262 = vmul.f32 %v2380, %v3199
        %v3263 = vmul.f32 %v2381, %v3200
        %v3264 = vmul.f32 %v2382, %v3201
        %v3265 = vmul.f32 %v2383, %v3202
        %v3266 = vmul.f32 %v2384, %v3203
        %v3267 = vmul.f32 %v2385, %v3204
        %v3268 = vmul.f32 %v2386, %v3205
        %v3269 = vmul.f32 %v2387, %v3206
        %v3270 = vmul.f32 %v2388, %v3207
        %v3271 = vmul.f32 %v2389, %v3208
        %v3272 = vmul.f32 %v2390, %v3209
        %v3273 = vmul.f32 %v2391, %v3210
        %v3274 = vmul.f32 %v2392, %v3211
        %v3275 = vmul.f32 %v2393, %v3212
        %v3276 = vmul.f32 %v2394, %v3213
        %v3277 = vmul.f32 %v2395, %v3214
        %v3278 = vmul.f32 %v2396, %v3215
        %v3279 = vmul.f32 %v2397, %v3216
        %v3280 = vmul.f32 %v2398, %v3217
        %v3281 = vmul.f32 %v2399, %v3218
        %v3282 = vmul.f32 %v2400, %v3219
        %v3283 = vmul.f32 %v2401, %v3220
        %v3284 = vmul.f32 %v2402, %v3221
        %v3285 = vmul.f32 %v2403, %v3222
        %v3286 = vmul.f32 %v2404, %v3223
        %v3287 = vadd.f32 %v3224, 1.0
        %v3288 = vadd.f32 %v3225, 1.0
        %v3289 = vadd.f32 %v3226, 1.0
        %v3290 = vadd.f32 %v3227, 1.0
        %v3291 = vadd.f32 %v3228, 1.0
        %v3292 = vadd.f32 %v3229, 1.0
        %v3293 = vadd.f32 %v3230, 1.0
        %v3294 = vadd.f32 %v3231, 1.0
        %v3295 = vadd.f32 %v3232, 1.0
        %v3296 = vadd.f32 %v3233, 1.0
        %v3297 = vadd.f32 %v3234, 1.0
        %v3298 = vadd.f32 %v3235, 1.0
        %v3299 = vadd.f32 %v3236, 1.0
        %v3300 = vadd.f32 %v3237, 1.0
        %v3301 = vadd.f32 %v3238, 1.0
        %v3302 = vadd.f32 %v3239, 1.0
        %v3303 = vadd.f32 %v3240, 1.0
        %v3304 = vadd.f32 %v3241, 1.0
        %v3305 = vadd.f32 %v3242, 1.0
        %v3306 = vadd.f32 %v3243, 1.0
        %v3307 = vadd.f32 %v3244, 1.0
        %v3308 = vadd.f32 %v3245, 1.0
        %v3309 = vadd.f32 %v3246, 1.0
        %v3310 = vadd.f32 %v3247, 1.0
        %v3311 = vadd.f32 %v3248, 1.0
        %v3312 = vadd.f32 %v3249, 1.0
        %v3313 = vadd.f32 %v3250, 1.0
        %v3314 = vadd.f32 %v3251, 1.0
        %v3315 = vadd.f32 %v3252, 1.0
        %v3316 = vadd.f32 %v3253, 1.0
        %v3317 = vadd.f32 %v3254, 1.0
        %v3318 = vadd.f32 %v3255, 1.0
        %v3319 = vadd.f32 %v3256, 1.0
        %v3320 = vadd.f32 %v3257, 1.0
        %v3321 = vadd.f32 %v3258, 1.0
        %v3322 = vadd.f32 %v3259, 1.0
        %v3323 = vadd.f32 %v3260, 1.0
        %v3324 = vadd.f32 %v3261, 1.0
        %v3325 = vadd.f32 %v3262, 1.0
        %v3326 = vadd.f32 %v3263, 1.0
        %v3327 = vadd.f32 %v3264, 1.0
        %v3328 = vadd.f32 %v3265, 1.0
        %v3329 = vadd.f32 %v3266, 1.0
        %v3330 = vadd.f32 %v3267, 1.0
        %v3331 = vadd.f32 %v3268, 1.0
        %v3332 = vadd.f32 %v3269, 1.0
        %v3333 = vadd.f32 %v3270, 1.0
        %v3334 = vadd.f32 %v3271, 1.0
        %v3335 = vadd.f32 %v3272, 1.0
        %v3336 = vadd.f32 %v3273, 1.0
        %v3337 = vadd.f32 %v3274, 1.0
        %v3338 = vadd.f32 %v3275, 1.0
        %v3339 = vadd.f32 %v3276, 1.0
        %v3340 = vadd.f32 %v3277, 1.0
        %v3341 = vadd.f32 %v3278, 1.0
        %v3342 = vadd.f32 %v3279, 1.0
        %v3343 = vadd.f32 %v3280, 1.0
        %v3344 = vadd.f32 %v3281, 1.0
        %v3345 = vadd.f32 %v3282, 1.0
        %v3346 = vadd.f32 %v3283, 1.0
        %v3347 = vadd.f32 %v3284, 1.0
        %v3348 = vadd.f32 %v3285, 1.0
        %v3349 = vadd.f32 %v3286, 1.0
        %v3350 = vcvt.f32.s32.to.zero.pseudo %v1901
        %v3351 = vcvt.f32.s32.to.zero.pseudo %v1902
        %v3352 = vcvt.f32.s32.to.zero.pseudo %v1903
        %v3353 = vcvt.f32.s32.to.zero.pseudo %v1904
        %v3354 = vcvt.f32.s32.to.zero.pseudo %v1905
        %v3355 = vcvt.f32.s32.to.zero.pseudo %v1906
        %v3356 = vcvt.f32.s32.to.zero.pseudo %v1907
        %v3357 = vcvt.f32.s32.to.zero.pseudo %v1908
        %v3358 = vcvt.f32.s32.to.zero.pseudo %v1909
        %v3359 = vcvt.f32.s32.to.zero.pseudo %v1910
        %v3360 = vcvt.f32.s32.to.zero.pseudo %v1911
        %v3361 = vcvt.f32.s32.to.zero.pseudo %v1912
        %v3362 = vcvt.f32.s32.to.zero.pseudo %v1913
        %v3363 = vcvt.f32.s32.to.zero.pseudo %v1914
        %v3364 = vcvt.f32.s32.to.zero.pseudo %v1915
        %v3365 = vcvt.f32.s32.to.zero.pseudo %v1916
        %v3366 = vcvt.f32.s32.to.zero.pseudo %v1917
        %v3367 = vcvt.f32.s32.to.zero.pseudo %v1918
        %v3368 = vcvt.f32.s32.to.zero.pseudo %v1919
        %v3369 = vcvt.f32.s32.to.zero.pseudo %v1920
        %v3370 = vcvt.f32.s32.to.zero.pseudo %v1921
        %v3371 = vcvt.f32.s32.to.zero.pseudo %v1922
        %v3372 = vcvt.f32.s32.to.zero.pseudo %v1923
        %v3373 = vcvt.f32.s32.to.zero.pseudo %v1924
        %v3374 = vcvt.f32.s32.to.zero.pseudo %v1925
        %v3375 = vcvt.f32.s32.to.zero.pseudo %v1926
        %v3376 = vcvt.f32.s32.to.zero.pseudo %v1927
        %v3377 = vcvt.f32.s32.to.zero.pseudo %v1928
        %v3378 = vcvt.f32.s32.to.zero.pseudo %v1929
        %v3379 = vcvt.f32.s32.to.zero.pseudo %v1930
        %v3380 = vcvt.f32.s32.to.zero.pseudo %v1931
        %v3381 = vcvt.f32.s32.to.zero.pseudo %v1932
        %v3382 = vcvt.f32.s32.to.zero.pseudo %v1933
        %v3383 = vcvt.f32.s32.to.zero.pseudo %v1934
        %v3384 = vcvt.f32.s32.to.zero.pseudo %v1935
        %v3385 = vcvt.f32.s32.to.zero.pseudo %v1936
        %v3386 = vcvt.f32.s32.to.zero.pseudo %v1937
        %v3387 = vcvt.f32.s32.to.zero.pseudo %v1938
        %v3388 = vcvt.f32.s32.to.zero.pseudo %v1939
        %v3389 = vcvt.f32.s32.to.zero.pseudo %v1940
        %v3390 = vcvt.f32.s32.to.zero.pseudo %v1941
        %v3391 = vcvt.f32.s32.to.zero.pseudo %v1942
        %v3392 = vcvt.f32.s32.to.zero.pseudo %v1943
        %v3393 = vcvt.f32.s32.to.zero.pseudo %v1944
        %v3394 = vcvt.f32.s32.to.zero.pseudo %v1945
        %v3395 = vcvt.f32.s32.to.zero.pseudo %v1946
        %v3396 = vcvt.f32.s32.to.zero.pseudo %v1947
        %v3397 = vcvt.f32.s32.to.zero.pseudo %v1948
        %v3398 = vcvt.f32.s32.to.zero.pseudo %v1949
        %v3399 = vcvt.f32.s32.to.zero.pseudo %v1950
        %v3400 = vcvt.f32.s32.to.zero.pseudo %v1951
        %v3401 = vcvt.f32.s32.to.zero.pseudo %v1952
        %v3402 = vcvt.f32.s32.to.zero.pseudo %v1953
        %v3403 = vcvt.f32.s32.to.zero.pseudo %v1954
        %v3404 = vcvt.f32.s32.to.zero.pseudo %v1955
        %v3405 = vcvt.f32.s32.to.zero.pseudo %v1956
        %v3406 = vcvt.f32.s32.to.zero.pseudo %v1957
        %v3407 = vcvt.f32.s32.to.zero.pseudo %v1958
        %v3408 = vcvt.f32.s32.to.zero.pseudo %v1959
        %v3409 = vcvt.f32.s32.to.zero.pseudo %v1960
        %v3410 = vcvt.f32.s32.to.zero.pseudo %v1961
        %v3411 = vcvt.f32.s32.to.zero.pseudo %v1962
        %v3412 = vcvt.f32.s32.to.zero.pseudo %v1963
        %v3413 = vand.u32 %v3350, 1
        %v3414 = vand.u32 %v3351, 1
        %v3415 = vand.u32 %v3352, 1
        %v3416 = vand.u32 %v3353, 1
        %v3417 = vand.u32 %v3354, 1
        %v3418 = vand.u32 %v3355, 1
        %v3419 = vand.u32 %v3356, 1
        %v3420 = vand.u32 %v3357, 1
        %v3421 = vand.u32 %v3358, 1
        %v3422 = vand.u32 %v3359, 1
        %v3423 = vand.u32 %v3360, 1
        %v3424 = vand.u32 %v3361, 1
        %v3425 = vand.u32 %v3362, 1
        %v3426 = vand.u32 %v3363, 1
        %v3427 = vand.u32 %v3364, 1
        %v3428 = vand.u32 %v3365, 1
        %v3429 = vand.u32 %v3366, 1
        %v3430 = vand.u32 %v3367, 1
        %v3431 = vand.u32 %v3368, 1
        %v3432 = vand.u32 %v3369, 1
        %v3433 = vand.u32 %v3370, 1
        %v3434 = vand.u32 %v3371, 1
        %v3435 = vand.u32 %v3372, 1
        %v3436 = vand.u32 %v3373, 1
        %v3437 = vand.u32 %v3374, 1
        %v3438 = vand.u32 %v3375, 1
        %v3439 = vand.u32 %v3376, 1
        %v3440 = vand.u32 %v3377, 1
        %v3441 = vand.u32 %v3378, 1
        %v3442 = vand.u32 %v3379, 1
        %v3443 = vand.u32 %v3380, 1
        %v3444 = vand.u32 %v3381, 1
        %v3445 = vand.u32 %v3382, 1
        %v3446 = vand.u32 %v3383, 1
        %v3447 = vand.u32 %v3384, 1
        %v3448 = vand.u32 %v3385, 1
        %v3449 = vand.u32 %v3386, 1
        %v3450 = vand.u32 %v3387, 1
        %v3451 = vand.u32 %v3388, 1
        %v3452 = vand.u32 %v3389, 1
        %v3453 = vand.u32 %v3390, 1
        %v3454 = vand.u32 %v3391, 1
        %v3455 = vand.u32 %v3392, 1
        %v3456 = vand.u32 %v3393, 1
        %v3457 = vand.u32 %v3394, 1
        %v3458 = vand.u32 %v3395, 1
        %v3459 = vand.u32 %v3396, 1
        %v3460 = vand.u32 %v3397, 1
        %v3461 = vand.u32 %v3398, 1
        %v3462 = vand.u32 %v3399, 1
        %v3463 = vand.u32 %v3400, 1
        %v3464 = vand.u32 %v3401, 1
        %v3465 = vand.u32 %v3402, 1
        %v3466 = vand.u32 %v3403, 1
        %v3467 = vand.u32 %v3404, 1
        %v3468 = vand.u32 %v3405, 1
        %v3469 = vand.u32 %v3406, 1
        %v3470 = vand.u32 %v3407, 1
        %v3471 = vand.u32 %v3408, 1
        %v3472 = vand.u32 %v3409, 1
        %v3473 = vand.u32 %v3410, 1
        %v3474 = vand.u32 %v3411, 1
        %v3475 = vand.u32 %v3412, 1
        %vm3476 = vcmp.ne.s32.totalorder %v3413, 0
        %vm3477 = vcmp.ne.s32.totalorder %v3414, 0
        %vm3478 = vcmp.ne.s32.totalorder %v3415, 0
        %vm3479 = vcmp.ne.s32.totalorder %v3416, 0
        %vm3480 = vcmp.ne.s32.totalorder %v3417, 0
        %vm3481 = vcmp.ne.s32.totalorder %v3418, 0
        %vm3482 = vcmp.ne.s32.totalorder %v3419, 0
        %vm3483 = vcmp.ne.s32.totalorder %v3420, 0
        %vm3484 = vcmp.ne.s32.totalorder %v3421, 0
        %vm3485 = vcmp.ne.s32.totalorder %v3422, 0
        %vm3486 = vcmp.ne.s32.totalorder %v3423, 0
        %vm3487 = vcmp.ne.s32.totalorder %v3424, 0
        %vm3488 = vcmp.ne.s32.totalorder %v3425, 0
        %vm3489 = vcmp.ne.s32.totalorder %v3426, 0
        %vm3490 = vcmp.ne.s32.totalorder %v3427, 0
        %vm3491 = vcmp.ne.s32.totalorder %v3428, 0
        %vm3492 = vcmp.ne.s32.totalorder %v3429, 0
        %vm3493 = vcmp.ne.s32.totalorder %v3430, 0
        %vm3494 = vcmp.ne.s32.totalorder %v3431, 0
        %vm3495 = vcmp.ne.s32.totalorder %v3432, 0
        %vm3496 = vcmp.ne.s32.totalorder %v3433, 0
        %vm3497 = vcmp.ne.s32.totalorder %v3434, 0
        %vm3498 = vcmp.ne.s32.totalorder %v3435, 0
        %vm3499 = vcmp.ne.s32.totalorder %v3436, 0
        %vm3500 = vcmp.ne.s32.totalorder %v3437, 0
        %vm3501 = vcmp.ne.s32.totalorder %v3438, 0
        %vm3502 = vcmp.ne.s32.totalorder %v3439, 0
        %vm3503 = vcmp.ne.s32.totalorder %v3440, 0
        %vm3504 = vcmp.ne.s32.totalorder %v3441, 0
        %vm3505 = vcmp.ne.s32.totalorder %v3442, 0
        %vm3506 = vcmp.ne.s32.totalorder %v3443, 0
        %vm3507 = vcmp.ne.s32.totalorder %v3444, 0
        %vm3508 = vcmp.ne.s32.totalorder %v3445, 0
        %vm3509 = vcmp.ne.s32.totalorder %v3446, 0
        %vm3510 = vcmp.ne.s32.totalorder %v3447, 0
        %vm3511 = vcmp.ne.s32.totalorder %v3448, 0
        %vm3512 = vcmp.ne.s32.totalorder %v3449, 0
        %vm3513 = vcmp.ne.s32.totalorder %v3450, 0
        %vm3514 = vcmp.ne.s32.totalorder %v3451, 0
        %vm3515 = vcmp.ne.s32.totalorder %v3452, 0
        %vm3516 = vcmp.ne.s32.totalorder %v3453, 0
        %vm3517 = vcmp.ne.s32.totalorder %v3454, 0
        %vm3518 = vcmp.ne.s32.totalorder %v3455, 0
        %vm3519 = vcmp.ne.s32.totalorder %v3456, 0
        %vm3520 = vcmp.ne.s32.totalorder %v3457, 0
        %vm3521 = vcmp.ne.s32.totalorder %v3458, 0
        %vm3522 = vcmp.ne.s32.totalorder %v3459, 0
        %vm3523 = vcmp.ne.s32.totalorder %v3460, 0
        %vm3524 = vcmp.ne.s32.totalorder %v3461, 0
        %vm3525 = vcmp.ne.s32.totalorder %v3462, 0
        %vm3526 = vcmp.ne.s32.totalorder %v3463, 0
        %vm3527 = vcmp.ne.s32.totalorder %v3464, 0
        %vm3528 = vcmp.ne.s32.totalorder %v3465, 0
        %vm3529 = vcmp.ne.s32.totalorder %v3466, 0
        %vm3530 = vcmp.ne.s32.totalorder %v3467, 0
        %vm3531 = vcmp.ne.s32.totalorder %v3468, 0
        %vm3532 = vcmp.ne.s32.totalorder %v3469, 0
        %vm3533 = vcmp.ne.s32.totalorder %v3470, 0
        %vm3534 = vcmp.ne.s32.totalorder %v3471, 0
        %vm3535 = vcmp.ne.s32.totalorder %v3472, 0
        %vm3536 = vcmp.ne.s32.totalorder %v3473, 0
        %vm3537 = vcmp.ne.s32.totalorder %v3474, 0
        %vm3538 = vcmp.ne.s32.totalorder %v3475, 0
        %v3539 = vand.u32 %v3350, 2
        %v3540 = vand.u32 %v3351, 2
        %v3541 = vand.u32 %v3352, 2
        %v3542 = vand.u32 %v3353, 2
        %v3543 = vand.u32 %v3354, 2
        %v3544 = vand.u32 %v3355, 2
        %v3545 = vand.u32 %v3356, 2
        %v3546 = vand.u32 %v3357, 2
        %v3547 = vand.u32 %v3358, 2
        %v3548 = vand.u32 %v3359, 2
        %v3549 = vand.u32 %v3360, 2
        %v3550 = vand.u32 %v3361, 2
        %v3551 = vand.u32 %v3362, 2
        %v3552 = vand.u32 %v3363, 2
        %v3553 = vand.u32 %v3364, 2
        %v3554 = vand.u32 %v3365, 2
        %v3555 = vand.u32 %v3366, 2
        %v3556 = vand.u32 %v3367, 2
        %v3557 = vand.u32 %v3368, 2
        %v3558 = vand.u32 %v3369, 2
        %v3559 = vand.u32 %v3370, 2
        %v3560 = vand.u32 %v3371, 2
        %v3561 = vand.u32 %v3372, 2
        %v3562 = vand.u32 %v3373, 2
        %v3563 = vand.u32 %v3374, 2
        %v3564 = vand.u32 %v3375, 2
        %v3565 = vand.u32 %v3376, 2
        %v3566 = vand.u32 %v3377, 2
        %v3567 = vand.u32 %v3378, 2
        %v3568 = vand.u32 %v3379, 2
        %v3569 = vand.u32 %v3380, 2
        %v3570 = vand.u32 %v3381, 2
        %v3571 = vand.u32 %v3382, 2
        %v3572 = vand.u32 %v3383, 2
        %v3573 = vand.u32 %v3384, 2
        %v3574 = vand.u32 %v3385, 2
        %v3575 = vand.u32 %v3386, 2
        %v3576 = vand.u32 %v3387, 2
        %v3577 = vand.u32 %v3388, 2
        %v3578 = vand.u32 %v3389, 2
        %v3579 = vand.u32 %v3390, 2
        %v3580 = vand.u32 %v3391, 2
        %v3581 = vand.u32 %v3392, 2
        %v3582 = vand.u32 %v3393, 2
        %v3583 = vand.u32 %v3394, 2
        %v3584 = vand.u32 %v3395, 2
        %v3585 = vand.u32 %v3396, 2
        %v3586 = vand.u32 %v3397, 2
        %v3587 = vand.u32 %v3398, 2
        %v3588 = vand.u32 %v3399, 2
        %v3589 = vand.u32 %v3400, 2
        %v3590 = vand.u32 %v3401, 2
        %v3591 = vand.u32 %v3402, 2
        %v3592 = vand.u32 %v3403, 2
        %v3593 = vand.u32 %v3404, 2
        %v3594 = vand.u32 %v3405, 2
        %v3595 = vand.u32 %v3406, 2
        %v3596 = vand.u32 %v3407, 2
        %v3597 = vand.u32 %v3408, 2
        %v3598 = vand.u32 %v3409, 2
        %v3599 = vand.u32 %v3410, 2
        %v3600 = vand.u32 %v3411, 2
        %v3601 = vand.u32 %v3412, 2
        %vm3602 = vcmp.ne.s32.totalorder %v3539, 0
        %vm3603 = vcmp.ne.s32.totalorder %v3540, 0
        %vm3604 = vcmp.ne.s32.totalorder %v3541, 0
        %vm3605 = vcmp.ne.s32.totalorder %v3542, 0
        %vm3606 = vcmp.ne.s32.totalorder %v3543, 0
        %vm3607 = vcmp.ne.s32.totalorder %v3544, 0
        %vm3608 = vcmp.ne.s32.totalorder %v3545, 0
        %vm3609 = vcmp.ne.s32.totalorder %v3546, 0
        %vm3610 = vcmp.ne.s32.totalorder %v3547, 0
        %vm3611 = vcmp.ne.s32.totalorder %v3548, 0
        %vm3612 = vcmp.ne.s32.totalorder %v3549, 0
        %vm3613 = vcmp.ne.s32.totalorder %v3550, 0
        %vm3614 = vcmp.ne.s32.totalorder %v3551, 0
        %vm3615 = vcmp.ne.s32.totalorder %v3552, 0
        %vm3616 = vcmp.ne.s32.totalorder %v3553, 0
        %vm3617 = vcmp.ne.s32.totalorder %v3554, 0
        %vm3618 = vcmp.ne.s32.totalorder %v3555, 0
        %vm3619 = vcmp.ne.s32.totalorder %v3556, 0
        %vm3620 = vcmp.ne.s32.totalorder %v3557, 0
        %vm3621 = vcmp.ne.s32.totalorder %v3558, 0
        %vm3622 = vcmp.ne.s32.totalorder %v3559, 0
        %vm3623 = vcmp.ne.s32.totalorder %v3560, 0
        %vm3624 = vcmp.ne.s32.totalorder %v3561, 0
        %vm3625 = vcmp.ne.s32.totalorder %v3562, 0
        %vm3626 = vcmp.ne.s32.totalorder %v3563, 0
        %vm3627 = vcmp.ne.s32.totalorder %v3564, 0
        %vm3628 = vcmp.ne.s32.totalorder %v3565, 0
        %vm3629 = vcmp.ne.s32.totalorder %v3566, 0
        %vm3630 = vcmp.ne.s32.totalorder %v3567, 0
        %vm3631 = vcmp.ne.s32.totalorder %v3568, 0
        %vm3632 = vcmp.ne.s32.totalorder %v3569, 0
        %vm3633 = vcmp.ne.s32.totalorder %v3570, 0
        %vm3634 = vcmp.ne.s32.totalorder %v3571, 0
        %vm3635 = vcmp.ne.s32.totalorder %v3572, 0
        %vm3636 = vcmp.ne.s32.totalorder %v3573, 0
        %vm3637 = vcmp.ne.s32.totalorder %v3574, 0
        %vm3638 = vcmp.ne.s32.totalorder %v3575, 0
        %vm3639 = vcmp.ne.s32.totalorder %v3576, 0
        %vm3640 = vcmp.ne.s32.totalorder %v3577, 0
        %vm3641 = vcmp.ne.s32.totalorder %v3578, 0
        %vm3642 = vcmp.ne.s32.totalorder %v3579, 0
        %vm3643 = vcmp.ne.s32.totalorder %v3580, 0
        %vm3644 = vcmp.ne.s32.totalorder %v3581, 0
        %vm3645 = vcmp.ne.s32.totalorder %v3582, 0
        %vm3646 = vcmp.ne.s32.totalorder %v3583, 0
        %vm3647 = vcmp.ne.s32.totalorder %v3584, 0
        %vm3648 = vcmp.ne.s32.totalorder %v3585, 0
        %vm3649 = vcmp.ne.s32.totalorder %v3586, 0
        %vm3650 = vcmp.ne.s32.totalorder %v3587, 0
        %vm3651 = vcmp.ne.s32.totalorder %v3588, 0
        %vm3652 = vcmp.ne.s32.totalorder %v3589, 0
        %vm3653 = vcmp.ne.s32.totalorder %v3590, 0
        %vm3654 = vcmp.ne.s32.totalorder %v3591, 0
        %vm3655 = vcmp.ne.s32.totalorder %v3592, 0
        %vm3656 = vcmp.ne.s32.totalorder %v3593, 0
        %vm3657 = vcmp.ne.s32.totalorder %v3594, 0
        %vm3658 = vcmp.ne.s32.totalorder %v3595, 0
        %vm3659 = vcmp.ne.s32.totalorder %v3596, 0
        %vm3660 = vcmp.ne.s32.totalorder %v3597, 0
        %vm3661 = vcmp.ne.s32.totalorder %v3598, 0
        %vm3662 = vcmp.ne.s32.totalorder %v3599, 0
        %vm3663 = vcmp.ne.s32.totalorder %v3600, 0
        %vm3664 = vcmp.ne.s32.totalorder %v3601, 0
        %v3665 = vadd.s32 %v3350, 1
        %v3666 = vadd.s32 %v3351, 1
        %v3667 = vadd.s32 %v3352, 1
        %v3668 = vadd.s32 %v3353, 1
        %v3669 = vadd.s32 %v3354, 1
        %v3670 = vadd.s32 %v3355, 1
        %v3671 = vadd.s32 %v3356, 1
        %v3672 = vadd.s32 %v3357, 1
        %v3673 = vadd.s32 %v3358, 1
        %v3674 = vadd.s32 %v3359, 1
        %v3675 = vadd.s32 %v3360, 1
        %v3676 = vadd.s32 %v3361, 1
        %v3677 = vadd.s32 %v3362, 1
        %v3678 = vadd.s32 %v3363, 1
        %v3679 = vadd.s32 %v3364, 1
        %v3680 = vadd.s32 %v3365, 1
        %v3681 = vadd.s32 %v3366, 1
        %v3682 = vadd.s32 %v3367, 1
        %v3683 = vadd.s32 %v3368, 1
        %v3684 = vadd.s32 %v3369, 1
        %v3685 = vadd.s32 %v3370, 1
        %v3686 = vadd.s32 %v3371, 1
        %v3687 = vadd.s32 %v3372, 1
        %v3688 = vadd.s32 %v3373, 1
        %v3689 = vadd.s32 %v3374, 1
        %v3690 = vadd.s32 %v3375, 1
        %v3691 = vadd.s32 %v3376, 1
        %v3692 = vadd.s32 %v3377, 1
        %v3693 = vadd.s32 %v3378, 1
        %v3694 = vadd.s32 %v3379, 1
        %v3695 = vadd.s32 %v3380, 1
        %v3696 = vadd.s32 %v3381, 1
        %v3697 = vadd.s32 %v3382, 1
        %v3698 = vadd.s32 %v3383, 1
        %v3699 = vadd.s32 %v3384, 1
        %v3700 = vadd.s32 %v3385, 1
        %v3701 = vadd.s32 %v3386, 1
        %v3702 = vadd.s32 %v3387, 1
        %v3703 = vadd.s32 %v3388, 1
        %v3704 = vadd.s32 %v3389, 1
        %v3705 = vadd.s32 %v3390, 1
        %v3706 = vadd.s32 %v3391, 1
        %v3707 = vadd.s32 %v3392, 1
        %v3708 = vadd.s32 %v3393, 1
        %v3709 = vadd.s32 %v3394, 1
        %v3710 = vadd.s32 %v3395, 1
        %v3711 = vadd.s32 %v3396, 1
        %v3712 = vadd.s32 %v3397, 1
        %v3713 = vadd.s32 %v3398, 1
        %v3714 = vadd.s32 %v3399, 1
        %v3715 = vadd.s32 %v3400, 1
        %v3716 = vadd.s32 %v3401, 1
        %v3717 = vadd.s32 %v3402, 1
        %v3718 = vadd.s32 %v3403, 1
        %v3719 = vadd.s32 %v3404, 1
        %v3720 = vadd.s32 %v3405, 1
        %v3721 = vadd.s32 %v3406, 1
        %v3722 = vadd.s32 %v3407, 1
        %v3723 = vadd.s32 %v3408, 1
        %v3724 = vadd.s32 %v3409, 1
        %v3725 = vadd.s32 %v3410, 1
        %v3726 = vadd.s32 %v3411, 1
        %v3727 = vadd.s32 %v3412, 1
        %v3728 = vand.u32 %v3665, 2
        %v3729 = vand.u32 %v3666, 2
        %v3730 = vand.u32 %v3667, 2
        %v3731 = vand.u32 %v3668, 2
        %v3732 = vand.u32 %v3669, 2
        %v3733 = vand.u32 %v3670, 2
        %v3734 = vand.u32 %v3671, 2
        %v3735 = vand.u32 %v3672, 2
        %v3736 = vand.u32 %v3673, 2
        %v3737 = vand.u32 %v3674, 2
        %v3738 = vand.u32 %v3675, 2
        %v3739 = vand.u32 %v3676, 2
        %v3740 = vand.u32 %v3677, 2
        %v3741 = vand.u32 %v3678, 2
        %v3742 = vand.u32 %v3679, 2
        %v3743 = vand.u32 %v3680, 2
        %v3744 = vand.u32 %v3681, 2
        %v3745 = vand.u32 %v3682, 2
        %v3746 = vand.u32 %v3683, 2
        %v3747 = vand.u32 %v3684, 2
        %v3748 = vand.u32 %v3685, 2
        %v3749 = vand.u32 %v3686, 2
        %v3750 = vand.u32 %v3687, 2
        %v3751 = vand.u32 %v3688, 2
        %v3752 = vand.u32 %v3689, 2
        %v3753 = vand.u32 %v3690, 2
        %v3754 = vand.u32 %v3691, 2
        %v3755 = vand.u32 %v3692, 2
        %v3756 = vand.u32 %v3693, 2
        %v3757 = vand.u32 %v3694, 2
        %v3758 = vand.u32 %v3695, 2
        %v3759 = vand.u32 %v3696, 2
        %v3760 = vand.u32 %v3697, 2
        %v3761 = vand.u32 %v3698, 2
        %v3762 = vand.u32 %v3699, 2
        %v3763 = vand.u32 %v3700, 2
        %v3764 = vand.u32 %v3701, 2
        %v3765 = vand.u32 %v3702, 2
        %v3766 = vand.u32 %v3703, 2
        %v3767 = vand.u32 %v3704, 2
        %v3768 = vand.u32 %v3705, 2
        %v3769 = vand.u32 %v3706, 2
        %v3770 = vand.u32 %v3707, 2
        %v3771 = vand.u32 %v3708, 2
        %v3772 = vand.u32 %v3709, 2
        %v3773 = vand.u32 %v3710, 2
        %v3774 = vand.u32 %v3711, 2
        %v3775 = vand.u32 %v3712, 2
        %v3776 = vand.u32 %v3713, 2
        %v3777 = vand.u32 %v3714, 2
        %v3778 = vand.u32 %v3715, 2
        %v3779 = vand.u32 %v3716, 2
        %v3780 = vand.u32 %v3717, 2
        %v3781 = vand.u32 %v3718, 2
        %v3782 = vand.u32 %v3719, 2
        %v3783 = vand.u32 %v3720, 2
        %v3784 = vand.u32 %v3721, 2
        %v3785 = vand.u32 %v3722, 2
        %v3786 = vand.u32 %v3723, 2
        %v3787 = vand.u32 %v3724, 2
        %v3788 = vand.u32 %v3725, 2
        %v3789 = vand.u32 %v3726, 2
        %v3790 = vand.u32 %v3727, 2
        %vm3791 = vcmp.ne.s32.totalorder %v3728, 0
        %vm3792 = vcmp.ne.s32.totalorder %v3729, 0
        %vm3793 = vcmp.ne.s32.totalorder %v3730, 0
        %vm3794 = vcmp.ne.s32.totalorder %v3731, 0
        %vm3795 = vcmp.ne.s32.totalorder %v3732, 0
        %vm3796 = vcmp.ne.s32.totalorder %v3733, 0
        %vm3797 = vcmp.ne.s32.totalorder %v3734, 0
        %vm3798 = vcmp.ne.s32.totalorder %v3735, 0
        %vm3799 = vcmp.ne.s32.totalorder %v3736, 0
        %vm3800 = vcmp.ne.s32.totalorder %v3737, 0
        %vm3801 = vcmp.ne.s32.totalorder %v3738, 0
        %vm3802 = vcmp.ne.s32.totalorder %v3739, 0
        %vm3803 = vcmp.ne.s32.totalorder %v3740, 0
        %vm3804 = vcmp.ne.s32.totalorder %v3741, 0
        %vm3805 = vcmp.ne.s32.totalorder %v3742, 0
        %vm3806 = vcmp.ne.s32.totalorder %v3743, 0
        %vm3807 = vcmp.ne.s32.totalorder %v3744, 0
        %vm3808 = vcmp.ne.s32.totalorder %v3745, 0
        %vm3809 = vcmp.ne.s32.totalorder %v3746, 0
        %vm3810 = vcmp.ne.s32.totalorder %v3747, 0
        %vm3811 = vcmp.ne.s32.totalorder %v3748, 0
        %vm3812 = vcmp.ne.s32.totalorder %v3749, 0
        %vm3813 = vcmp.ne.s32.totalorder %v3750, 0
        %vm3814 = vcmp.ne.s32.totalorder %v3751, 0
        %vm3815 = vcmp.ne.s32.totalorder %v3752, 0
        %vm3816 = vcmp.ne.s32.totalorder %v3753, 0
        %vm3817 = vcmp.ne.s32.totalorder %v3754, 0
        %vm3818 = vcmp.ne.s32.totalorder %v3755, 0
        %vm3819 = vcmp.ne.s32.totalorder %v3756, 0
        %vm3820 = vcmp.ne.s32.totalorder %v3757, 0
        %vm3821 = vcmp.ne.s32.totalorder %v3758, 0
        %vm3822 = vcmp.ne.s32.totalorder %v3759, 0
        %vm3823 = vcmp.ne.s32.totalorder %v3760, 0
        %vm3824 = vcmp.ne.s32.totalorder %v3761, 0
        %vm3825 = vcmp.ne.s32.totalorder %v3762, 0
        %vm3826 = vcmp.ne.s32.totalorder %v3763, 0
        %vm3827 = vcmp.ne.s32.totalorder %v3764, 0
        %vm3828 = vcmp.ne.s32.totalorder %v3765, 0
        %vm3829 = vcmp.ne.s32.totalorder %v3766, 0
        %vm3830 = vcmp.ne.s32.totalorder %v3767, 0
        %vm3831 = vcmp.ne.s32.totalorder %v3768, 0
        %vm3832 = vcmp.ne.s32.totalorder %v3769, 0
        %vm3833 = vcmp.ne.s32.totalorder %v3770, 0
        %vm3834 = vcmp.ne.s32.totalorder %v3771, 0
        %vm3835 = vcmp.ne.s32.totalorder %v3772, 0
        %vm3836 = vcmp.ne.s32.totalorder %v3773, 0
        %vm3837 = vcmp.ne.s32.totalorder %v3774, 0
        %vm3838 = vcmp.ne.s32.totalorder %v3775, 0
        %vm3839 = vcmp.ne.s32.totalorder %v3776, 0
        %vm3840 = vcmp.ne.s32.totalorder %v3777, 0
        %vm3841 = vcmp.ne.s32.totalorder %v3778, 0
        %vm3842 = vcmp.ne.s32.totalorder %v3779, 0
        %vm3843 = vcmp.ne.s32.totalorder %v3780, 0
        %vm3844 = vcmp.ne.s32.totalorder %v3781, 0
        %vm3845 = vcmp.ne.s32.totalorder %v3782, 0
        %vm3846 = vcmp.ne.s32.totalorder %v3783, 0
        %vm3847 = vcmp.ne.s32.totalorder %v3784, 0
        %vm3848 = vcmp.ne.s32.totalorder %v3785, 0
        %vm3849 = vcmp.ne.s32.totalorder %v3786, 0
        %vm3850 = vcmp.ne.s32.totalorder %v3787, 0
        %vm3851 = vcmp.ne.s32.totalorder %v3788, 0
        %vm3852 = vcmp.ne.s32.totalorder %v3789, 0
        %vm3853 = vcmp.ne.s32.totalorder %v3790, 0
        %v3854 = vsel %vm3476, %v3287, %v2783
        %v3855 = vsel %vm3477, %v3288, %v2784
        %v3856 = vsel %vm3478, %v3289, %v2785
        %v3857 = vsel %vm3479, %v3290, %v2786
        %v3858 = vsel %vm3480, %v3291, %v2787
        %v3859 = vsel %vm3481, %v3292, %v2788
        %v3860 = vsel %vm3482, %v3293, %v2789
        %v3861 = vsel %vm3483, %v3294, %v2790
        %v3862 = vsel %vm3484, %v3295, %v2791
        %v3863 = vsel %vm3485, %v3296, %v2792
        %v3864 = vsel %vm3486, %v3297, %v2793
        %v3865 = vsel %vm3487, %v3298, %v2794
        %v3866 = vsel %vm3488, %v3299, %v2795
        %v3867 = vsel %vm3489, %v3300, %v2796
        %v3868 = vsel %vm3490, %v3301, %v2797
        %v3869 = vsel %vm3491, %v3302, %v2798
        %v3870 = vsel %vm3492, %v3303, %v2799
        %v3871 = vsel %vm3493, %v3304, %v2800
        %v3872 = vsel %vm3494, %v3305, %v2801
        %v3873 = vsel %vm3495, %v3306, %v2802
        %v3874 = vsel %vm3496, %v3307, %v2803
        %v3875 = vsel %vm3497, %v3308, %v2804
        %v3876 = vsel %vm3498, %v3309, %v2805
        %v3877 = vsel %vm3499, %v3310, %v2806
        %v3878 = vsel %vm3500, %v3311, %v2807
        %v3879 = vsel %vm3501, %v3312, %v2808
        %v3880 = vsel %vm3502, %v3313, %v2809
        %v3881 = vsel %vm3503, %v3314, %v2810
        %v3882 = vsel %vm3504, %v3315, %v2811
        %v3883 = vsel %vm3505, %v3316, %v2812
        %v3884 = vsel %vm3506, %v3317, %v2813
        %v3885 = vsel %vm3507, %v3318, %v2814
        %v3886 = vsel %vm3508, %v3319, %v2815
        %v3887 = vsel %vm3509, %v3320, %v2816
        %v3888 = vsel %vm3510, %v3321, %v2817
        %v3889 = vsel %vm3511, %v3322, %v2818
        %v3890 = vsel %vm3512, %v3323, %v2819
        %v3891 = vsel %vm3513, %v3324, %v2820
        %v3892 = vsel %vm3514, %v3325, %v2821
        %v3893 = vsel %vm3515, %v3326, %v2822
        %v3894 = vsel %vm3516, %v3327, %v2823
        %v3895 = vsel %vm3517, %v3328, %v2824
        %v3896 = vsel %vm3518, %v3329, %v2825
        %v3897 = vsel %vm3519, %v3330, %v2826
        %v3898 = vsel %vm3520, %v3331, %v2827
        %v3899 = vsel %vm3521, %v3332, %v2828
        %v3900 = vsel %vm3522, %v3333, %v2829
        %v3901 = vsel %vm3523, %v3334, %v2830
        %v3902 = vsel %vm3524, %v3335, %v2831
        %v3903 = vsel %vm3525, %v3336, %v2832
        %v3904 = vsel %vm3526, %v3337, %v2833
        %v3905 = vsel %vm3527, %v3338, %v2834
        %v3906 = vsel %vm3528, %v3339, %v2835
        %v3907 = vsel %vm3529, %v3340, %v2836
        %v3908 = vsel %vm3530, %v3341, %v2837
        %v3909 = vsel %vm3531, %v3342, %v2838
        %v3910 = vsel %vm3532, %v3343, %v2839
        %v3911 = vsel %vm3533, %v3344, %v2840
        %v3912 = vsel %vm3534, %v3345, %v2841
        %v3913 = vsel %vm3535, %v3346, %v2842
        %v3914 = vsel %vm3536, %v3347, %v2843
        %v3915 = vsel %vm3537, %v3348, %v2844
        %v3916 = vsel %vm3538, %v3349, %v2845
        %v3917 = vsel %vm3476, %v2783, %v3287
        %v3918 = vsel %vm3477, %v2784, %v3288
        %v3919 = vsel %vm3478, %v2785, %v3289
        %v3920 = vsel %vm3479, %v2786, %v3290
        %v3921 = vsel %vm3480, %v2787, %v3291
        %v3922 = vsel %vm3481, %v2788, %v3292
        %v3923 = vsel %vm3482, %v2789, %v3293
        %v3924 = vsel %vm3483, %v2790, %v3294
        %v3925 = vsel %vm3484, %v2791, %v3295
        %v3926 = vsel %vm3485, %v2792, %v3296
        %v3927 = vsel %vm3486, %v2793, %v3297
        %v3928 = vsel %vm3487, %v2794, %v3298
        %v3929 = vsel %vm3488, %v2795, %v3299
        %v3930 = vsel %vm3489, %v2796, %v3300
        %v3931 = vsel %vm3490, %v2797, %v3301
        %v3932 = vsel %vm3491, %v2798, %v3302
        %v3933 = vsel %vm3492, %v2799, %v3303
        %v3934 = vsel %vm3493, %v2800, %v3304
        %v3935 = vsel %vm3494, %v2801, %v3305
        %v3936 = vsel %vm3495, %v2802, %v3306
        %v3937 = vsel %vm3496, %v2803, %v3307
        %v3938 = vsel %vm3497, %v2804, %v3308
        %v3939 = vsel %vm3498, %v2805, %v3309
        %v3940 = vsel %vm3499, %v2806, %v3310
        %v3941 = vsel %vm3500, %v2807, %v3311
        %v3942 = vsel %vm3501, %v2808, %v3312
        %v3943 = vsel %vm3502, %v2809, %v3313
        %v3944 = vsel %vm3503, %v2810, %v3314
        %v3945 = vsel %vm3504, %v2811, %v3315
        %v3946 = vsel %vm3505, %v2812, %v3316
        %v3947 = vsel %vm3506, %v2813, %v3317
        %v3948 = vsel %vm3507, %v2814, %v3318
        %v3949 = vsel %vm3508, %v2815, %v3319
        %v3950 = vsel %vm3509, %v2816, %v3320
        %v3951 = vsel %vm3510, %v2817, %v3321
        %v3952 = vsel %vm3511, %v2818, %v3322
        %v3953 = vsel %vm3512, %v2819, %v3323
        %v3954 = vsel %vm3513, %v2820, %v3324
        %v3955 = vsel %vm3514, %v2821, %v3325
        %v3956 = vsel %vm3515, %v2822, %v3326
        %v3957 = vsel %vm3516, %v2823, %v3327
        %v3958 = vsel %vm3517, %v2824, %v3328
        %v3959 = vsel %vm3518, %v2825, %v3329
        %v3960 = vsel %vm3519, %v2826, %v3330
        %v3961 = vsel %vm3520, %v2827, %v3331
        %v3962 = vsel %vm3521, %v2828, %v3332
        %v3963 = vsel %vm3522, %v2829, %v3333
        %v3964 = vsel %vm3523, %v2830, %v3334
        %v3965 = vsel %vm3524, %v2831, %v3335
        %v3966 = vsel %vm3525, %v2832, %v3336
        %v3967 = vsel %vm3526, %v2833, %v3337
        %v3968 = vsel %vm3527, %v2834, %v3338
        %v3969 = vsel %vm3528, %v2835, %v3339
        %v3970 = vsel %vm3529, %v2836, %v3340
        %v3971 = vsel %vm3530, %v2837, %v3341
        %v3972 = vsel %vm3531, %v2838, %v3342
        %v3973 = vsel %vm3532, %v2839, %v3343
        %v3974 = vsel %vm3533, %v2840, %v3344
        %v3975 = vsel %vm3534, %v2841, %v3345
        %v3976 = vsel %vm3535, %v2842, %v3346
        %v3977 = vsel %vm3536, %v2843, %v3347
        %v3978 = vsel %vm3537, %v2844, %v3348
        %v3979 = vsel %vm3538, %v2845, %v3349
        %v3980 = vsub.f32 0.0, %v3854
        %v3981 = vsub.f32 0.0, %v3855
        %v3982 = vsub.f32 0.0, %v3856
        %v3983 = vsub.f32 0.0, %v3857
        %v3984 = vsub.f32 0.0, %v3858
        %v3985 = vsub.f32 0.0, %v3859
        %v3986 = vsub.f32 0.0, %v3860
        %v3987 = vsub.f32 0.0, %v3861
        %v3988 = vsub.f32 0.0, %v3862
        %v3989 = vsub.f32 0.0, %v3863
        %v3990 = vsub.f32 0.0, %v3864
        %v3991 = vsub.f32 0.0, %v3865
        %v3992 = vsub.f32 0.0, %v3866
        %v3993 = vsub.f32 0.0, %v3867
        %v3994 = vsub.f32 0.0, %v3868
        %v3995 = vsub.f32 0.0, %v3869
        %v3996 = vsub.f32 0.0, %v3870
        %v3997 = vsub.f32 0.0, %v3871
        %v3998 = vsub.f32 0.0, %v3872
        %v3999 = vsub.f32 0.0, %v3873
        %v4000 = vsub.f32 0.0, %v3874
        %v4001 = vsub.f32 0.0, %v3875
        %v4002 = vsub.f32 0.0, %v3876
        %v4003 = vsub.f32 0.0, %v3877
        %v4004 = vsub.f32 0.0, %v3878
        %v4005 = vsub.f32 0.0, %v3879
        %v4006 = vsub.f32 0.0, %v3880
        %v4007 = vsub.f32 0.0, %v3881
        %v4008 = vsub.f32 0.0, %v3882
        %v4009 = vsub.f32 0.0, %v3883
        %v4010 = vsub.f32 0.0, %v3884
        %v4011 = vsub.f32 0.0, %v3885
        %v4012 = vsub.f32 0.0, %v3886
        %v4013 = vsub.f32 0.0, %v3887
        %v4014 = vsub.f32 0.0, %v3888
        %v4015 = vsub.f32 0.0, %v3889
        %v4016 = vsub.f32 0.0, %v3890
        %v4017 = vsub.f32 0.0, %v3891
        %v4018 = vsub.f32 0.0, %v3892
        %v4019 = vsub.f32 0.0, %v3893
        %v4020 = vsub.f32 0.0, %v3894
        %v4021 = vsub.f32 0.0, %v3895
        %v4022 = vsub.f32 0.0, %v3896
        %v4023 = vsub.f32 0.0, %v3897
        %v4024 = vsub.f32 0.0, %v3898
        %v4025 = vsub.f32 0.0, %v3899
        %v4026 = vsub.f32 0.0, %v3900
        %v4027 = vsub.f32 0.0, %v3901
        %v4028 = vsub.f32 0.0, %v3902
        %v4029 = vsub.f32 0.0, %v3903
        %v4030 = vsub.f32 0.0, %v3904
        %v4031 = vsub.f32 0.0, %v3905
        %v4032 = vsub.f32 0.0, %v3906
        %v4033 = vsub.f32 0.0, %v3907
        %v4034 = vsub.f32 0.0, %v3908
        %v4035 = vsub.f32 0.0, %v3909
        %v4036 = vsub.f32 0.0, %v3910
        %v4037 = vsub.f32 0.0, %v3911
        %v4038 = vsub.f32 0.0, %v3912
        %v4039 = vsub.f32 0.0, %v3913
        %v4040 = vsub.f32 0.0, %v3914
        %v4041 = vsub.f32 0.0, %v3915
        %v4042 = vsub.f32 0.0, %v3916
        %v4043 = vsel %vm3602, %v3980, %v3854
        %v4044 = vsel %vm3603, %v3981, %v3855
        %v4045 = vsel %vm3604, %v3982, %v3856
        %v4046 = vsel %vm3605, %v3983, %v3857
        %v4047 = vsel %vm3606, %v3984, %v3858
        %v4048 = vsel %vm3607, %v3985, %v3859
        %v4049 = vsel %vm3608, %v3986, %v3860
        %v4050 = vsel %vm3609, %v3987, %v3861
        %v4051 = vsel %vm3610, %v3988, %v3862
        %v4052 = vsel %vm3611, %v3989, %v3863
        %v4053 = vsel %vm3612, %v3990, %v3864
        %v4054 = vsel %vm3613, %v3991, %v3865
        %v4055 = vsel %vm3614, %v3992, %v3866
        %v4056 = vsel %vm3615, %v3993, %v3867
        %v4057 = vsel %vm3616, %v3994, %v3868
        %v4058 = vsel %vm3617, %v3995, %v3869
        %v4059 = vsel %vm3618, %v3996, %v3870
        %v4060 = vsel %vm3619, %v3997, %v3871
        %v4061 = vsel %vm3620, %v3998, %v3872
        %v4062 = vsel %vm3621, %v3999, %v3873
        %v4063 = vsel %vm3622, %v4000, %v3874
        %v4064 = vsel %vm3623, %v4001, %v3875
        %v4065 = vsel %vm3624, %v4002, %v3876
        %v4066 = vsel %vm3625, %v4003, %v3877
        %v4067 = vsel %vm3626, %v4004, %v3878
        %v4068 = vsel %vm3627, %v4005, %v3879
        %v4069 = vsel %vm3628, %v4006, %v3880
        %v4070 = vsel %vm3629, %v4007, %v3881
        %v4071 = vsel %vm3630, %v4008, %v3882
        %v4072 = vsel %vm3631, %v4009, %v3883
        %v4073 = vsel %vm3632, %v4010, %v3884
        %v4074 = vsel %vm3633, %v4011, %v3885
        %v4075 = vsel %vm3634, %v4012, %v3886
        %v4076 = vsel %vm3635, %v4013, %v3887
        %v4077 = vsel %vm3636, %v4014, %v3888
        %v4078 = vsel %vm3637, %v4015, %v3889
        %v4079 = vsel %vm3638, %v4016, %v3890
        %v4080 = vsel %vm3639, %v4017, %v3891
        %v4081 = vsel %vm3640, %v4018, %v3892
        %v4082 = vsel %vm3641, %v4019, %v3893
        %v4083 = vsel %vm3642, %v4020, %v3894
        %v4084 = vsel %vm3643, %v4021, %v3895
        %v4085 = vsel %vm3644, %v4022, %v3896
        %v4086 = vsel %vm3645, %v4023, %v3897
        %v4087 = vsel %vm3646, %v4024, %v3898
        %v4088 = vsel %vm3647, %v4025, %v3899
        %v4089 = vsel %vm3648, %v4026, %v3900
        %v4090 = vsel %vm3649, %v4027, %v3901
        %v4091 = vsel %vm3650, %v4028, %v3902
        %v4092 = vsel %vm3651, %v4029, %v3903
        %v4093 = vsel %vm3652, %v4030, %v3904
        %v4094 = vsel %vm3653, %v4031, %v3905
        %v4095 = vsel %vm3654, %v4032, %v3906
        %v4096 = vsel %vm3655, %v4033, %v3907
        %v4097 = vsel %vm3656, %v4034, %v3908
        %v4098 = vsel %vm3657, %v4035, %v3909
        %v4099 = vsel %vm3658, %v4036, %v3910
        %v4100 = vsel %vm3659, %v4037, %v3911
        %v4101 = vsel %vm3660, %v4038, %v3912
        %v4102 = vsel %vm3661, %v4039, %v3913
        %v4103 = vsel %vm3662, %v4040, %v3914
        %v4104 = vsel %vm3663, %v4041, %v3915
        %v4105 = vsel %vm3664, %v4042, %v3916
        %v4106 = vsub.f32 0.0, %v3917
        %v4107 = vsub.f32 0.0, %v3918
        %v4108 = vsub.f32 0.0, %v3919
        %v4109 = vsub.f32 0.0, %v3920
        %v4110 = vsub.f32 0.0, %v3921
        %v4111 = vsub.f32 0.0, %v3922
        %v4112 = vsub.f32 0.0, %v3923
        %v4113 = vsub.f32 0.0, %v3924
        %v4114 = vsub.f32 0.0, %v3925
        %v4115 = vsub.f32 0.0, %v3926
        %v4116 = vsub.f32 0.0, %v3927
        %v4117 = vsub.f32 0.0, %v3928
        %v4118 = vsub.f32 0.0, %v3929
        %v4119 = vsub.f32 0.0, %v3930
        %v4120 = vsub.f32 0.0, %v3931
        %v4121 = vsub.f32 0.0, %v3932
        %v4122 = vsub.f32 0.0, %v3933
        %v4123 = vsub.f32 0.0, %v3934
        %v4124 = vsub.f32 0.0, %v3935
        %v4125 = vsub.f32 0.0, %v3936
        %v4126 = vsub.f32 0.0, %v3937
        %v4127 = vsub.f32 0.0, %v3938
        %v4128 = vsub.f32 0.0, %v3939
        %v4129 = vsub.f32 0.0, %v3940
        %v4130 = vsub.f32 0.0, %v3941
        %v4131 = vsub.f32 0.0, %v3942
        %v4132 = vsub.f32 0.0, %v3943
        %v4133 = vsub.f32 0.0, %v3944
        %v4134 = vsub.f32 0.0, %v3945
        %v4135 = vsub.f32 0.0, %v3946
        %v4136 = vsub.f32 0.0, %v3947
        %v4137 = vsub.f32 0.0, %v3948
        %v4138 = vsub.f32 0.0, %v3949
        %v4139 = vsub.f32 0.0, %v3950
        %v4140 = vsub.f32 0.0, %v3951
        %v4141 = vsub.f32 0.0, %v3952
        %v4142 = vsub.f32 0.0, %v3953
        %v4143 = vsub.f32 0.0, %v3954
        %v4144 = vsub.f32 0.0, %v3955
        %v4145 = vsub.f32 0.0, %v3956
        %v4146 = vsub.f32 0.0, %v3957
        %v4147 = vsub.f32 0.0, %v3958
        %v4148 = vsub.f32 0.0, %v3959
        %v4149 = vsub.f32 0.0, %v3960
        %v4150 = vsub.f32 0.0, %v3961
        %v4151 = vsub.f32 0.0, %v3962
        %v4152 = vsub.f32 0.0, %v3963
        %v4153 = vsub.f32 0.0, %v3964
        %v4154 = vsub.f32 0.0, %v3965
        %v4155 = vsub.f32 0.0, %v3966
        %v4156 = vsub.f32 0.0, %v3967
        %v4157 = vsub.f32 0.0, %v3968
        %v4158 = vsub.f32 0.0, %v3969
        %v4159 = vsub.f32 0.0, %v3970
        %v4160 = vsub.f32 0.0, %v3971
        %v4161 = vsub.f32 0.0, %v3972
        %v4162 = vsub.f32 0.0, %v3973
        %v4163 = vsub.f32 0.0, %v3974
        %v4164 = vsub.f32 0.0, %v3975
        %v4165 = vsub.f32 0.0, %v3976
        %v4166 = vsub.f32 0.0, %v3977
        %v4167 = vsub.f32 0.0, %v3978
        %v4168 = vsub.f32 0.0, %v3979
        %v4169 = vsel %vm3791, %v4106, %v3917
        %v4170 = vsel %vm3792, %v4107, %v3918
        %v4171 = vsel %vm3793, %v4108, %v3919
        %v4172 = vsel %vm3794, %v4109, %v3920
        %v4173 = vsel %vm3795, %v4110, %v3921
        %v4174 = vsel %vm3796, %v4111, %v3922
        %v4175 = vsel %vm3797, %v4112, %v3923
        %v4176 = vsel %vm3798, %v4113, %v3924
        %v4177 = vsel %vm3799, %v4114, %v3925
        %v4178 = vsel %vm3800, %v4115, %v3926
        %v4179 = vsel %vm3801, %v4116, %v3927
        %v4180 = vsel %vm3802, %v4117, %v3928
        %v4181 = vsel %vm3803, %v4118, %v3929
        %v4182 = vsel %vm3804, %v4119, %v3930
        %v4183 = vsel %vm3805, %v4120, %v3931
        %v4184 = vsel %vm3806, %v4121, %v3932
        %v4185 = vsel %vm3807, %v4122, %v3933
        %v4186 = vsel %vm3808, %v4123, %v3934
        %v4187 = vsel %vm3809, %v4124, %v3935
        %v4188 = vsel %vm3810, %v4125, %v3936
        %v4189 = vsel %vm3811, %v4126, %v3937
        %v4190 = vsel %vm3812, %v4127, %v3938
        %v4191 = vsel %vm3813, %v4128, %v3939
        %v4192 = vsel %vm3814, %v4129, %v3940
        %v4193 = vsel %vm3815, %v4130, %v3941
        %v4194 = vsel %vm3816, %v4131, %v3942
        %v4195 = vsel %vm3817, %v4132, %v3943
        %v4196 = vsel %vm3818, %v4133, %v3944
        %v4197 = vsel %vm3819, %v4134, %v3945
        %v4198 = vsel %vm3820, %v4135, %v3946
        %v4199 = vsel %vm3821, %v4136, %v3947
        %v4200 = vsel %vm3822, %v4137, %v3948
        %v4201 = vsel %vm3823, %v4138, %v3949
        %v4202 = vsel %vm3824, %v4139, %v3950
        %v4203 = vsel %vm3825, %v4140, %v3951
        %v4204 = vsel %vm3826, %v4141, %v3952
        %v4205 = vsel %vm3827, %v4142, %v3953
        %v4206 = vsel %vm3828, %v4143, %v3954
        %v4207 = vsel %vm3829, %v4144, %v3955
        %v4208 = vsel %vm3830, %v4145, %v3956
        %v4209 = vsel %vm3831, %v4146, %v3957
        %v4210 = vsel %vm3832, %v4147, %v3958
        %v4211 = vsel %vm3833, %v4148, %v3959
        %v4212 = vsel %vm3834, %v4149, %v3960
        %v4213 = vsel %vm3835, %v4150, %v3961
        %v4214 = vsel %vm3836, %v4151, %v3962
        %v4215 = vsel %vm3837, %v4152, %v3963
        %v4216 = vsel %vm3838, %v4153, %v3964
        %v4217 = vsel %vm3839, %v4154, %v3965
        %v4218 = vsel %vm3840, %v4155, %v3966
        %v4219 = vsel %vm3841, %v4156, %v3967
        %v4220 = vsel %vm3842, %v4157, %v3968
        %v4221 = vsel %vm3843, %v4158, %v3969
        %v4222 = vsel %vm3844, %v4159, %v3970
        %v4223 = vsel %vm3845, %v4160, %v3971
        %v4224 = vsel %vm3846, %v4161, %v3972
        %v4225 = vsel %vm3847, %v4162, %v3973
        %v4226 = vsel %vm3848, %v4163, %v3974
        %v4227 = vsel %vm3849, %v4164, %v3975
        %v4228 = vsel %vm3850, %v4165, %v3976
        %v4229 = vsel %vm3851, %v4166, %v3977
        %v4230 = vsel %vm3852, %v4167, %v3978
        %v4231 = vsel %vm3853, %v4168, %v3979
        %4232 = vst [vmem:[%s162] sm:$0xff] %v4043
        %4233 = vst [vmem:[%s162 + $0x10] sm:$0xff] %v4044
        %4234 = vst [vmem:[%s162 + $0x20] sm:$0xff] %v4045
        %4235 = vst [vmem:[%s162 + $0x30] sm:$0xff] %v4046
        %4236 = vst [vmem:[%s162 + $0x40] sm:$0xff] %v4047
        %4237 = vst [vmem:[%s162 + $0x50] sm:$0xff] %v4048
        %4238 = vst [vmem:[%s162 + $0x60] sm:$0xff] %v4049
        %4239 = vst [vmem:[%s162 + $0x70] sm:$0xff] %v4050
        %4240 = vst [vmem:[%s162 + $0x80] sm:$0xff] %v4051
        %4241 = vst [vmem:[%s162 + $0x90] sm:$0xff] %v4052
        %4242 = vst [vmem:[%s162 + $0xa0] sm:$0xff] %v4053
        %4243 = vst [vmem:[%s162 + $0xb0] sm:$0xff] %v4054
        %4244 = vst [vmem:[%s162 + $0xc0] sm:$0xff] %v4055
        %4245 = vst [vmem:[%s162 + $0xd0] sm:$0xff] %v4056
        %4246 = vst [vmem:[%s162 + $0xe0] sm:$0xff] %v4057
        %4247 = vst [vmem:[%s162 + $0xf0] sm:$0xff] %v4058
        %4248 = vst [vmem:[%s162 + $0x100] sm:$0xff] %v4059
        %4249 = vst [vmem:[%s162 + $0x110] sm:$0xff] %v4060
        %4250 = vst [vmem:[%s162 + $0x120] sm:$0xff] %v4061
        %4251 = vst [vmem:[%s162 + $0x130] sm:$0xff] %v4062
        %4252 = vst [vmem:[%s162 + $0x140] sm:$0xff] %v4063
        %4253 = vst [vmem:[%s162 + $0x150] sm:$0xff] %v4064
        %4254 = vst [vmem:[%s162 + $0x160] sm:$0xff] %v4065
        %4255 = vst [vmem:[%s162 + $0x170] sm:$0xff] %v4066
        %4256 = vst [vmem:[%s162 + $0x180] sm:$0xff] %v4067
        %4257 = vst [vmem:[%s162 + $0x190] sm:$0xff] %v4068
        %4258 = vst [vmem:[%s162 + $0x1a0] sm:$0xff] %v4069
        %4259 = vst [vmem:[%s162 + $0x1b0] sm:$0xff] %v4070
        %4260 = vst [vmem:[%s162 + $0x1c0] sm:$0xff] %v4071
        %4261 = vst [vmem:[%s162 + $0x1d0] sm:$0xff] %v4072
        %4262 = vst [vmem:[%s162 + $0x1e0] sm:$0xff] %v4073
        %4263 = vst [vmem:[%s162 + $0x1f0] sm:$0xff] %v4074
        %4264 = vst [vmem:[%s162 + $0x200] sm:$0xff] %v4075
        %4265 = vst [vmem:[%s162 + $0x210] sm:$0xff] %v4076
        %4266 = vst [vmem:[%s162 + $0x220] sm:$0xff] %v4077
        %4267 = vst [vmem:[%s162 + $0x230] sm:$0xff] %v4078
        %4268 = vst [vmem:[%s162 + $0x240] sm:$0xff] %v4079
        %4269 = vst [vmem:[%s162 + $0x250] sm:$0xff] %v4080
        %4270 = vst [vmem:[%s162 + $0x260] sm:$0xff] %v4081
        %4271 = vst [vmem:[%s162 + $0x270] sm:$0xff] %v4082
        %4272 = vst [vmem:[%s162 + $0x280] sm:$0xff] %v4083
        %4273 = vst [vmem:[%s162 + $0x290] sm:$0xff] %v4084
        %4274 = vst [vmem:[%s162 + $0x2a0] sm:$0xff] %v4085
        %4275 = vst [vmem:[%s162 + $0x2b0] sm:$0xff] %v4086
        %4276 = vst [vmem:[%s162 + $0x2c0] sm:$0xff] %v4087
        %4277 = vst [vmem:[%s162 + $0x2d0] sm:$0xff] %v4088
        %4278 = vst [vmem:[%s162 + $0x2e0] sm:$0xff] %v4089
        %4279 = vst [vmem:[%s162 + $0x2f0] sm:$0xff] %v4090
        %4280 = vst [vmem:[%s162 + $0x300] sm:$0xff] %v4091
        %4281 = vst [vmem:[%s162 + $0x310] sm:$0xff] %v4092
        %4282 = vst [vmem:[%s162 + $0x320] sm:$0xff] %v4093
        %4283 = vst [vmem:[%s162 + $0x330] sm:$0xff] %v4094
        %4284 = vst [vmem:[%s162 + $0x340] sm:$0xff] %v4095
        %4285 = vst [vmem:[%s162 + $0x350] sm:$0xff] %v4096
        %4286 = vst [vmem:[%s162 + $0x360] sm:$0xff] %v4097
        %4287 = vst [vmem:[%s162 + $0x370] sm:$0xff] %v4098
        %4288 = vst [vmem:[%s162 + $0x380] sm:$0xff] %v4099
        %4289 = vst [vmem:[%s162 + $0x390] sm:$0xff] %v4100
        %4290 = vst [vmem:[%s162 + $0x3a0] sm:$0xff] %v4101
        %4291 = vst [vmem:[%s162 + $0x3b0] sm:$0xff] %v4102
        %4292 = vst [vmem:[%s162 + $0x3c0] sm:$0xff] %v4103
        %4293 = vst [vmem:[%s162 + $0x3d0] sm:$0xff] %v4104
        %4294 = vst [vmem:[%s162 + $0x3e0] sm:$0xff] %v4105
        %4295 = vst [vmem:[%s162 + $0x8] sm:$0xff] %v4169
        %4296 = vst [vmem:[%s162 + $0x18] sm:$0xff] %v4170
        %4297 = vst [vmem:[%s162 + $0x28] sm:$0xff] %v4171
        %4298 = vst [vmem:[%s162 + $0x38] sm:$0xff] %v4172
        %4299 = vst [vmem:[%s162 + $0x48] sm:$0xff] %v4173
        %4300 = vst [vmem:[%s162 + $0x58] sm:$0xff] %v4174
        %4301 = vst [vmem:[%s162 + $0x68] sm:$0xff] %v4175
        %4302 = vst [vmem:[%s162 + $0x78] sm:$0xff] %v4176
        %4303 = vst [vmem:[%s162 + $0x88] sm:$0xff] %v4177
        %4304 = vst [vmem:[%s162 + $0x98] sm:$0xff] %v4178
        %4305 = vst [vmem:[%s162 + $0xa8] sm:$0xff] %v4179
        %4306 = vst [vmem:[%s162 + $0xb8] sm:$0xff] %v4180
        %4307 = vst [vmem:[%s162 + $0xc8] sm:$0xff] %v4181
        %4308 = vst [vmem:[%s162 + $0xd8] sm:$0xff] %v4182
        %4309 = vst [vmem:[%s162 + $0xe8] sm:$0xff] %v4183
        %4310 = vst [vmem:[%s162 + $0xf8] sm:$0xff] %v4184
        %4311 = vst [vmem:[%s162 + $0x108] sm:$0xff] %v4185
        %4312 = vst [vmem:[%s162 + $0x118] sm:$0xff] %v4186
        %4313 = vst [vmem:[%s162 + $0x128] sm:$0xff] %v4187
        %4314 = vst [vmem:[%s162 + $0x138] sm:$0xff] %v4188
        %4315 = vst [vmem:[%s162 + $0x148] sm:$0xff] %v4189
        %4316 = vst [vmem:[%s162 + $0x158] sm:$0xff] %v4190
        %4317 = vst [vmem:[%s162 + $0x168] sm:$0xff] %v4191
        %4318 = vst [vmem:[%s162 + $0x178] sm:$0xff] %v4192
        %4319 = vst [vmem:[%s162 + $0x188] sm:$0xff] %v4193
        %4320 = vst [vmem:[%s162 + $0x198] sm:$0xff] %v4194
        %4321 = vst [vmem:[%s162 + $0x1a8] sm:$0xff] %v4195
        %4322 = vst [vmem:[%s162 + $0x1b8] sm:$0xff] %v4196
        %4323 = vst [vmem:[%s162 + $0x1c8] sm:$0xff] %v4197
        %4324 = vst [vmem:[%s162 + $0x1d8] sm:$0xff] %v4198
        %4325 = vst [vmem:[%s162 + $0x1e8] sm:$0xff] %v4199
        %4326 = vst [vmem:[%s162 + $0x1f8] sm:$0xff] %v4200
        %4327 = vst [vmem:[%s162 + $0x208] sm:$0xff] %v4201
        %4328 = vst [vmem:[%s162 + $0x218] sm:$0xff] %v4202
        %4329 = vst [vmem:[%s162 + $0x228] sm:$0xff] %v4203
        %4330 = vst [vmem:[%s162 + $0x238] sm:$0xff] %v4204
        %4331 = vst [vmem:[%s162 + $0x248] sm:$0xff] %v4205
        %4332 = vst [vmem:[%s162 + $0x258] sm:$0xff] %v4206
        %4333 = vst [vmem:[%s162 + $0x268] sm:$0xff] %v4207
        %4334 = vst [vmem:[%s162 + $0x278] sm:$0xff] %v4208
        %4335 = vst [vmem:[%s162 + $0x288] sm:$0xff] %v4209
        %4336 = vst [vmem:[%s162 + $0x298] sm:$0xff] %v4210
        %4337 = vst [vmem:[%s162 + $0x2a8] sm:$0xff] %v4211
        %4338 = vst [vmem:[%s162 + $0x2b8] sm:$0xff] %v4212
        %4339 = vst [vmem:[%s162 + $0x2c8] sm:$0xff] %v4213
        %4340 = vst [vmem:[%s162 + $0x2d8] sm:$0xff] %v4214
        %4341 = vst [vmem:[%s162 + $0x2e8] sm:$0xff] %v4215
        %4342 = vst [vmem:[%s162 + $0x2f8] sm:$0xff] %v4216
        %4343 = vst [vmem:[%s162 + $0x308] sm:$0xff] %v4217
        %4344 = vst [vmem:[%s162 + $0x318] sm:$0xff] %v4218
        %4345 = vst [vmem:[%s162 + $0x328] sm:$0xff] %v4219
        %4346 = vst [vmem:[%s162 + $0x338] sm:$0xff] %v4220
        %4347 = vst [vmem:[%s162 + $0x348] sm:$0xff] %v4221
        %4348 = vst [vmem:[%s162 + $0x358] sm:$0xff] %v4222
        %4349 = vst [vmem:[%s162 + $0x368] sm:$0xff] %v4223
        %4350 = vst [vmem:[%s162 + $0x378] sm:$0xff] %v4224
        %4351 = vst [vmem:[%s162 + $0x388] sm:$0xff] %v4225
        %4352 = vst [vmem:[%s162 + $0x398] sm:$0xff] %v4226
        %4353 = vst [vmem:[%s162 + $0x3a8] sm:$0xff] %v4227
        %4354 = vst [vmem:[%s162 + $0x3b8] sm:$0xff] %v4228
        %4355 = vst [vmem:[%s162 + $0x3c8] sm:$0xff] %v4229
        %4356 = vst [vmem:[%s162 + $0x3d8] sm:$0xff] %v4230
        %4357 = vst [vmem:[%s162 + $0x3e8] sm:$0xff] %v4231
        %s4358 = sand.u32 %s72, 1
        %s4359 = scalar_lea.sflag [#allocation4], %s4358
        %s4360 = sand.u32 %s72, 1
        %s4361 = smul.addr %s4360, 1008
        %s4362 = scalar_lea.vmem [#allocation5], %s4361
        // Predicated region
        $region33: #{fourier_embs.1} parent=27 // pred_check
          %p4363 = pneg %p82
        $region34: #{fourier_embs.1} parent=27 // pred_check_branch
          %4365 = sbr.rel (%p4363) target = $region36
        $region35: #{fourier_embs.1} parent=27 // pred_region
          %s4366 = smul.u32 63, %s17
          %s4367 = ssub.s32 250, %s4366
          %p4368 = scmp.lt.s32.totalorder %s4367, 63
          %s4369 = scalar_select %p4368, %s4367, 63
          %s4370 = smul.u32 128, %s4369
          %s4371 = smul.u32 %s4370, 2
          %s4373 = ssub.s32 16128, %s4371
          %4374 = vsyncadd %s4359, %s4373
          %p4375 = scmp.ne.s32.totalorder 0, %s4371
          %s4376 = smul.addr %s4366, 2
          %s4377 = smul.addr %s4376, 128
          %s4378 = scalar_lea.hbm %s2, %s4377
          %s4379 = smul.u32 16, %s4369
          %s4380 = sshll.u32 %s4362, 4
          %s4381 = int_to_ptr.vmem [resolvable:$true] %s4380
          %s4382 = sshll.u32 %s4379, 4
          %4386 = dma.vmem_to_hbm [thread:$0]  (%p4375), %s4381, %s4382, %s4378, %s4359, 256, 256, 16
        $region36: #{fourier_embs.1} parent=27 // pred_fallthru
          _
      $region28: #{fourier_embs.1} parent=5 // pred_fallthru
        _
      %p4387 = scmp.le.s32.totalorder 2, %s12
      // Predicated region
      $region37: #{fourier_embs.1} parent=5 // pred_check
        %p4388 = pneg %p4387
      $region38: #{fourier_embs.1} parent=5 // pred_check_branch
        %4390 = sbr.rel (%p4388) target = $region40
      $region39: #{fourier_embs.1} parent=5 // pred_region
        %s4391 = ssub.s32 %s12, 2
        // Predicated region
        $region41: #{fourier_embs.1} parent=39 // pred_check
          %p4392 = pneg %p88
        $region42: #{fourier_embs.1} parent=39 // pred_check_branch
          %4394 = sbr.rel (%p4392) target = $region44
        $region43: #{fourier_embs.1} parent=39 // pred_region
          %s4395 = sand.u32 %s73, 1
          %s4396 = scalar_lea.sflag [#allocation4], %s4395
          %s4397 = sand.u32 %s73, 1
          %s4398 = smul.addr %s4397, 1008
          %s4399 = scalar_lea.vmem [#allocation5], %s4398
          %4400 = dma.done %s4396, 16128
        $region44: #{fourier_embs.1} parent=39 // pred_fallthru
          _
      $region40: #{fourier_embs.1} parent=5 // pred_fallthru
        _
    $region6: #{fourier_embs.1} parent=1 // loop_footer
      %s16 = sadd.s32 1, %s12
    $region7: #{fourier_embs.1} parent=1 // loop_footer_branch
      %11 = sbr.rel target = $region3
    $region8: #{fourier_embs.1} parent=1 // loop_exit
      _
    %4401 = vsyncpa [#allocation3], 1
    %s4402 = scalar_lea.sflag [#allocation3], 1
    %4403 = vsyncpa %s4402, 1
    %4404 = vsyncpa [#allocation4], 1
    %s4405 = scalar_lea.sflag [#allocation4], 1
    %4406 = vsyncpa %s4405, 1

</llo_original>
